<compile_context>
chip_gen: v6e
topology: v6e:2x2x1
jax: 0.10.0
libtpu: 0.0.40
codegen_flags: <defaults>
</compile_context>

<pallas_src>
import functools

import jax
import jax.numpy as jnp
from jax.experimental import pallas as pl
from jax.experimental.pallas import tpu as pltpu


def _leaky_relu(x, slope=0.01):
  # F.leaky_relu default negative_slope = 0.01
  return jnp.where(x > 0, x, slope * x)


def _round_up(x, m):
  return (x + m - 1) // m * m


def _tile_and_vmem(B, E, C3, U1, U2):
  """Pick the batch tile size and a scoped-VMEM limit for this chip."""
  phys_vmem = 64 * 1024 * 1024          # conservative default (v7x per-TC VMEM)
  try:
    phys_vmem = int(pltpu.get_tpu_info().vmem_capacity_bytes)
  except Exception:
    pass
  # 128-MiB-VMEM chips (v5e/v6e) afford 1024-row tiles; v7x (64 MiB) stays at 512.
  max_tile = 1024 if phys_vmem >= 96 * 1024 * 1024 else 512
  tile = min(max_tile, _round_up(B, 128))
  if B > 256:
    # keep >= 2 grid steps so dual-TensorCore chips can shard the batch axis
    tile = min(tile, _round_up(pl.cdiv(B, 2), 128))

  # Double-buffered streamed tiles (ec f32 in, ca3 bf16 in, ca1_enc f32 out,
  # ca1_dec bf16 out, ca3ca1_enc f32 out) + double-buffered resident weights.
  stream_bytes = tile * (E * 4 + C3 * 2 + U1 * 4 + E * 2 + U2 * 4) * 2
  weight_bytes = ((E * U1 + U1 * E + C3 * U2 + U2 * U1) * 2
                  + (U1 + E + U2 + U1) * 4) * 2
  vmem_limit = int(min(2 * (stream_bytes + weight_bytes) + (4 << 20),
                       phys_vmem // 2))
  return tile, vmem_limit


def msp_kernel(ec_ref, ca3_ref,
               w1e_ref, b1e_ref, w1d_ref, b1d_ref,
               w2e_ref, b2e_ref, w2d_ref, b2d_ref,
               ca1_enc_out, ca1_dec_out, ca3ca1_enc_out, loss_out,
               *, tile_b, batch):
  b = pl.program_id(0)

  ec = ec_ref[...]                               # [TILE_B, E]  f32 (MSE target)
  ca3 = ca3_ref[...]                             # [TILE_B, C3] bf16 (MXU operand)

  ec_b = ec.astype(jnp.bfloat16)

  # --- ca1 encode: SimpleAutoencoder.encode(ec_inputs) ---
  enc1 = jnp.dot(ec_b, w1e_ref[...],
                 preferred_element_type=jnp.float32) + b1e_ref[...]
  enc1 = _leaky_relu(enc1)                       # [TILE_B, U1]

  # --- ca3_ca1 encode / decode ---
  enc2 = jnp.dot(ca3, w2e_ref[...],
                 preferred_element_type=jnp.float32) + b2e_ref[...]
  enc2 = _leaky_relu(enc2)                       # [TILE_B, U2]
  dec2 = jnp.dot(enc2.astype(jnp.bfloat16), w2d_ref[...],
                 preferred_element_type=jnp.float32) + b2d_ref[...]
  # dec2: [TILE_B, U1]  (decoder nonlinearity = 'none')

  # --- recall path ('ca3_only'): ca1_encoding = dec2; ca1_decoding = ca1.decode(dec2) ---
  ca1_dec = jnp.dot(dec2.astype(jnp.bfloat16), w1d_ref[...],
                    preferred_element_type=jnp.float32) + b1d_ref[...]
  # ca1_dec: [TILE_B, E]  (decoder nonlinearity = 'none')

  # --- masked partial sums of squared error (ragged last tile rows excluded).
  # jnp.where (not multiply-by-mask) so undefined/garbage padded rows can't
  # propagate NaN/Inf into the reductions.
  row = jax.lax.broadcasted_iota(jnp.int32, (tile_b, 1), 0)
  valid = (row + b * tile_b) < batch             # [TILE_B, 1] bool

  d2 = jnp.where(valid, dec2 - enc1, 0.0)
  d1 = jnp.where(valid, ca1_dec - ec, 0.0)

  # --- write outputs ---
  ca1_enc_out[...] = dec2
  ca1_dec_out[...] = ca1_dec.astype(ca1_dec_out.dtype)   # bf16 HBM stream
  ca3ca1_enc_out[...] = enc2
  loss_out[0, 0] = jnp.sum(d1 * d1)              # ca1 SSE (f32)
  loss_out[0, 1] = jnp.sum(d2 * d2)              # ca3_ca1 SSE (f32)


@jax.jit
def monosynaptic_pathway_forward(ec_inputs, ca3_inputs, params):
  """ec_inputs: [B, C, H, W] (NCHW), ca3_inputs: [B, C3]."""
  B = ec_inputs.shape[0]
  ec_shape = ec_inputs.shape
  E = ec_shape[1] * ec_shape[2] * ec_shape[3]
  ec_flat = ec_inputs.reshape(B, E).astype(jnp.float32)     # f32: MSE target
  ca3_flat = ca3_inputs.reshape(B, -1).astype(jnp.bfloat16)  # bf16: MXU operand only
  C3 = ca3_flat.shape[1]

  # bf16 weights (halve HBM traffic, bf16-native MXU); biases stay f32.
  w1e = params['w1e'].astype(jnp.bfloat16)
  w1d = params['w1d'].astype(jnp.bfloat16)
  w2e = params['w2e'].astype(jnp.bfloat16)
  w2d = params['w2d'].astype(jnp.bfloat16)
  b1e = params['b1e'].astype(jnp.float32)
  b1d = params['b1d'].astype(jnp.float32)
  b2e = params['b2e'].astype(jnp.float32)
  b2d = params['b2d'].astype(jnp.float32)
  U1 = w1e.shape[1]
  U2 = w2e.shape[1]

  TILE_B, vmem_limit = _tile_and_vmem(B, E, C3, U1, U2)
  num_tiles = pl.cdiv(B, TILE_B)     # no jnp.pad: ragged last tile masked in-kernel

  out_shapes = (
      jax.ShapeDtypeStruct((B, U1), jnp.float32),           # ca1 encoding (= dec2)
      jax.ShapeDtypeStruct((B, E), jnp.bfloat16),           # ca1 decoding (flat, bf16)
      jax.ShapeDtypeStruct((B, U2), jnp.float32),           # ca3_ca1 encoding
      jax.ShapeDtypeStruct((num_tiles, 2), jnp.float32),    # per-tile [ca1 SSE, ca3_ca1 SSE]
  )

  smem = pltpu.MemorySpace.SMEM
  grid_spec = pltpu.PrefetchScalarGridSpec(
      num_scalar_prefetch=0,
      grid=(num_tiles,),
      in_specs=[
          # streamed per batch tile (double-buffered by the auto-pipeliner)
          pl.BlockSpec((TILE_B, E), lambda b: (b, 0)),
          pl.BlockSpec((TILE_B, C3), lambda b: (b, 0)),
          # weights / biases: constant index_map -> stay VMEM-resident across tiles
          pl.BlockSpec((E, U1), lambda b: (0, 0)),
          pl.BlockSpec((1, U1), lambda b: (0, 0)),
          pl.BlockSpec((U1, E), lambda b: (0, 0)),
          pl.BlockSpec((1, E), lambda b: (0, 0)),
          pl.BlockSpec((C3, U2), lambda b: (0, 0)),
          pl.BlockSpec((1, U2), lambda b: (0, 0)),
          pl.BlockSpec((U2, U1), lambda b: (0, 0)),
          pl.BlockSpec((1, U1), lambda b: (0, 0)),
      ],
      out_specs=[
          pl.BlockSpec((TILE_B, U1), lambda b: (b, 0)),
          pl.BlockSpec((TILE_B, E), lambda b: (b, 0)),
          pl.BlockSpec((TILE_B, U2), lambda b: (b, 0)),
          pl.BlockSpec((1, 2), lambda b: (b, 0), memory_space=smem),
      ],
  )

  kernel = functools.partial(msp_kernel, tile_b=TILE_B, batch=B)

  (ca1_enc, ca1_dec_flat, ca3_ca1_enc, sse_parts) = pl.pallas_call(
      kernel,
      out_shape=out_shapes,
      grid_spec=grid_spec,
      compiler_params=pltpu.CompilerParams(
          dimension_semantics=("parallel",),
          vmem_limit_bytes=vmem_limit),
  )(ec_flat, ca3_flat, w1e, b1e, w1d, b1d, w2e, b2e, w2d, b2d)

  ca1_decoding = ca1_dec_flat.reshape(ec_shape)

  # finalize MSE losses (partials already exclude ragged-tile rows)
  ca1_loss = jnp.sum(sse_parts[:, 0]) / jnp.float32(B * E)
  ca3_ca1_loss = jnp.sum(sse_parts[:, 1]) / jnp.float32(B * U1)

  ca1_outputs = {'encoding': ca1_enc, 'decoding': ca1_decoding, 'output': ca1_enc}
  # ca3_ca1 decoding is bit-identical to dec2 (= ca1 encoding); alias it here
  # instead of paying an extra VMEM->HBM writeback in the kernel.
  ca3_ca1_outputs = {'encoding': ca3_ca1_enc, 'decoding': ca1_enc,
                     'output': ca3_ca1_enc}
  return (ca1_loss, ca1_outputs, ca3_ca1_loss, ca3_ca1_outputs)


def init_params(key, ec_size, ca3_size, ca1_units, ca3_ca1_units):
  """Deterministic PyTorch-Linear-style init. Weights stored as [in, out]."""
  ks = jax.random.split(key, 8)

  def linear(kw, kb, fan_in, fan_out):
    bound = 1.0 / jnp.sqrt(jnp.float32(fan_in))
    w = jax.random.uniform(kw, (fan_in, fan_out), jnp.float32, -bound, bound)
    b = jax.random.uniform(kb, (1, fan_out), jnp.float32, -bound, bound)
    return w, b

  w1e, b1e = linear(ks[0], ks[1], ec_size, ca1_units)        # ca1 encoder
  w1d, b1d = linear(ks[2], ks[3], ca1_units, ec_size)        # ca1 decoder
  w2e, b2e = linear(ks[4], ks[5], ca3_size, ca3_ca1_units)   # ca3_ca1 encoder
  w2d, b2d = linear(ks[6], ks[7], ca3_ca1_units, ca1_units)  # ca3_ca1 decoder
  return dict(w1e=w1e, b1e=b1e, w1d=w1d, b1d=b1d,
              w2e=w2e, b2e=b2e, w2d=w2d, b2d=b2d)


if __name__ == "__main__":
  B, C, H, W = 2, 4, 16, 16          # ec_shape (NCHW)
  CA3 = 256                          # ca3 feature size
  CA1_UNITS = 128                    # config['ca1']['num_units']
  CA3_CA1_UNITS = 128                # config['ca3_ca1']['num_units']
  E = C * H * W

  key = jax.random.PRNGKey(0)
  k_ec, k_ca3, k_params = jax.random.split(key, 3)
  ec_inputs = jax.random.normal(k_ec, (B, C, H, W), jnp.float32)
  ca3_inputs = jax.random.uniform(k_ca3, (B, CA3), jnp.float32)
  params = init_params(k_params, E, CA3, CA1_UNITS, CA3_CA1_UNITS)

  ca1_loss, ca1_out, ca3_ca1_loss, ca3_ca1_out = monosynaptic_pathway_forward(
      ec_inputs, ca3_inputs, params)
  jax.block_until_ready((ca1_loss, ca1_out, ca3_ca1_loss, ca3_ca1_out))

  # basic sanity on shapes / values
  assert ca1_out['encoding'].shape == (B, CA1_UNITS)
  assert ca1_out['decoding'].shape == (B, C, H, W)
  assert ca3_ca1_out['encoding'].shape == (B, CA3_CA1_UNITS)
  assert ca3_ca1_out['decoding'].shape == (B, CA1_UNITS)
  assert ca1_loss.shape == () and ca3_ca1_loss.shape == ()
  assert bool(jnp.isfinite(ca1_loss)) and bool(jnp.isfinite(ca3_ca1_loss))
  print("KERNEL_OK")
</pallas_src>

<mosaic_0001>
module attributes {stable_mosaic.version = 11 : i64} {
  func.func @msp_kernel(%arg0: i32, %arg1: memref<128x1024xf32, #tpu.memory_space<vmem>>, %arg2: memref<128x256xbf16, #tpu.memory_space<vmem>>, %arg3: memref<1024x128xbf16, #tpu.memory_space<vmem>>, %arg4: memref<1x128xf32, #tpu.memory_space<vmem>>, %arg5: memref<128x1024xbf16, #tpu.memory_space<vmem>>, %arg6: memref<1x1024xf32, #tpu.memory_space<vmem>>, %arg7: memref<256x128xbf16, #tpu.memory_space<vmem>>, %arg8: memref<1x128xf32, #tpu.memory_space<vmem>>, %arg9: memref<128x128xbf16, #tpu.memory_space<vmem>>, %arg10: memref<1x128xf32, #tpu.memory_space<vmem>>, %arg11: memref<128x128xf32, #tpu.memory_space<vmem>>, %arg12: memref<128x1024xbf16, #tpu.memory_space<vmem>>, %arg13: memref<128x128xf32, #tpu.memory_space<vmem>>, %arg14: memref<1x2xf32, #tpu.memory_space<smem>>) attributes {dimension_semantics = [#tpu.dimension_semantics<parallel>], iteration_bounds = array<i64: 1>, scalar_prefetch = 0 : i64, scratch_operands = 0 : i64, tpu.core_type = #tpu.core_type<tc>, window_params = [{transform_indices = @transform_0, window_bounds = array<i64: 128, 1024>}, {transform_indices = @transform_1, window_bounds = array<i64: 128, 256>}, {pipeline_mode = #tpu.pipeline_mode<synchronous>, transform_indices = @transform_2, window_bounds = array<i64: 1024, 128>}, {pipeline_mode = #tpu.pipeline_mode<synchronous>, transform_indices = @transform_3, window_bounds = array<i64: 1, 128>}, {pipeline_mode = #tpu.pipeline_mode<synchronous>, transform_indices = @transform_4, window_bounds = array<i64: 128, 1024>}, {pipeline_mode = #tpu.pipeline_mode<synchronous>, transform_indices = @transform_5, window_bounds = array<i64: 1, 1024>}, {pipeline_mode = #tpu.pipeline_mode<synchronous>, transform_indices = @transform_6, window_bounds = array<i64: 256, 128>}, {pipeline_mode = #tpu.pipeline_mode<synchronous>, transform_indices = @transform_7, window_bounds = array<i64: 1, 128>}, {pipeline_mode = #tpu.pipeline_mode<synchronous>, transform_indices = @transform_8, window_bounds = array<i64: 128, 128>}, {pipeline_mode = #tpu.pipeline_mode<synchronous>, transform_indices = @transform_9, window_bounds = array<i64: 1, 128>}, {transform_indices = @transform_10, window_bounds = array<i64: 128, 128>}, {transform_indices = @transform_11, window_bounds = array<i64: 128, 1024>}, {transform_indices = @transform_12, window_bounds = array<i64: 128, 128>}, {transform_indices = @transform_13, window_bounds = array<i64: 1, 2>}]} {
    %c0 = arith.constant 0 : index
    %c0_0 = arith.constant 0 : index
    %0 = vector.load %arg1[%c0, %c0_0] : memref<128x1024xf32, #tpu.memory_space<vmem>>, vector<128x1024xf32>
    %c0_1 = arith.constant 0 : index
    %c0_2 = arith.constant 0 : index
    %1 = vector.load %arg2[%c0_1, %c0_2] : memref<128x256xbf16, #tpu.memory_space<vmem>>, vector<128x256xbf16>
    %2 = arith.truncf %0 : vector<128x1024xf32> to vector<128x1024xbf16>
    %c0_3 = arith.constant 0 : index
    %c0_4 = arith.constant 0 : index
    %3 = vector.load %arg3[%c0_3, %c0_4] : memref<1024x128xbf16, #tpu.memory_space<vmem>>, vector<1024x128xbf16>
    %cst = arith.constant dense<0.000000e+00> : vector<128x128xf32>
    %4 = tpu.matmul %2, %3, %cst {dimension_numbers = #tpu.dot_dimension_numbers<[1], [0], [0], [1], [0, 0, 1, 1], [], []>} : vector<128x1024xbf16>, vector<1024x128xbf16>, vector<128x128xf32> -> vector<128x128xf32>
    %c0_5 = arith.constant 0 : index
    %c0_6 = arith.constant 0 : index
    %5 = vector.load %arg4[%c0_5, %c0_6] : memref<1x128xf32, #tpu.memory_space<vmem>>, vector<1x128xf32>
    %6 = vector.broadcast %5 : vector<1x128xf32> to vector<128x128xf32>
    %7 = arith.addf %4, %6 : vector<128x128xf32>
    %cst_7 = arith.constant 0.000000e+00 : f32
    %8 = vector.broadcast %cst_7 : f32 to vector<128x128xf32>
    %9 = arith.cmpf ogt, %7, %8 : vector<128x128xf32>
    %cst_8 = arith.constant 0.00999999977 : f32
    %10 = vector.broadcast %cst_8 : f32 to vector<128x128xf32>
    %11 = arith.mulf %10, %7 : vector<128x128xf32>
    %12 = arith.select %9, %7, %11 : vector<128x128xi1>, vector<128x128xf32>
    %c0_9 = arith.constant 0 : index
    %c0_10 = arith.constant 0 : index
    %13 = vector.load %arg7[%c0_9, %c0_10] : memref<256x128xbf16, #tpu.memory_space<vmem>>, vector<256x128xbf16>
    %cst_11 = arith.constant dense<0.000000e+00> : vector<128x128xf32>
    %14 = tpu.matmul %1, %13, %cst_11 {dimension_numbers = #tpu.dot_dimension_numbers<[1], [0], [0], [1], [0, 0, 1, 1], [], []>} : vector<128x256xbf16>, vector<256x128xbf16>, vector<128x128xf32> -> vector<128x128xf32>
    %c0_12 = arith.constant 0 : index
    %c0_13 = arith.constant 0 : index
    %15 = vector.load %arg8[%c0_12, %c0_13] : memref<1x128xf32, #tpu.memory_space<vmem>>, vector<1x128xf32>
    %16 = vector.broadcast %15 : vector<1x128xf32> to vector<128x128xf32>
    %17 = arith.addf %14, %16 : vector<128x128xf32>
    %cst_14 = arith.constant 0.000000e+00 : f32
    %18 = vector.broadcast %cst_14 : f32 to vector<128x128xf32>
    %19 = arith.cmpf ogt, %17, %18 : vector<128x128xf32>
    %cst_15 = arith.constant 0.00999999977 : f32
    %20 = vector.broadcast %cst_15 : f32 to vector<128x128xf32>
    %21 = arith.mulf %20, %17 : vector<128x128xf32>
    %22 = arith.select %19, %17, %21 : vector<128x128xi1>, vector<128x128xf32>
    %23 = arith.truncf %22 : vector<128x128xf32> to vector<128x128xbf16>
    %c0_16 = arith.constant 0 : index
    %c0_17 = arith.constant 0 : index
    %24 = vector.load %arg9[%c0_16, %c0_17] : memref<128x128xbf16, #tpu.memory_space<vmem>>, vector<128x128xbf16>
    %cst_18 = arith.constant dense<0.000000e+00> : vector<128x128xf32>
    %25 = tpu.matmul %23, %24, %cst_18 {dimension_numbers = #tpu.dot_dimension_numbers<[1], [0], [0], [1], [0, 0, 1, 1], [], []>} : vector<128x128xbf16>, vector<128x128xbf16>, vector<128x128xf32> -> vector<128x128xf32>
    %c0_19 = arith.constant 0 : index
    %c0_20 = arith.constant 0 : index
    %26 = vector.load %arg10[%c0_19, %c0_20] : memref<1x128xf32, #tpu.memory_space<vmem>>, vector<1x128xf32>
    %27 = vector.broadcast %26 : vector<1x128xf32> to vector<128x128xf32>
    %28 = arith.addf %25, %27 : vector<128x128xf32>
    %29 = arith.truncf %28 : vector<128x128xf32> to vector<128x128xbf16>
    %c0_21 = arith.constant 0 : index
    %c0_22 = arith.constant 0 : index
    %30 = vector.load %arg5[%c0_21, %c0_22] : memref<128x1024xbf16, #tpu.memory_space<vmem>>, vector<128x1024xbf16>
    %cst_23 = arith.constant dense<0.000000e+00> : vector<128x1024xf32>
    %31 = tpu.matmul %29, %30, %cst_23 {dimension_numbers = #tpu.dot_dimension_numbers<[1], [0], [0], [1], [0, 0, 1, 1], [], []>} : vector<128x128xbf16>, vector<128x1024xbf16>, vector<128x1024xf32> -> vector<128x1024xf32>
    %c0_24 = arith.constant 0 : index
    %c0_25 = arith.constant 0 : index
    %32 = vector.load %arg6[%c0_24, %c0_25] : memref<1x1024xf32, #tpu.memory_space<vmem>>, vector<1x1024xf32>
    %33 = vector.broadcast %32 : vector<1x1024xf32> to vector<128x1024xf32>
    %34 = arith.addf %31, %33 : vector<128x1024xf32>
    %35 = tpu.iota {dimensions = array<i32: 0>} : vector<128x1xi32>
    %c128_i32 = arith.constant 128 : i32
    %36 = arith.muli %arg0, %c128_i32 : i32
    %37 = vector.broadcast %36 : i32 to vector<128x1xi32>
    %38 = arith.addi %35, %37 : vector<128x1xi32>
    %c2_i32 = arith.constant 2 : i32
    %39 = vector.broadcast %c2_i32 : i32 to vector<128x1xi32>
    %40 = arith.cmpi slt, %38, %39 : vector<128x1xi32>
    %41 = arith.subf %28, %12 : vector<128x128xf32>
    %cst_26 = arith.constant 0.000000e+00 : f32
    %42 = vector.shape_cast %40 : vector<128x1xi1> to vector<128x1xi1>
    %43 = vector.broadcast %42 : vector<128x1xi1> to vector<128x128xi1>
    %44 = vector.broadcast %cst_26 : f32 to vector<128x128xf32>
    %45 = arith.select %43, %41, %44 : vector<128x128xi1>, vector<128x128xf32>
    %46 = arith.subf %34, %0 : vector<128x1024xf32>
    %cst_27 = arith.constant 0.000000e+00 : f32
    %47 = vector.shape_cast %40 : vector<128x1xi1> to vector<128x1xi1>
    %48 = vector.broadcast %47 : vector<128x1xi1> to vector<128x1024xi1>
    %49 = vector.broadcast %cst_27 : f32 to vector<128x1024xf32>
    %50 = arith.select %48, %46, %49 : vector<128x1024xi1>, vector<128x1024xf32>
    %c0_28 = arith.constant 0 : index
    %c0_29 = arith.constant 0 : index
    %51 = vector.load %arg11[%c0_28, %c0_29] : memref<128x128xf32, #tpu.memory_space<vmem>>, vector<128x128xf32>
    tpu.vector_store %arg11[%c0_28, %c0_29], %28 {strides = array<i32>} : memref<128x128xf32, #tpu.memory_space<vmem>>, vector<128x128xf32>,
    %52 = arith.truncf %34 : vector<128x1024xf32> to vector<128x1024xbf16>
    %c0_30 = arith.constant 0 : index
    %c0_31 = arith.constant 0 : index
    %53 = vector.load %arg12[%c0_30, %c0_31] : memref<128x1024xbf16, #tpu.memory_space<vmem>>, vector<128x1024xbf16>
    tpu.vector_store %arg12[%c0_30, %c0_31], %52 {strides = array<i32>} : memref<128x1024xbf16, #tpu.memory_space<vmem>>, vector<128x1024xbf16>,
    %c0_32 = arith.constant 0 : index
    %c0_33 = arith.constant 0 : index
    %54 = vector.load %arg13[%c0_32, %c0_33] : memref<128x128xf32, #tpu.memory_space<vmem>>, vector<128x128xf32>
    tpu.vector_store %arg13[%c0_32, %c0_33], %22 {strides = array<i32>} : memref<128x128xf32, #tpu.memory_space<vmem>>, vector<128x128xf32>,
    %55 = arith.mulf %50, %50 : vector<128x1024xf32>
    %56 = vector.shape_cast %55 : vector<128x1024xf32> to vector<1x128x1024xf32>
    %cst_34 = arith.constant dense<0.000000e+00> : vector<1xf32>
    %57 = vector.multi_reduction <add>, %56, %cst_34 [1, 2] : vector<1x128x1024xf32> to vector<1xf32>
    %58 = vector.shape_cast %57 : vector<1xf32> to vector<1x1x1xf32>
    %59 = vector.extract %58[0, 0, 0] : f32 from vector<1x1x1xf32>
    %c0_35 = arith.constant 0 : index
    %c0_36 = arith.constant 0 : index
    %60 = memref.load %arg14[%c0_35, %c0_36] : memref<1x2xf32, #tpu.memory_space<smem>>
    memref.store %59, %arg14[%c0_35, %c0_36] : memref<1x2xf32, #tpu.memory_space<smem>>
    %61 = arith.mulf %45, %45 : vector<128x128xf32>
    %62 = vector.shape_cast %61 : vector<128x128xf32> to vector<1x128x128xf32>
    %cst_37 = arith.constant dense<0.000000e+00> : vector<1xf32>
    %63 = vector.multi_reduction <add>, %62, %cst_37 [1, 2] : vector<1x128x128xf32> to vector<1xf32>
    %64 = vector.shape_cast %63 : vector<1xf32> to vector<1x1x1xf32>
    %65 = vector.extract %64[0, 0, 0] : f32 from vector<1x1x1xf32>
    %c0_38 = arith.constant 0 : index
    %c1 = arith.constant 1 : index
    %66 = memref.load %arg14[%c0_38, %c1] : memref<1x2xf32, #tpu.memory_space<smem>>
    memref.store %65, %arg14[%c0_38, %c1] : memref<1x2xf32, #tpu.memory_space<smem>>
    return
  }
  func.func @transform_0(%arg0: i32) -> (i32, i32) {
    %c0_i32 = arith.constant 0 : i32
    %c0_i32_0 = arith.constant 0 : i32
    return %arg0, %c0_i32 : i32, i32
  }
  func.func @transform_1(%arg0: i32) -> (i32, i32) {
    %c0_i32 = arith.constant 0 : i32
    %c0_i32_0 = arith.constant 0 : i32
    return %arg0, %c0_i32 : i32, i32
  }
  func.func @transform_2(%arg0: i32) -> (i32, i32) {
    %c0_i32 = arith.constant 0 : i32
    %c0_i32_0 = arith.constant 0 : i32
    %c0_i32_1 = arith.constant 0 : i32
    return %c0_i32, %c0_i32_0 : i32, i32
  }
  func.func @transform_3(%arg0: i32) -> (i32, i32) {
    %c0_i32 = arith.constant 0 : i32
    %c0_i32_0 = arith.constant 0 : i32
    %c0_i32_1 = arith.constant 0 : i32
    return %c0_i32, %c0_i32_0 : i32, i32
  }
  func.func @transform_4(%arg0: i32) -> (i32, i32) {
    %c0_i32 = arith.constant 0 : i32
    %c0_i32_0 = arith.constant 0 : i32
    %c0_i32_1 = arith.constant 0 : i32
    return %c0_i32, %c0_i32_0 : i32, i32
  }
  func.func @transform_5(%arg0: i32) -> (i32, i32) {
    %c0_i32 = arith.constant 0 : i32
    %c0_i32_0 = arith.constant 0 : i32
    %c0_i32_1 = arith.constant 0 : i32
    return %c0_i32, %c0_i32_0 : i32, i32
  }
  func.func @transform_6(%arg0: i32) -> (i32, i32) {
    %c0_i32 = arith.constant 0 : i32
    %c0_i32_0 = arith.constant 0 : i32
    %c0_i32_1 = arith.constant 0 : i32
    return %c0_i32, %c0_i32_0 : i32, i32
  }
  func.func @transform_7(%arg0: i32) -> (i32, i32) {
    %c0_i32 = arith.constant 0 : i32
    %c0_i32_0 = arith.constant 0 : i32
    %c0_i32_1 = arith.constant 0 : i32
    return %c0_i32, %c0_i32_0 : i32, i32
  }
  func.func @transform_8(%arg0: i32) -> (i32, i32) {
    %c0_i32 = arith.constant 0 : i32
    %c0_i32_0 = arith.constant 0 : i32
    %c0_i32_1 = arith.constant 0 : i32
    return %c0_i32, %c0_i32_0 : i32, i32
  }
  func.func @transform_9(%arg0: i32) -> (i32, i32) {
    %c0_i32 = arith.constant 0 : i32
    %c0_i32_0 = arith.constant 0 : i32
    %c0_i32_1 = arith.constant 0 : i32
    return %c0_i32, %c0_i32_0 : i32, i32
  }
  func.func @transform_10(%arg0: i32) -> (i32, i32) {
    %c0_i32 = arith.constant 0 : i32
    %c0_i32_0 = arith.constant 0 : i32
    return %arg0, %c0_i32 : i32, i32
  }
  func.func @transform_11(%arg0: i32) -> (i32, i32) {
    %c0_i32 = arith.constant 0 : i32
    %c0_i32_0 = arith.constant 0 : i32
    return %arg0, %c0_i32 : i32, i32
  }
  func.func @transform_12(%arg0: i32) -> (i32, i32) {
    %c0_i32 = arith.constant 0 : i32
    %c0_i32_0 = arith.constant 0 : i32
    return %arg0, %c0_i32 : i32, i32
  }
  func.func @transform_13(%arg0: i32) -> (i32, i32) {
    %c0_i32 = arith.constant 0 : i32
    %c0_i32_0 = arith.constant 0 : i32
    return %arg0, %c0_i32 : i32, i32
  }
}

</mosaic_0001>

<llo_original>
// kernel: monosynaptic_pathway_forward.1
$region0: #{monosynaptic_pathway_forward.1}
  #allocation0 [shape = 'u32[]', space=smem, size = 0x4, offset = 0x4, fixed_abs, tag = 'smem constant byte address 0x4 - core index']
  #allocation1 [shape = 'u32[144,128]{1,0:T(1,128)}', space=vmem, size = 0x12000, scoped, tag = 'internal scratch']
  %s0 = inlined_call_operand.vmem [shape: f32[2,1024], index: 0, kind: input, shape index: {}]
  %s1 = inlined_call_operand.vmem [shape: bf16[2,256], index: 1, kind: input, shape index: {}]
  %s2 = inlined_call_operand.vmem [shape: bf16[1024,128], index: 2, kind: input, shape index: {}]
  %s3 = inlined_call_operand.vmem [shape: f32[1,128], index: 3, kind: input, shape index: {}]
  %s4 = inlined_call_operand.vmem [shape: bf16[128,1024], index: 4, kind: input, shape index: {}]
  %s5 = inlined_call_operand.vmem [shape: f32[1,1024], index: 5, kind: input, shape index: {}]
  %s6 = inlined_call_operand.vmem [shape: bf16[256,128], index: 6, kind: input, shape index: {}]
  %s7 = inlined_call_operand.vmem [shape: f32[1,128], index: 7, kind: input, shape index: {}]
  %s8 = inlined_call_operand.vmem [shape: bf16[128,128], index: 8, kind: input, shape index: {}]
  %s9 = inlined_call_operand.vmem [shape: f32[1,128], index: 9, kind: input, shape index: {}]
  %s10 = inlined_call_operand.vmem [shape: f32[2,128], index: 10, kind: output, shape index: {0}]
  %s11 = inlined_call_operand.vmem [shape: bf16[2,1024], index: 11, kind: output, shape index: {1}]
  %s12 = inlined_call_operand.vmem [shape: f32[2,128], index: 12, kind: output, shape index: {2}]
  %s13 = inlined_call_operand.vmem [shape: f32[1,2], index: 13, kind: output, shape index: {3}]
  %14 = xla_tuple %s10, %s11, %s12, %s13
  %s15 = sld [smem:[#allocation0]]
  $region168: #{monosynaptic_pathway_forward.1} parent=0
    _
  %s17 = ssub.s32 1, %s15
  %s18 = scalar_select 0, %s17, %s15
  $region1: #{monosynaptic_pathway_forward.1} parent=0
    #allocation2 [shape = 'u8[65536]{0}', space=vmem, size = 0x10000, scoped, tag = 'output window, operand 0, single buffered']
    #allocation3 [shape = 'u8[262144]{0}', space=vmem, size = 0x40000, scoped, tag = 'output window, operand 1, single buffered']
    #allocation4 [shape = 'u8[65536]{0}', space=vmem, size = 0x10000, scoped, tag = 'output window, operand 2, single buffered']
    #allocation5 [shape = 'u8[512]{0}', space=smem, size = 0x200, scoped, tag = 'output window, operand 3, single buffered']
    #allocation6 [shape = 's32[1]{0}', space=sflag, size = 0x4, scoped, tag = 'scoped memory for monosynaptic_pathway_forward.1']
    %19 = vsyncpa [#allocation6], 0
    // Predicated region
    $region2: #{monosynaptic_pathway_forward.1} parent=1 // pred_check
      _
    $region3: #{monosynaptic_pathway_forward.1} parent=1 // pred_check_branch
      %21 = sbr.rel (0) target = $region5
    $region4: #{monosynaptic_pathway_forward.1} parent=1 // pred_region
      _
    $region5: #{monosynaptic_pathway_forward.1} parent=1 // pred_fallthru
      _
    // Predicated region
    $region6: #{monosynaptic_pathway_forward.1} parent=1 // pred_check
      _
    $region7: #{monosynaptic_pathway_forward.1} parent=1 // pred_check_branch
      %23 = sbr.rel (0) target = $region9
    $region8: #{monosynaptic_pathway_forward.1} parent=1 // pred_region
      _
    $region9: #{monosynaptic_pathway_forward.1} parent=1 // pred_fallthru
      _
    // Predicated region
    $region10: #{monosynaptic_pathway_forward.1} parent=1 // pred_check
      _
    $region11: #{monosynaptic_pathway_forward.1} parent=1 // pred_check_branch
      %25 = sbr.rel (0) target = $region13
    $region12: #{monosynaptic_pathway_forward.1} parent=1 // pred_region
      _
    $region13: #{monosynaptic_pathway_forward.1} parent=1 // pred_fallthru
      _
    // Predicated region
    $region14: #{monosynaptic_pathway_forward.1} parent=1 // pred_check
      _
    $region15: #{monosynaptic_pathway_forward.1} parent=1 // pred_check_branch
      %27 = sbr.rel (0) target = $region17
    $region16: #{monosynaptic_pathway_forward.1} parent=1 // pred_region
      _
    $region17: #{monosynaptic_pathway_forward.1} parent=1 // pred_fallthru
      _
    // Predicated region
    $region18: #{monosynaptic_pathway_forward.1} parent=1 // pred_check
      _
    $region19: #{monosynaptic_pathway_forward.1} parent=1 // pred_check_branch
      %29 = sbr.rel (0) target = $region21
    $region20: #{monosynaptic_pathway_forward.1} parent=1 // pred_region
      _
    $region21: #{monosynaptic_pathway_forward.1} parent=1 // pred_fallthru
      _
    // Predicated region
    $region22: #{monosynaptic_pathway_forward.1} parent=1 // pred_check
      _
    $region23: #{monosynaptic_pathway_forward.1} parent=1 // pred_check_branch
      %31 = sbr.rel (0) target = $region25
    $region24: #{monosynaptic_pathway_forward.1} parent=1 // pred_region
      _
    $region25: #{monosynaptic_pathway_forward.1} parent=1 // pred_fallthru
      _
    // Predicated region
    $region26: #{monosynaptic_pathway_forward.1} parent=1 // pred_check
      _
    $region27: #{monosynaptic_pathway_forward.1} parent=1 // pred_check_branch
      %33 = sbr.rel (0) target = $region29
    $region28: #{monosynaptic_pathway_forward.1} parent=1 // pred_region
      _
    $region29: #{monosynaptic_pathway_forward.1} parent=1 // pred_fallthru
      _
    // Predicated region
    $region30: #{monosynaptic_pathway_forward.1} parent=1 // pred_check
      _
    $region31: #{monosynaptic_pathway_forward.1} parent=1 // pred_check_branch
      %35 = sbr.rel (0) target = $region33
    $region32: #{monosynaptic_pathway_forward.1} parent=1 // pred_region
      _
    $region33: #{monosynaptic_pathway_forward.1} parent=1 // pred_fallthru
      _
    // Predicated region
    $region34: #{monosynaptic_pathway_forward.1} parent=1 // pred_check
      _
    $region35: #{monosynaptic_pathway_forward.1} parent=1 // pred_check_branch
      %37 = sbr.rel (0) target = $region37
    $region36: #{monosynaptic_pathway_forward.1} parent=1 // pred_region
      _
    $region37: #{monosynaptic_pathway_forward.1} parent=1 // pred_fallthru
      _
    // Predicated region
    $region38: #{monosynaptic_pathway_forward.1} parent=1 // pred_check
      _
    $region39: #{monosynaptic_pathway_forward.1} parent=1 // pred_check_branch
      %39 = sbr.rel (0) target = $region41
    $region40: #{monosynaptic_pathway_forward.1} parent=1 // pred_region
      _
    $region41: #{monosynaptic_pathway_forward.1} parent=1 // pred_fallthru
      _
    %v41 = vld [vmem:[%s0] sm:$0xff]
    %v42 = vld [vmem:[%s0 + $0x8] sm:$0xff]
    %v43 = vld [vmem:[%s0 + $0x10] sm:$0xff]
    %v44 = vld [vmem:[%s0 + $0x18] sm:$0xff]
    %v45 = vld [vmem:[%s0 + $0x20] sm:$0xff]
    %v46 = vld [vmem:[%s0 + $0x28] sm:$0xff]
    %v47 = vld [vmem:[%s0 + $0x30] sm:$0xff]
    %v48 = vld [vmem:[%s0 + $0x38] sm:$0xff]
    %v49 = vld [vmem:[%s0 + $0x40] sm:$0xff]
    %v50 = vld [vmem:[%s0 + $0x48] sm:$0xff]
    %v51 = vld [vmem:[%s0 + $0x50] sm:$0xff]
    %v52 = vld [vmem:[%s0 + $0x58] sm:$0xff]
    %v53 = vld [vmem:[%s0 + $0x60] sm:$0xff]
    %v54 = vld [vmem:[%s0 + $0x68] sm:$0xff]
    %v55 = vld [vmem:[%s0 + $0x70] sm:$0xff]
    %v56 = vld [vmem:[%s0 + $0x78] sm:$0xff]
    %v57 = vld [vmem:[%s0 + $0x80] sm:$0xff]
    %v58 = vld [vmem:[%s0 + $0x88] sm:$0xff]
    %v59 = vld [vmem:[%s0 + $0x90] sm:$0xff]
    %v60 = vld [vmem:[%s0 + $0x98] sm:$0xff]
    %v61 = vld [vmem:[%s0 + $0xa0] sm:$0xff]
    %v62 = vld [vmem:[%s0 + $0xa8] sm:$0xff]
    %v63 = vld [vmem:[%s0 + $0xb0] sm:$0xff]
    %v64 = vld [vmem:[%s0 + $0xb8] sm:$0xff]
    %v65 = vld [vmem:[%s0 + $0xc0] sm:$0xff]
    %v66 = vld [vmem:[%s0 + $0xc8] sm:$0xff]
    %v67 = vld [vmem:[%s0 + $0xd0] sm:$0xff]
    %v68 = vld [vmem:[%s0 + $0xd8] sm:$0xff]
    %v69 = vld [vmem:[%s0 + $0xe0] sm:$0xff]
    %v70 = vld [vmem:[%s0 + $0xe8] sm:$0xff]
    %v71 = vld [vmem:[%s0 + $0xf0] sm:$0xff]
    %v72 = vld [vmem:[%s0 + $0xf8] sm:$0xff]
    %v73 = vld [vmem:[%s0 + $0x100] sm:$0xff]
    %v74 = vld [vmem:[%s0 + $0x108] sm:$0xff]
    %v75 = vld [vmem:[%s0 + $0x110] sm:$0xff]
    %v76 = vld [vmem:[%s0 + $0x118] sm:$0xff]
    %v77 = vld [vmem:[%s0 + $0x120] sm:$0xff]
    %v78 = vld [vmem:[%s0 + $0x128] sm:$0xff]
    %v79 = vld [vmem:[%s0 + $0x130] sm:$0xff]
    %v80 = vld [vmem:[%s0 + $0x138] sm:$0xff]
    %v81 = vld [vmem:[%s0 + $0x140] sm:$0xff]
    %v82 = vld [vmem:[%s0 + $0x148] sm:$0xff]
    %v83 = vld [vmem:[%s0 + $0x150] sm:$0xff]
    %v84 = vld [vmem:[%s0 + $0x158] sm:$0xff]
    %v85 = vld [vmem:[%s0 + $0x160] sm:$0xff]
    %v86 = vld [vmem:[%s0 + $0x168] sm:$0xff]
    %v87 = vld [vmem:[%s0 + $0x170] sm:$0xff]
    %v88 = vld [vmem:[%s0 + $0x178] sm:$0xff]
    %v89 = vld [vmem:[%s0 + $0x180] sm:$0xff]
    %v90 = vld [vmem:[%s0 + $0x188] sm:$0xff]
    %v91 = vld [vmem:[%s0 + $0x190] sm:$0xff]
    %v92 = vld [vmem:[%s0 + $0x198] sm:$0xff]
    %v93 = vld [vmem:[%s0 + $0x1a0] sm:$0xff]
    %v94 = vld [vmem:[%s0 + $0x1a8] sm:$0xff]
    %v95 = vld [vmem:[%s0 + $0x1b0] sm:$0xff]
    %v96 = vld [vmem:[%s0 + $0x1b8] sm:$0xff]
    %v97 = vld [vmem:[%s0 + $0x1c0] sm:$0xff]
    %v98 = vld [vmem:[%s0 + $0x1c8] sm:$0xff]
    %v99 = vld [vmem:[%s0 + $0x1d0] sm:$0xff]
    %v100 = vld [vmem:[%s0 + $0x1d8] sm:$0xff]
    %v101 = vld [vmem:[%s0 + $0x1e0] sm:$0xff]
    %v102 = vld [vmem:[%s0 + $0x1e8] sm:$0xff]
    %v103 = vld [vmem:[%s0 + $0x1f0] sm:$0xff]
    %v104 = vld [vmem:[%s0 + $0x1f8] sm:$0xff]
    %v105 = vld [vmem:[%s0 + $0x200] sm:$0xff]
    %v106 = vld [vmem:[%s0 + $0x208] sm:$0xff]
    %v107 = vld [vmem:[%s0 + $0x210] sm:$0xff]
    %v108 = vld [vmem:[%s0 + $0x218] sm:$0xff]
    %v109 = vld [vmem:[%s0 + $0x220] sm:$0xff]
    %v110 = vld [vmem:[%s0 + $0x228] sm:$0xff]
    %v111 = vld [vmem:[%s0 + $0x230] sm:$0xff]
    %v112 = vld [vmem:[%s0 + $0x238] sm:$0xff]
    %v113 = vld [vmem:[%s0 + $0x240] sm:$0xff]
    %v114 = vld [vmem:[%s0 + $0x248] sm:$0xff]
    %v115 = vld [vmem:[%s0 + $0x250] sm:$0xff]
    %v116 = vld [vmem:[%s0 + $0x258] sm:$0xff]
    %v117 = vld [vmem:[%s0 + $0x260] sm:$0xff]
    %v118 = vld [vmem:[%s0 + $0x268] sm:$0xff]
    %v119 = vld [vmem:[%s0 + $0x270] sm:$0xff]
    %v120 = vld [vmem:[%s0 + $0x278] sm:$0xff]
    %v121 = vld [vmem:[%s0 + $0x280] sm:$0xff]
    %v122 = vld [vmem:[%s0 + $0x288] sm:$0xff]
    %v123 = vld [vmem:[%s0 + $0x290] sm:$0xff]
    %v124 = vld [vmem:[%s0 + $0x298] sm:$0xff]
    %v125 = vld [vmem:[%s0 + $0x2a0] sm:$0xff]
    %v126 = vld [vmem:[%s0 + $0x2a8] sm:$0xff]
    %v127 = vld [vmem:[%s0 + $0x2b0] sm:$0xff]
    %v128 = vld [vmem:[%s0 + $0x2b8] sm:$0xff]
    %v129 = vld [vmem:[%s0 + $0x2c0] sm:$0xff]
    %v130 = vld [vmem:[%s0 + $0x2c8] sm:$0xff]
    %v131 = vld [vmem:[%s0 + $0x2d0] sm:$0xff]
    %v132 = vld [vmem:[%s0 + $0x2d8] sm:$0xff]
    %v133 = vld [vmem:[%s0 + $0x2e0] sm:$0xff]
    %v134 = vld [vmem:[%s0 + $0x2e8] sm:$0xff]
    %v135 = vld [vmem:[%s0 + $0x2f0] sm:$0xff]
    %v136 = vld [vmem:[%s0 + $0x2f8] sm:$0xff]
    %v137 = vld [vmem:[%s0 + $0x300] sm:$0xff]
    %v138 = vld [vmem:[%s0 + $0x308] sm:$0xff]
    %v139 = vld [vmem:[%s0 + $0x310] sm:$0xff]
    %v140 = vld [vmem:[%s0 + $0x318] sm:$0xff]
    %v141 = vld [vmem:[%s0 + $0x320] sm:$0xff]
    %v142 = vld [vmem:[%s0 + $0x328] sm:$0xff]
    %v143 = vld [vmem:[%s0 + $0x330] sm:$0xff]
    %v144 = vld [vmem:[%s0 + $0x338] sm:$0xff]
    %v145 = vld [vmem:[%s0 + $0x340] sm:$0xff]
    %v146 = vld [vmem:[%s0 + $0x348] sm:$0xff]
    %v147 = vld [vmem:[%s0 + $0x350] sm:$0xff]
    %v148 = vld [vmem:[%s0 + $0x358] sm:$0xff]
    %v149 = vld [vmem:[%s0 + $0x360] sm:$0xff]
    %v150 = vld [vmem:[%s0 + $0x368] sm:$0xff]
    %v151 = vld [vmem:[%s0 + $0x370] sm:$0xff]
    %v152 = vld [vmem:[%s0 + $0x378] sm:$0xff]
    %v153 = vld [vmem:[%s0 + $0x380] sm:$0xff]
    %v154 = vld [vmem:[%s0 + $0x388] sm:$0xff]
    %v155 = vld [vmem:[%s0 + $0x390] sm:$0xff]
    %v156 = vld [vmem:[%s0 + $0x398] sm:$0xff]
    %v157 = vld [vmem:[%s0 + $0x3a0] sm:$0xff]
    %v158 = vld [vmem:[%s0 + $0x3a8] sm:$0xff]
    %v159 = vld [vmem:[%s0 + $0x3b0] sm:$0xff]
    %v160 = vld [vmem:[%s0 + $0x3b8] sm:$0xff]
    %v161 = vld [vmem:[%s0 + $0x3c0] sm:$0xff]
    %v162 = vld [vmem:[%s0 + $0x3c8] sm:$0xff]
    %v163 = vld [vmem:[%s0 + $0x3d0] sm:$0xff]
    %v164 = vld [vmem:[%s0 + $0x3d8] sm:$0xff]
    %v165 = vld [vmem:[%s0 + $0x3e0] sm:$0xff]
    %v166 = vld [vmem:[%s0 + $0x3e8] sm:$0xff]
    %v167 = vld [vmem:[%s0 + $0x3f0] sm:$0xff]
    %v168 = vld [vmem:[%s0 + $0x3f8] sm:$0xff]
    %v169 = vld [vmem:[%s1] sm:$0x3]
    %v170 = vld [vmem:[%s1 + $0x2] sm:$0x3]
    %v171 = vld [vmem:[%s1 + $0x4] sm:$0x3]
    %v172 = vld [vmem:[%s1 + $0x6] sm:$0x3]
    %v173 = vld [vmem:[%s1 + $0x8] sm:$0x3]
    %v174 = vld [vmem:[%s1 + $0xa] sm:$0x3]
    %v175 = vld [vmem:[%s1 + $0xc] sm:$0x3]
    %v176 = vld [vmem:[%s1 + $0xe] sm:$0x3]
    %v177 = vld [vmem:[%s1 + $0x10] sm:$0x3]
    %v178 = vld [vmem:[%s1 + $0x12] sm:$0x3]
    %v179 = vld [vmem:[%s1 + $0x14] sm:$0x3]
    %v180 = vld [vmem:[%s1 + $0x16] sm:$0x3]
    %v181 = vld [vmem:[%s1 + $0x18] sm:$0x3]
    %v182 = vld [vmem:[%s1 + $0x1a] sm:$0x3]
    %v183 = vld [vmem:[%s1 + $0x1c] sm:$0x3]
    %v184 = vld [vmem:[%s1 + $0x1e] sm:$0x3]
    %v185 = vld [vmem:[%s1 + $0x20] sm:$0x3]
    %v186 = vld [vmem:[%s1 + $0x22] sm:$0x3]
    %v187 = vld [vmem:[%s1 + $0x24] sm:$0x3]
    %v188 = vld [vmem:[%s1 + $0x26] sm:$0x3]
    %v189 = vld [vmem:[%s1 + $0x28] sm:$0x3]
    %v190 = vld [vmem:[%s1 + $0x2a] sm:$0x3]
    %v191 = vld [vmem:[%s1 + $0x2c] sm:$0x3]
    %v192 = vld [vmem:[%s1 + $0x2e] sm:$0x3]
    %v193 = vld [vmem:[%s1 + $0x30] sm:$0x3]
    %v194 = vld [vmem:[%s1 + $0x32] sm:$0x3]
    %v195 = vld [vmem:[%s1 + $0x34] sm:$0x3]
    %v196 = vld [vmem:[%s1 + $0x36] sm:$0x3]
    %v197 = vld [vmem:[%s1 + $0x38] sm:$0x3]
    %v198 = vld [vmem:[%s1 + $0x3a] sm:$0x3]
    %v199 = vld [vmem:[%s1 + $0x3c] sm:$0x3]
    %v200 = vld [vmem:[%s1 + $0x3e] sm:$0x3]
    %v201 = vld [vmem:[%s1 + $0x40] sm:$0x3]
    %v202 = vld [vmem:[%s1 + $0x42] sm:$0x3]
    %v203 = vld [vmem:[%s1 + $0x44] sm:$0x3]
    %v204 = vld [vmem:[%s1 + $0x46] sm:$0x3]
    %v205 = vld [vmem:[%s1 + $0x48] sm:$0x3]
    %v206 = vld [vmem:[%s1 + $0x4a] sm:$0x3]
    %v207 = vld [vmem:[%s1 + $0x4c] sm:$0x3]
    %v208 = vld [vmem:[%s1 + $0x4e] sm:$0x3]
    %v209 = vld [vmem:[%s1 + $0x50] sm:$0x3]
    %v210 = vld [vmem:[%s1 + $0x52] sm:$0x3]
    %v211 = vld [vmem:[%s1 + $0x54] sm:$0x3]
    %v212 = vld [vmem:[%s1 + $0x56] sm:$0x3]
    %v213 = vld [vmem:[%s1 + $0x58] sm:$0x3]
    %v214 = vld [vmem:[%s1 + $0x5a] sm:$0x3]
    %v215 = vld [vmem:[%s1 + $0x5c] sm:$0x3]
    %v216 = vld [vmem:[%s1 + $0x5e] sm:$0x3]
    %v217 = vld [vmem:[%s1 + $0x60] sm:$0x3]
    %v218 = vld [vmem:[%s1 + $0x62] sm:$0x3]
    %v219 = vld [vmem:[%s1 + $0x64] sm:$0x3]
    %v220 = vld [vmem:[%s1 + $0x66] sm:$0x3]
    %v221 = vld [vmem:[%s1 + $0x68] sm:$0x3]
    %v222 = vld [vmem:[%s1 + $0x6a] sm:$0x3]
    %v223 = vld [vmem:[%s1 + $0x6c] sm:$0x3]
    %v224 = vld [vmem:[%s1 + $0x6e] sm:$0x3]
    %v225 = vld [vmem:[%s1 + $0x70] sm:$0x3]
    %v226 = vld [vmem:[%s1 + $0x72] sm:$0x3]
    %v227 = vld [vmem:[%s1 + $0x74] sm:$0x3]
    %v228 = vld [vmem:[%s1 + $0x76] sm:$0x3]
    %v229 = vld [vmem:[%s1 + $0x78] sm:$0x3]
    %v230 = vld [vmem:[%s1 + $0x7a] sm:$0x3]
    %v231 = vld [vmem:[%s1 + $0x7c] sm:$0x3]
    %v232 = vld [vmem:[%s1 + $0x7e] sm:$0x3]
    %v361 = vcombine.low %v41, %v43
    %v362 = vcombine.high %v41, %v43
    %v363 = vcombine.low %v45, %v47
    %v364 = vcombine.high %v45, %v47
    %v366 = vunpack.c.l.s4 1983009808
    %v367 = vunpack.c.0.s8 %v366
    %v368 = vlaneseq
    %v369 = vshrl.u32 %v368, 7
    %v370 = vsub.s32 %v367, %v369
    %v371 = vrot.slane %v361, %v370
    %v373 = vunpack.c.l.s4 1983009808
    %v374 = vunpack.c.0.s8 %v373
    %v375 = vlaneseq
    %v376 = vshrl.u32 %v375, 7
    %v377 = vsub.s32 %v374, %v376
    %v378 = vrot.slane %v362, %v377
    %v380 = vunpack.c.l.s4 1983009808
    %v381 = vunpack.c.0.s8 %v380
    %v382 = vlaneseq
    %v383 = vshrl.u32 %v382, 7
    %v384 = vsub.s32 %v381, %v383
    %v385 = vrot.slane %v363, %v384
    %v387 = vunpack.c.l.s4 1983009808
    %v388 = vunpack.c.0.s8 %v387
    %v389 = vlaneseq
    %v390 = vshrl.u32 %v389, 7
    %v391 = vsub.s32 %v388, %v390
    %v392 = vrot.slane %v364, %v391
    %v393 = vcombine.low %v371, %v385
    %v394 = vcombine.high %v371, %v385
    %v395 = vcombine.low %v378, %v392
    %v396 = vcombine.high %v378, %v392
    %v397 = vcombine.low %v42, %v44
    %v398 = vcombine.high %v42, %v44
    %v399 = vcombine.low %v46, %v48
    %v400 = vcombine.high %v46, %v48
    %v402 = vunpack.c.l.s4 1983009808
    %v403 = vunpack.c.0.s8 %v402
    %v404 = vlaneseq
    %v405 = vshrl.u32 %v404, 7
    %v406 = vsub.s32 %v403, %v405
    %v407 = vrot.slane %v397, %v406
    %v409 = vunpack.c.l.s4 1983009808
    %v410 = vunpack.c.0.s8 %v409
    %v411 = vlaneseq
    %v412 = vshrl.u32 %v411, 7
    %v413 = vsub.s32 %v410, %v412
    %v414 = vrot.slane %v398, %v413
    %v416 = vunpack.c.l.s4 1983009808
    %v417 = vunpack.c.0.s8 %v416
    %v418 = vlaneseq
    %v419 = vshrl.u32 %v418, 7
    %v420 = vsub.s32 %v417, %v419
    %v421 = vrot.slane %v399, %v420
    %v423 = vunpack.c.l.s4 1983009808
    %v424 = vunpack.c.0.s8 %v423
    %v425 = vlaneseq
    %v426 = vshrl.u32 %v425, 7
    %v427 = vsub.s32 %v424, %v426
    %v428 = vrot.slane %v400, %v427
    %v429 = vcombine.low %v407, %v421
    %v430 = vcombine.high %v407, %v421
    %v431 = vcombine.low %v414, %v428
    %v432 = vcombine.high %v414, %v428
    %v433 = vcombine.low %v49, %v51
    %v434 = vcombine.high %v49, %v51
    %v435 = vcombine.low %v53, %v55
    %v436 = vcombine.high %v53, %v55
    %v438 = vunpack.c.l.s4 1983009808
    %v439 = vunpack.c.0.s8 %v438
    %v440 = vlaneseq
    %v441 = vshrl.u32 %v440, 7
    %v442 = vsub.s32 %v439, %v441
    %v443 = vrot.slane %v433, %v442
    %v445 = vunpack.c.l.s4 1983009808
    %v446 = vunpack.c.0.s8 %v445
    %v447 = vlaneseq
    %v448 = vshrl.u32 %v447, 7
    %v449 = vsub.s32 %v446, %v448
    %v450 = vrot.slane %v434, %v449
    %v452 = vunpack.c.l.s4 1983009808
    %v453 = vunpack.c.0.s8 %v452
    %v454 = vlaneseq
    %v455 = vshrl.u32 %v454, 7
    %v456 = vsub.s32 %v453, %v455
    %v457 = vrot.slane %v435, %v456
    %v459 = vunpack.c.l.s4 1983009808
    %v460 = vunpack.c.0.s8 %v459
    %v461 = vlaneseq
    %v462 = vshrl.u32 %v461, 7
    %v463 = vsub.s32 %v460, %v462
    %v464 = vrot.slane %v436, %v463
    %v465 = vcombine.low %v443, %v457
    %v466 = vcombine.high %v443, %v457
    %v467 = vcombine.low %v450, %v464
    %v468 = vcombine.high %v450, %v464
    %v469 = vcombine.low %v50, %v52
    %v470 = vcombine.high %v50, %v52
    %v471 = vcombine.low %v54, %v56
    %v472 = vcombine.high %v54, %v56
    %v474 = vunpack.c.l.s4 1983009808
    %v475 = vunpack.c.0.s8 %v474
    %v476 = vlaneseq
    %v477 = vshrl.u32 %v476, 7
    %v478 = vsub.s32 %v475, %v477
    %v479 = vrot.slane %v469, %v478
    %v481 = vunpack.c.l.s4 1983009808
    %v482 = vunpack.c.0.s8 %v481
    %v483 = vlaneseq
    %v484 = vshrl.u32 %v483, 7
    %v485 = vsub.s32 %v482, %v484
    %v486 = vrot.slane %v470, %v485
    %v488 = vunpack.c.l.s4 1983009808
    %v489 = vunpack.c.0.s8 %v488
    %v490 = vlaneseq
    %v491 = vshrl.u32 %v490, 7
    %v492 = vsub.s32 %v489, %v491
    %v493 = vrot.slane %v471, %v492
    %v495 = vunpack.c.l.s4 1983009808
    %v496 = vunpack.c.0.s8 %v495
    %v497 = vlaneseq
    %v498 = vshrl.u32 %v497, 7
    %v499 = vsub.s32 %v496, %v498
    %v500 = vrot.slane %v472, %v499
    %v501 = vcombine.low %v479, %v493
    %v502 = vcombine.high %v479, %v493
    %v503 = vcombine.low %v486, %v500
    %v504 = vcombine.high %v486, %v500
    %v505 = vcombine.low %v57, %v59
    %v506 = vcombine.high %v57, %v59
    %v507 = vcombine.low %v61, %v63
    %v508 = vcombine.high %v61, %v63
    %v510 = vunpack.c.l.s4 1983009808
    %v511 = vunpack.c.0.s8 %v510
    %v512 = vlaneseq
    %v513 = vshrl.u32 %v512, 7
    %v514 = vsub.s32 %v511, %v513
    %v515 = vrot.slane %v505, %v514
    %v517 = vunpack.c.l.s4 1983009808
    %v518 = vunpack.c.0.s8 %v517
    %v519 = vlaneseq
    %v520 = vshrl.u32 %v519, 7
    %v521 = vsub.s32 %v518, %v520
    %v522 = vrot.slane %v506, %v521
    %v524 = vunpack.c.l.s4 1983009808
    %v525 = vunpack.c.0.s8 %v524
    %v526 = vlaneseq
    %v527 = vshrl.u32 %v526, 7
    %v528 = vsub.s32 %v525, %v527
    %v529 = vrot.slane %v507, %v528
    %v531 = vunpack.c.l.s4 1983009808
    %v532 = vunpack.c.0.s8 %v531
    %v533 = vlaneseq
    %v534 = vshrl.u32 %v533, 7
    %v535 = vsub.s32 %v532, %v534
    %v536 = vrot.slane %v508, %v535
    %v537 = vcombine.low %v515, %v529
    %v538 = vcombine.high %v515, %v529
    %v539 = vcombine.low %v522, %v536
    %v540 = vcombine.high %v522, %v536
    %v541 = vcombine.low %v58, %v60
    %v542 = vcombine.high %v58, %v60
    %v543 = vcombine.low %v62, %v64
    %v544 = vcombine.high %v62, %v64
    %v546 = vunpack.c.l.s4 1983009808
    %v547 = vunpack.c.0.s8 %v546
    %v548 = vlaneseq
    %v549 = vshrl.u32 %v548, 7
    %v550 = vsub.s32 %v547, %v549
    %v551 = vrot.slane %v541, %v550
    %v553 = vunpack.c.l.s4 1983009808
    %v554 = vunpack.c.0.s8 %v553
    %v555 = vlaneseq
    %v556 = vshrl.u32 %v555, 7
    %v557 = vsub.s32 %v554, %v556
    %v558 = vrot.slane %v542, %v557
    %v560 = vunpack.c.l.s4 1983009808
    %v561 = vunpack.c.0.s8 %v560
    %v562 = vlaneseq
    %v563 = vshrl.u32 %v562, 7
    %v564 = vsub.s32 %v561, %v563
    %v565 = vrot.slane %v543, %v564
    %v567 = vunpack.c.l.s4 1983009808
    %v568 = vunpack.c.0.s8 %v567
    %v569 = vlaneseq
    %v570 = vshrl.u32 %v569, 7
    %v571 = vsub.s32 %v568, %v570
    %v572 = vrot.slane %v544, %v571
    %v573 = vcombine.low %v551, %v565
    %v574 = vcombine.high %v551, %v565
    %v575 = vcombine.low %v558, %v572
    %v576 = vcombine.high %v558, %v572
    %v577 = vcombine.low %v65, %v67
    %v578 = vcombine.high %v65, %v67
    %v579 = vcombine.low %v69, %v71
    %v580 = vcombine.high %v69, %v71
    %v582 = vunpack.c.l.s4 1983009808
    %v583 = vunpack.c.0.s8 %v582
    %v584 = vlaneseq
    %v585 = vshrl.u32 %v584, 7
    %v586 = vsub.s32 %v583, %v585
    %v587 = vrot.slane %v577, %v586
    %v589 = vunpack.c.l.s4 1983009808
    %v590 = vunpack.c.0.s8 %v589
    %v591 = vlaneseq
    %v592 = vshrl.u32 %v591, 7
    %v593 = vsub.s32 %v590, %v592
    %v594 = vrot.slane %v578, %v593
    %v596 = vunpack.c.l.s4 1983009808
    %v597 = vunpack.c.0.s8 %v596
    %v598 = vlaneseq
    %v599 = vshrl.u32 %v598, 7
    %v600 = vsub.s32 %v597, %v599
    %v601 = vrot.slane %v579, %v600
    %v603 = vunpack.c.l.s4 1983009808
    %v604 = vunpack.c.0.s8 %v603
    %v605 = vlaneseq
    %v606 = vshrl.u32 %v605, 7
    %v607 = vsub.s32 %v604, %v606
    %v608 = vrot.slane %v580, %v607
    %v609 = vcombine.low %v587, %v601
    %v610 = vcombine.high %v587, %v601
    %v611 = vcombine.low %v594, %v608
    %v612 = vcombine.high %v594, %v608
    %v613 = vcombine.low %v66, %v68
    %v614 = vcombine.high %v66, %v68
    %v615 = vcombine.low %v70, %v72
    %v616 = vcombine.high %v70, %v72
    %v618 = vunpack.c.l.s4 1983009808
    %v619 = vunpack.c.0.s8 %v618
    %v620 = vlaneseq
    %v621 = vshrl.u32 %v620, 7
    %v622 = vsub.s32 %v619, %v621
    %v623 = vrot.slane %v613, %v622
    %v625 = vunpack.c.l.s4 1983009808
    %v626 = vunpack.c.0.s8 %v625
    %v627 = vlaneseq
    %v628 = vshrl.u32 %v627, 7
    %v629 = vsub.s32 %v626, %v628
    %v630 = vrot.slane %v614, %v629
    %v632 = vunpack.c.l.s4 1983009808
    %v633 = vunpack.c.0.s8 %v632
    %v634 = vlaneseq
    %v635 = vshrl.u32 %v634, 7
    %v636 = vsub.s32 %v633, %v635
    %v637 = vrot.slane %v615, %v636
    %v639 = vunpack.c.l.s4 1983009808
    %v640 = vunpack.c.0.s8 %v639
    %v641 = vlaneseq
    %v642 = vshrl.u32 %v641, 7
    %v643 = vsub.s32 %v640, %v642
    %v644 = vrot.slane %v616, %v643
    %v645 = vcombine.low %v623, %v637
    %v646 = vcombine.high %v623, %v637
    %v647 = vcombine.low %v630, %v644
    %v648 = vcombine.high %v630, %v644
    %v649 = vcombine.low %v73, %v75
    %v650 = vcombine.high %v73, %v75
    %v651 = vcombine.low %v77, %v79
    %v652 = vcombine.high %v77, %v79
    %v654 = vunpack.c.l.s4 1983009808
    %v655 = vunpack.c.0.s8 %v654
    %v656 = vlaneseq
    %v657 = vshrl.u32 %v656, 7
    %v658 = vsub.s32 %v655, %v657
    %v659 = vrot.slane %v649, %v658
    %v661 = vunpack.c.l.s4 1983009808
    %v662 = vunpack.c.0.s8 %v661
    %v663 = vlaneseq
    %v664 = vshrl.u32 %v663, 7
    %v665 = vsub.s32 %v662, %v664
    %v666 = vrot.slane %v650, %v665
    %v668 = vunpack.c.l.s4 1983009808
    %v669 = vunpack.c.0.s8 %v668
    %v670 = vlaneseq
    %v671 = vshrl.u32 %v670, 7
    %v672 = vsub.s32 %v669, %v671
    %v673 = vrot.slane %v651, %v672
    %v675 = vunpack.c.l.s4 1983009808
    %v676 = vunpack.c.0.s8 %v675
    %v677 = vlaneseq
    %v678 = vshrl.u32 %v677, 7
    %v679 = vsub.s32 %v676, %v678
    %v680 = vrot.slane %v652, %v679
    %v681 = vcombine.low %v659, %v673
    %v682 = vcombine.high %v659, %v673
    %v683 = vcombine.low %v666, %v680
    %v684 = vcombine.high %v666, %v680
    %v685 = vcombine.low %v74, %v76
    %v686 = vcombine.high %v74, %v76
    %v687 = vcombine.low %v78, %v80
    %v688 = vcombine.high %v78, %v80
    %v690 = vunpack.c.l.s4 1983009808
    %v691 = vunpack.c.0.s8 %v690
    %v692 = vlaneseq
    %v693 = vshrl.u32 %v692, 7
    %v694 = vsub.s32 %v691, %v693
    %v695 = vrot.slane %v685, %v694
    %v697 = vunpack.c.l.s4 1983009808
    %v698 = vunpack.c.0.s8 %v697
    %v699 = vlaneseq
    %v700 = vshrl.u32 %v699, 7
    %v701 = vsub.s32 %v698, %v700
    %v702 = vrot.slane %v686, %v701
    %v704 = vunpack.c.l.s4 1983009808
    %v705 = vunpack.c.0.s8 %v704
    %v706 = vlaneseq
    %v707 = vshrl.u32 %v706, 7
    %v708 = vsub.s32 %v705, %v707
    %v709 = vrot.slane %v687, %v708
    %v711 = vunpack.c.l.s4 1983009808
    %v712 = vunpack.c.0.s8 %v711
    %v713 = vlaneseq
    %v714 = vshrl.u32 %v713, 7
    %v715 = vsub.s32 %v712, %v714
    %v716 = vrot.slane %v688, %v715
    %v717 = vcombine.low %v695, %v709
    %v718 = vcombine.high %v695, %v709
    %v719 = vcombine.low %v702, %v716
    %v720 = vcombine.high %v702, %v716
    %v721 = vcombine.low %v81, %v83
    %v722 = vcombine.high %v81, %v83
    %v723 = vcombine.low %v85, %v87
    %v724 = vcombine.high %v85, %v87
    %v726 = vunpack.c.l.s4 1983009808
    %v727 = vunpack.c.0.s8 %v726
    %v728 = vlaneseq
    %v729 = vshrl.u32 %v728, 7
    %v730 = vsub.s32 %v727, %v729
    %v731 = vrot.slane %v721, %v730
    %v733 = vunpack.c.l.s4 1983009808
    %v734 = vunpack.c.0.s8 %v733
    %v735 = vlaneseq
    %v736 = vshrl.u32 %v735, 7
    %v737 = vsub.s32 %v734, %v736
    %v738 = vrot.slane %v722, %v737
    %v740 = vunpack.c.l.s4 1983009808
    %v741 = vunpack.c.0.s8 %v740
    %v742 = vlaneseq
    %v743 = vshrl.u32 %v742, 7
    %v744 = vsub.s32 %v741, %v743
    %v745 = vrot.slane %v723, %v744
    %v747 = vunpack.c.l.s4 1983009808
    %v748 = vunpack.c.0.s8 %v747
    %v749 = vlaneseq
    %v750 = vshrl.u32 %v749, 7
    %v751 = vsub.s32 %v748, %v750
    %v752 = vrot.slane %v724, %v751
    %v753 = vcombine.low %v731, %v745
    %v754 = vcombine.high %v731, %v745
    %v755 = vcombine.low %v738, %v752
    %v756 = vcombine.high %v738, %v752
    %v757 = vcombine.low %v82, %v84
    %v758 = vcombine.high %v82, %v84
    %v759 = vcombine.low %v86, %v88
    %v760 = vcombine.high %v86, %v88
    %v762 = vunpack.c.l.s4 1983009808
    %v763 = vunpack.c.0.s8 %v762
    %v764 = vlaneseq
    %v765 = vshrl.u32 %v764, 7
    %v766 = vsub.s32 %v763, %v765
    %v767 = vrot.slane %v757, %v766
    %v769 = vunpack.c.l.s4 1983009808
    %v770 = vunpack.c.0.s8 %v769
    %v771 = vlaneseq
    %v772 = vshrl.u32 %v771, 7
    %v773 = vsub.s32 %v770, %v772
    %v774 = vrot.slane %v758, %v773
    %v776 = vunpack.c.l.s4 1983009808
    %v777 = vunpack.c.0.s8 %v776
    %v778 = vlaneseq
    %v779 = vshrl.u32 %v778, 7
    %v780 = vsub.s32 %v777, %v779
    %v781 = vrot.slane %v759, %v780
    %v783 = vunpack.c.l.s4 1983009808
    %v784 = vunpack.c.0.s8 %v783
    %v785 = vlaneseq
    %v786 = vshrl.u32 %v785, 7
    %v787 = vsub.s32 %v784, %v786
    %v788 = vrot.slane %v760, %v787
    %v789 = vcombine.low %v767, %v781
    %v790 = vcombine.high %v767, %v781
    %v791 = vcombine.low %v774, %v788
    %v792 = vcombine.high %v774, %v788
    %v793 = vcombine.low %v89, %v91
    %v794 = vcombine.high %v89, %v91
    %v795 = vcombine.low %v93, %v95
    %v796 = vcombine.high %v93, %v95
    %v798 = vunpack.c.l.s4 1983009808
    %v799 = vunpack.c.0.s8 %v798
    %v800 = vlaneseq
    %v801 = vshrl.u32 %v800, 7
    %v802 = vsub.s32 %v799, %v801
    %v803 = vrot.slane %v793, %v802
    %v805 = vunpack.c.l.s4 1983009808
    %v806 = vunpack.c.0.s8 %v805
    %v807 = vlaneseq
    %v808 = vshrl.u32 %v807, 7
    %v809 = vsub.s32 %v806, %v808
    %v810 = vrot.slane %v794, %v809
    %v812 = vunpack.c.l.s4 1983009808
    %v813 = vunpack.c.0.s8 %v812
    %v814 = vlaneseq
    %v815 = vshrl.u32 %v814, 7
    %v816 = vsub.s32 %v813, %v815
    %v817 = vrot.slane %v795, %v816
    %v819 = vunpack.c.l.s4 1983009808
    %v820 = vunpack.c.0.s8 %v819
    %v821 = vlaneseq
    %v822 = vshrl.u32 %v821, 7
    %v823 = vsub.s32 %v820, %v822
    %v824 = vrot.slane %v796, %v823
    %v825 = vcombine.low %v803, %v817
    %v826 = vcombine.high %v803, %v817
    %v827 = vcombine.low %v810, %v824
    %v828 = vcombine.high %v810, %v824
    %v829 = vcombine.low %v90, %v92
    %v830 = vcombine.high %v90, %v92
    %v831 = vcombine.low %v94, %v96
    %v832 = vcombine.high %v94, %v96
    %v834 = vunpack.c.l.s4 1983009808
    %v835 = vunpack.c.0.s8 %v834
    %v836 = vlaneseq
    %v837 = vshrl.u32 %v836, 7
    %v838 = vsub.s32 %v835, %v837
    %v839 = vrot.slane %v829, %v838
    %v841 = vunpack.c.l.s4 1983009808
    %v842 = vunpack.c.0.s8 %v841
    %v843 = vlaneseq
    %v844 = vshrl.u32 %v843, 7
    %v845 = vsub.s32 %v842, %v844
    %v846 = vrot.slane %v830, %v845
    %v848 = vunpack.c.l.s4 1983009808
    %v849 = vunpack.c.0.s8 %v848
    %v850 = vlaneseq
    %v851 = vshrl.u32 %v850, 7
    %v852 = vsub.s32 %v849, %v851
    %v853 = vrot.slane %v831, %v852
    %v855 = vunpack.c.l.s4 1983009808
    %v856 = vunpack.c.0.s8 %v855
    %v857 = vlaneseq
    %v858 = vshrl.u32 %v857, 7
    %v859 = vsub.s32 %v856, %v858
    %v860 = vrot.slane %v832, %v859
    %v861 = vcombine.low %v839, %v853
    %v862 = vcombine.high %v839, %v853
    %v863 = vcombine.low %v846, %v860
    %v864 = vcombine.high %v846, %v860
    %v865 = vcombine.low %v97, %v99
    %v866 = vcombine.high %v97, %v99
    %v867 = vcombine.low %v101, %v103
    %v868 = vcombine.high %v101, %v103
    %v870 = vunpack.c.l.s4 1983009808
    %v871 = vunpack.c.0.s8 %v870
    %v872 = vlaneseq
    %v873 = vshrl.u32 %v872, 7
    %v874 = vsub.s32 %v871, %v873
    %v875 = vrot.slane %v865, %v874
    %v877 = vunpack.c.l.s4 1983009808
    %v878 = vunpack.c.0.s8 %v877
    %v879 = vlaneseq
    %v880 = vshrl.u32 %v879, 7
    %v881 = vsub.s32 %v878, %v880
    %v882 = vrot.slane %v866, %v881
    %v884 = vunpack.c.l.s4 1983009808
    %v885 = vunpack.c.0.s8 %v884
    %v886 = vlaneseq
    %v887 = vshrl.u32 %v886, 7
    %v888 = vsub.s32 %v885, %v887
    %v889 = vrot.slane %v867, %v888
    %v891 = vunpack.c.l.s4 1983009808
    %v892 = vunpack.c.0.s8 %v891
    %v893 = vlaneseq
    %v894 = vshrl.u32 %v893, 7
    %v895 = vsub.s32 %v892, %v894
    %v896 = vrot.slane %v868, %v895
    %v897 = vcombine.low %v875, %v889
    %v898 = vcombine.high %v875, %v889
    %v899 = vcombine.low %v882, %v896
    %v900 = vcombine.high %v882, %v896
    %v901 = vcombine.low %v98, %v100
    %v902 = vcombine.high %v98, %v100
    %v903 = vcombine.low %v102, %v104
    %v904 = vcombine.high %v102, %v104
    %v906 = vunpack.c.l.s4 1983009808
    %v907 = vunpack.c.0.s8 %v906
    %v908 = vlaneseq
    %v909 = vshrl.u32 %v908, 7
    %v910 = vsub.s32 %v907, %v909
    %v911 = vrot.slane %v901, %v910
    %v913 = vunpack.c.l.s4 1983009808
    %v914 = vunpack.c.0.s8 %v913
    %v915 = vlaneseq
    %v916 = vshrl.u32 %v915, 7
    %v917 = vsub.s32 %v914, %v916
    %v918 = vrot.slane %v902, %v917
    %v920 = vunpack.c.l.s4 1983009808
    %v921 = vunpack.c.0.s8 %v920
    %v922 = vlaneseq
    %v923 = vshrl.u32 %v922, 7
    %v924 = vsub.s32 %v921, %v923
    %v925 = vrot.slane %v903, %v924
    %v927 = vunpack.c.l.s4 1983009808
    %v928 = vunpack.c.0.s8 %v927
    %v929 = vlaneseq
    %v930 = vshrl.u32 %v929, 7
    %v931 = vsub.s32 %v928, %v930
    %v932 = vrot.slane %v904, %v931
    %v933 = vcombine.low %v911, %v925
    %v934 = vcombine.high %v911, %v925
    %v935 = vcombine.low %v918, %v932
    %v936 = vcombine.high %v918, %v932
    %v937 = vcombine.low %v105, %v107
    %v938 = vcombine.high %v105, %v107
    %v939 = vcombine.low %v109, %v111
    %v940 = vcombine.high %v109, %v111
    %v942 = vunpack.c.l.s4 1983009808
    %v943 = vunpack.c.0.s8 %v942
    %v944 = vlaneseq
    %v945 = vshrl.u32 %v944, 7
    %v946 = vsub.s32 %v943, %v945
    %v947 = vrot.slane %v937, %v946
    %v949 = vunpack.c.l.s4 1983009808
    %v950 = vunpack.c.0.s8 %v949
    %v951 = vlaneseq
    %v952 = vshrl.u32 %v951, 7
    %v953 = vsub.s32 %v950, %v952
    %v954 = vrot.slane %v938, %v953
    %v956 = vunpack.c.l.s4 1983009808
    %v957 = vunpack.c.0.s8 %v956
    %v958 = vlaneseq
    %v959 = vshrl.u32 %v958, 7
    %v960 = vsub.s32 %v957, %v959
    %v961 = vrot.slane %v939, %v960
    %v963 = vunpack.c.l.s4 1983009808
    %v964 = vunpack.c.0.s8 %v963
    %v965 = vlaneseq
    %v966 = vshrl.u32 %v965, 7
    %v967 = vsub.s32 %v964, %v966
    %v968 = vrot.slane %v940, %v967
    %v969 = vcombine.low %v947, %v961
    %v970 = vcombine.high %v947, %v961
    %v971 = vcombine.low %v954, %v968
    %v972 = vcombine.high %v954, %v968
    %v973 = vcombine.low %v106, %v108
    %v974 = vcombine.high %v106, %v108
    %v975 = vcombine.low %v110, %v112
    %v976 = vcombine.high %v110, %v112
    %v978 = vunpack.c.l.s4 1983009808
    %v979 = vunpack.c.0.s8 %v978
    %v980 = vlaneseq
    %v981 = vshrl.u32 %v980, 7
    %v982 = vsub.s32 %v979, %v981
    %v983 = vrot.slane %v973, %v982
    %v985 = vunpack.c.l.s4 1983009808
    %v986 = vunpack.c.0.s8 %v985
    %v987 = vlaneseq
    %v988 = vshrl.u32 %v987, 7
    %v989 = vsub.s32 %v986, %v988
    %v990 = vrot.slane %v974, %v989
    %v992 = vunpack.c.l.s4 1983009808
    %v993 = vunpack.c.0.s8 %v992
    %v994 = vlaneseq
    %v995 = vshrl.u32 %v994, 7
    %v996 = vsub.s32 %v993, %v995
    %v997 = vrot.slane %v975, %v996
    %v999 = vunpack.c.l.s4 1983009808
    %v1000 = vunpack.c.0.s8 %v999
    %v1001 = vlaneseq
    %v1002 = vshrl.u32 %v1001, 7
    %v1003 = vsub.s32 %v1000, %v1002
    %v1004 = vrot.slane %v976, %v1003
    %v1005 = vcombine.low %v983, %v997
    %v1006 = vcombine.high %v983, %v997
    %v1007 = vcombine.low %v990, %v1004
    %v1008 = vcombine.high %v990, %v1004
    %v1009 = vcombine.low %v113, %v115
    %v1010 = vcombine.high %v113, %v115
    %v1011 = vcombine.low %v117, %v119
    %v1012 = vcombine.high %v117, %v119
    %v1014 = vunpack.c.l.s4 1983009808
    %v1015 = vunpack.c.0.s8 %v1014
    %v1016 = vlaneseq
    %v1017 = vshrl.u32 %v1016, 7
    %v1018 = vsub.s32 %v1015, %v1017
    %v1019 = vrot.slane %v1009, %v1018
    %v1021 = vunpack.c.l.s4 1983009808
    %v1022 = vunpack.c.0.s8 %v1021
    %v1023 = vlaneseq
    %v1024 = vshrl.u32 %v1023, 7
    %v1025 = vsub.s32 %v1022, %v1024
    %v1026 = vrot.slane %v1010, %v1025
    %v1028 = vunpack.c.l.s4 1983009808
    %v1029 = vunpack.c.0.s8 %v1028
    %v1030 = vlaneseq
    %v1031 = vshrl.u32 %v1030, 7
    %v1032 = vsub.s32 %v1029, %v1031
    %v1033 = vrot.slane %v1011, %v1032
    %v1035 = vunpack.c.l.s4 1983009808
    %v1036 = vunpack.c.0.s8 %v1035
    %v1037 = vlaneseq
    %v1038 = vshrl.u32 %v1037, 7
    %v1039 = vsub.s32 %v1036, %v1038
    %v1040 = vrot.slane %v1012, %v1039
    %v1041 = vcombine.low %v1019, %v1033
    %v1042 = vcombine.high %v1019, %v1033
    %v1043 = vcombine.low %v1026, %v1040
    %v1044 = vcombine.high %v1026, %v1040
    %v1045 = vcombine.low %v114, %v116
    %v1046 = vcombine.high %v114, %v116
    %v1047 = vcombine.low %v118, %v120
    %v1048 = vcombine.high %v118, %v120
    %v1050 = vunpack.c.l.s4 1983009808
    %v1051 = vunpack.c.0.s8 %v1050
    %v1052 = vlaneseq
    %v1053 = vshrl.u32 %v1052, 7
    %v1054 = vsub.s32 %v1051, %v1053
    %v1055 = vrot.slane %v1045, %v1054
    %v1057 = vunpack.c.l.s4 1983009808
    %v1058 = vunpack.c.0.s8 %v1057
    %v1059 = vlaneseq
    %v1060 = vshrl.u32 %v1059, 7
    %v1061 = vsub.s32 %v1058, %v1060
    %v1062 = vrot.slane %v1046, %v1061
    %v1064 = vunpack.c.l.s4 1983009808
    %v1065 = vunpack.c.0.s8 %v1064
    %v1066 = vlaneseq
    %v1067 = vshrl.u32 %v1066, 7
    %v1068 = vsub.s32 %v1065, %v1067
    %v1069 = vrot.slane %v1047, %v1068
    %v1071 = vunpack.c.l.s4 1983009808
    %v1072 = vunpack.c.0.s8 %v1071
    %v1073 = vlaneseq
    %v1074 = vshrl.u32 %v1073, 7
    %v1075 = vsub.s32 %v1072, %v1074
    %v1076 = vrot.slane %v1048, %v1075
    %v1077 = vcombine.low %v1055, %v1069
    %v1078 = vcombine.high %v1055, %v1069
    %v1079 = vcombine.low %v1062, %v1076
    %v1080 = vcombine.high %v1062, %v1076
    %v1081 = vcombine.low %v121, %v123
    %v1082 = vcombine.high %v121, %v123
    %v1083 = vcombine.low %v125, %v127
    %v1084 = vcombine.high %v125, %v127
    %v1086 = vunpack.c.l.s4 1983009808
    %v1087 = vunpack.c.0.s8 %v1086
    %v1088 = vlaneseq
    %v1089 = vshrl.u32 %v1088, 7
    %v1090 = vsub.s32 %v1087, %v1089
    %v1091 = vrot.slane %v1081, %v1090
    %v1093 = vunpack.c.l.s4 1983009808
    %v1094 = vunpack.c.0.s8 %v1093
    %v1095 = vlaneseq
    %v1096 = vshrl.u32 %v1095, 7
    %v1097 = vsub.s32 %v1094, %v1096
    %v1098 = vrot.slane %v1082, %v1097
    %v1100 = vunpack.c.l.s4 1983009808
    %v1101 = vunpack.c.0.s8 %v1100
    %v1102 = vlaneseq
    %v1103 = vshrl.u32 %v1102, 7
    %v1104 = vsub.s32 %v1101, %v1103
    %v1105 = vrot.slane %v1083, %v1104
    %v1107 = vunpack.c.l.s4 1983009808
    %v1108 = vunpack.c.0.s8 %v1107
    %v1109 = vlaneseq
    %v1110 = vshrl.u32 %v1109, 7
    %v1111 = vsub.s32 %v1108, %v1110
    %v1112 = vrot.slane %v1084, %v1111
    %v1113 = vcombine.low %v1091, %v1105
    %v1114 = vcombine.high %v1091, %v1105
    %v1115 = vcombine.low %v1098, %v1112
    %v1116 = vcombine.high %v1098, %v1112
    %v1117 = vcombine.low %v122, %v124
    %v1118 = vcombine.high %v122, %v124
    %v1119 = vcombine.low %v126, %v128
    %v1120 = vcombine.high %v126, %v128
    %v1122 = vunpack.c.l.s4 1983009808
    %v1123 = vunpack.c.0.s8 %v1122
    %v1124 = vlaneseq
    %v1125 = vshrl.u32 %v1124, 7
    %v1126 = vsub.s32 %v1123, %v1125
    %v1127 = vrot.slane %v1117, %v1126
    %v1129 = vunpack.c.l.s4 1983009808
    %v1130 = vunpack.c.0.s8 %v1129
    %v1131 = vlaneseq
    %v1132 = vshrl.u32 %v1131, 7
    %v1133 = vsub.s32 %v1130, %v1132
    %v1134 = vrot.slane %v1118, %v1133
    %v1136 = vunpack.c.l.s4 1983009808
    %v1137 = vunpack.c.0.s8 %v1136
    %v1138 = vlaneseq
    %v1139 = vshrl.u32 %v1138, 7
    %v1140 = vsub.s32 %v1137, %v1139
    %v1141 = vrot.slane %v1119, %v1140
    %v1143 = vunpack.c.l.s4 1983009808
    %v1144 = vunpack.c.0.s8 %v1143
    %v1145 = vlaneseq
    %v1146 = vshrl.u32 %v1145, 7
    %v1147 = vsub.s32 %v1144, %v1146
    %v1148 = vrot.slane %v1120, %v1147
    %v1149 = vcombine.low %v1127, %v1141
    %v1150 = vcombine.high %v1127, %v1141
    %v1151 = vcombine.low %v1134, %v1148
    %v1152 = vcombine.high %v1134, %v1148
    %v1153 = vcombine.low %v129, %v131
    %v1154 = vcombine.high %v129, %v131
    %v1155 = vcombine.low %v133, %v135
    %v1156 = vcombine.high %v133, %v135
    %v1158 = vunpack.c.l.s4 1983009808
    %v1159 = vunpack.c.0.s8 %v1158
    %v1160 = vlaneseq
    %v1161 = vshrl.u32 %v1160, 7
    %v1162 = vsub.s32 %v1159, %v1161
    %v1163 = vrot.slane %v1153, %v1162
    %v1165 = vunpack.c.l.s4 1983009808
    %v1166 = vunpack.c.0.s8 %v1165
    %v1167 = vlaneseq
    %v1168 = vshrl.u32 %v1167, 7
    %v1169 = vsub.s32 %v1166, %v1168
    %v1170 = vrot.slane %v1154, %v1169
    %v1172 = vunpack.c.l.s4 1983009808
    %v1173 = vunpack.c.0.s8 %v1172
    %v1174 = vlaneseq
    %v1175 = vshrl.u32 %v1174, 7
    %v1176 = vsub.s32 %v1173, %v1175
    %v1177 = vrot.slane %v1155, %v1176
    %v1179 = vunpack.c.l.s4 1983009808
    %v1180 = vunpack.c.0.s8 %v1179
    %v1181 = vlaneseq
    %v1182 = vshrl.u32 %v1181, 7
    %v1183 = vsub.s32 %v1180, %v1182
    %v1184 = vrot.slane %v1156, %v1183
    %v1185 = vcombine.low %v1163, %v1177
    %v1186 = vcombine.high %v1163, %v1177
    %v1187 = vcombine.low %v1170, %v1184
    %v1188 = vcombine.high %v1170, %v1184
    %v1189 = vcombine.low %v130, %v132
    %v1190 = vcombine.high %v130, %v132
    %v1191 = vcombine.low %v134, %v136
    %v1192 = vcombine.high %v134, %v136
    %v1194 = vunpack.c.l.s4 1983009808
    %v1195 = vunpack.c.0.s8 %v1194
    %v1196 = vlaneseq
    %v1197 = vshrl.u32 %v1196, 7
    %v1198 = vsub.s32 %v1195, %v1197
    %v1199 = vrot.slane %v1189, %v1198
    %v1201 = vunpack.c.l.s4 1983009808
    %v1202 = vunpack.c.0.s8 %v1201
    %v1203 = vlaneseq
    %v1204 = vshrl.u32 %v1203, 7
    %v1205 = vsub.s32 %v1202, %v1204
    %v1206 = vrot.slane %v1190, %v1205
    %v1208 = vunpack.c.l.s4 1983009808
    %v1209 = vunpack.c.0.s8 %v1208
    %v1210 = vlaneseq
    %v1211 = vshrl.u32 %v1210, 7
    %v1212 = vsub.s32 %v1209, %v1211
    %v1213 = vrot.slane %v1191, %v1212
    %v1215 = vunpack.c.l.s4 1983009808
    %v1216 = vunpack.c.0.s8 %v1215
    %v1217 = vlaneseq
    %v1218 = vshrl.u32 %v1217, 7
    %v1219 = vsub.s32 %v1216, %v1218
    %v1220 = vrot.slane %v1192, %v1219
    %v1221 = vcombine.low %v1199, %v1213
    %v1222 = vcombine.high %v1199, %v1213
    %v1223 = vcombine.low %v1206, %v1220
    %v1224 = vcombine.high %v1206, %v1220
    %v1225 = vcombine.low %v137, %v139
    %v1226 = vcombine.high %v137, %v139
    %v1227 = vcombine.low %v141, %v143
    %v1228 = vcombine.high %v141, %v143
    %v1230 = vunpack.c.l.s4 1983009808
    %v1231 = vunpack.c.0.s8 %v1230
    %v1232 = vlaneseq
    %v1233 = vshrl.u32 %v1232, 7
    %v1234 = vsub.s32 %v1231, %v1233
    %v1235 = vrot.slane %v1225, %v1234
    %v1237 = vunpack.c.l.s4 1983009808
    %v1238 = vunpack.c.0.s8 %v1237
    %v1239 = vlaneseq
    %v1240 = vshrl.u32 %v1239, 7
    %v1241 = vsub.s32 %v1238, %v1240
    %v1242 = vrot.slane %v1226, %v1241
    %v1244 = vunpack.c.l.s4 1983009808
    %v1245 = vunpack.c.0.s8 %v1244
    %v1246 = vlaneseq
    %v1247 = vshrl.u32 %v1246, 7
    %v1248 = vsub.s32 %v1245, %v1247
    %v1249 = vrot.slane %v1227, %v1248
    %v1251 = vunpack.c.l.s4 1983009808
    %v1252 = vunpack.c.0.s8 %v1251
    %v1253 = vlaneseq
    %v1254 = vshrl.u32 %v1253, 7
    %v1255 = vsub.s32 %v1252, %v1254
    %v1256 = vrot.slane %v1228, %v1255
    %v1257 = vcombine.low %v1235, %v1249
    %v1258 = vcombine.high %v1235, %v1249
    %v1259 = vcombine.low %v1242, %v1256
    %v1260 = vcombine.high %v1242, %v1256
    %v1261 = vcombine.low %v138, %v140
    %v1262 = vcombine.high %v138, %v140
    %v1263 = vcombine.low %v142, %v144
    %v1264 = vcombine.high %v142, %v144
    %v1266 = vunpack.c.l.s4 1983009808
    %v1267 = vunpack.c.0.s8 %v1266
    %v1268 = vlaneseq
    %v1269 = vshrl.u32 %v1268, 7
    %v1270 = vsub.s32 %v1267, %v1269
    %v1271 = vrot.slane %v1261, %v1270
    %v1273 = vunpack.c.l.s4 1983009808
    %v1274 = vunpack.c.0.s8 %v1273
    %v1275 = vlaneseq
    %v1276 = vshrl.u32 %v1275, 7
    %v1277 = vsub.s32 %v1274, %v1276
    %v1278 = vrot.slane %v1262, %v1277
    %v1280 = vunpack.c.l.s4 1983009808
    %v1281 = vunpack.c.0.s8 %v1280
    %v1282 = vlaneseq
    %v1283 = vshrl.u32 %v1282, 7
    %v1284 = vsub.s32 %v1281, %v1283
    %v1285 = vrot.slane %v1263, %v1284
    %v1287 = vunpack.c.l.s4 1983009808
    %v1288 = vunpack.c.0.s8 %v1287
    %v1289 = vlaneseq
    %v1290 = vshrl.u32 %v1289, 7
    %v1291 = vsub.s32 %v1288, %v1290
    %v1292 = vrot.slane %v1264, %v1291
    %v1293 = vcombine.low %v1271, %v1285
    %v1294 = vcombine.high %v1271, %v1285
    %v1295 = vcombine.low %v1278, %v1292
    %v1296 = vcombine.high %v1278, %v1292
    %v1297 = vcombine.low %v145, %v147
    %v1298 = vcombine.high %v145, %v147
    %v1299 = vcombine.low %v149, %v151
    %v1300 = vcombine.high %v149, %v151
    %v1302 = vunpack.c.l.s4 1983009808
    %v1303 = vunpack.c.0.s8 %v1302
    %v1304 = vlaneseq
    %v1305 = vshrl.u32 %v1304, 7
    %v1306 = vsub.s32 %v1303, %v1305
    %v1307 = vrot.slane %v1297, %v1306
    %v1309 = vunpack.c.l.s4 1983009808
    %v1310 = vunpack.c.0.s8 %v1309
    %v1311 = vlaneseq
    %v1312 = vshrl.u32 %v1311, 7
    %v1313 = vsub.s32 %v1310, %v1312
    %v1314 = vrot.slane %v1298, %v1313
    %v1316 = vunpack.c.l.s4 1983009808
    %v1317 = vunpack.c.0.s8 %v1316
    %v1318 = vlaneseq
    %v1319 = vshrl.u32 %v1318, 7
    %v1320 = vsub.s32 %v1317, %v1319
    %v1321 = vrot.slane %v1299, %v1320
    %v1323 = vunpack.c.l.s4 1983009808
    %v1324 = vunpack.c.0.s8 %v1323
    %v1325 = vlaneseq
    %v1326 = vshrl.u32 %v1325, 7
    %v1327 = vsub.s32 %v1324, %v1326
    %v1328 = vrot.slane %v1300, %v1327
    %v1329 = vcombine.low %v1307, %v1321
    %v1330 = vcombine.high %v1307, %v1321
    %v1331 = vcombine.low %v1314, %v1328
    %v1332 = vcombine.high %v1314, %v1328
    %v1333 = vcombine.low %v146, %v148
    %v1334 = vcombine.high %v146, %v148
    %v1335 = vcombine.low %v150, %v152
    %v1336 = vcombine.high %v150, %v152
    %v1338 = vunpack.c.l.s4 1983009808
    %v1339 = vunpack.c.0.s8 %v1338
    %v1340 = vlaneseq
    %v1341 = vshrl.u32 %v1340, 7
    %v1342 = vsub.s32 %v1339, %v1341
    %v1343 = vrot.slane %v1333, %v1342
    %v1345 = vunpack.c.l.s4 1983009808
    %v1346 = vunpack.c.0.s8 %v1345
    %v1347 = vlaneseq
    %v1348 = vshrl.u32 %v1347, 7
    %v1349 = vsub.s32 %v1346, %v1348
    %v1350 = vrot.slane %v1334, %v1349
    %v1352 = vunpack.c.l.s4 1983009808
    %v1353 = vunpack.c.0.s8 %v1352
    %v1354 = vlaneseq
    %v1355 = vshrl.u32 %v1354, 7
    %v1356 = vsub.s32 %v1353, %v1355
    %v1357 = vrot.slane %v1335, %v1356
    %v1359 = vunpack.c.l.s4 1983009808
    %v1360 = vunpack.c.0.s8 %v1359
    %v1361 = vlaneseq
    %v1362 = vshrl.u32 %v1361, 7
    %v1363 = vsub.s32 %v1360, %v1362
    %v1364 = vrot.slane %v1336, %v1363
    %v1365 = vcombine.low %v1343, %v1357
    %v1366 = vcombine.high %v1343, %v1357
    %v1367 = vcombine.low %v1350, %v1364
    %v1368 = vcombine.high %v1350, %v1364
    %v1369 = vcombine.low %v153, %v155
    %v1370 = vcombine.high %v153, %v155
    %v1371 = vcombine.low %v157, %v159
    %v1372 = vcombine.high %v157, %v159
    %v1374 = vunpack.c.l.s4 1983009808
    %v1375 = vunpack.c.0.s8 %v1374
    %v1376 = vlaneseq
    %v1377 = vshrl.u32 %v1376, 7
    %v1378 = vsub.s32 %v1375, %v1377
    %v1379 = vrot.slane %v1369, %v1378
    %v1381 = vunpack.c.l.s4 1983009808
    %v1382 = vunpack.c.0.s8 %v1381
    %v1383 = vlaneseq
    %v1384 = vshrl.u32 %v1383, 7
    %v1385 = vsub.s32 %v1382, %v1384
    %v1386 = vrot.slane %v1370, %v1385
    %v1388 = vunpack.c.l.s4 1983009808
    %v1389 = vunpack.c.0.s8 %v1388
    %v1390 = vlaneseq
    %v1391 = vshrl.u32 %v1390, 7
    %v1392 = vsub.s32 %v1389, %v1391
    %v1393 = vrot.slane %v1371, %v1392
    %v1395 = vunpack.c.l.s4 1983009808
    %v1396 = vunpack.c.0.s8 %v1395
    %v1397 = vlaneseq
    %v1398 = vshrl.u32 %v1397, 7
    %v1399 = vsub.s32 %v1396, %v1398
    %v1400 = vrot.slane %v1372, %v1399
    %v1401 = vcombine.low %v1379, %v1393
    %v1402 = vcombine.high %v1379, %v1393
    %v1403 = vcombine.low %v1386, %v1400
    %v1404 = vcombine.high %v1386, %v1400
    %v1405 = vcombine.low %v154, %v156
    %v1406 = vcombine.high %v154, %v156
    %v1407 = vcombine.low %v158, %v160
    %v1408 = vcombine.high %v158, %v160
    %v1410 = vunpack.c.l.s4 1983009808
    %v1411 = vunpack.c.0.s8 %v1410
    %v1412 = vlaneseq
    %v1413 = vshrl.u32 %v1412, 7
    %v1414 = vsub.s32 %v1411, %v1413
    %v1415 = vrot.slane %v1405, %v1414
    %v1417 = vunpack.c.l.s4 1983009808
    %v1418 = vunpack.c.0.s8 %v1417
    %v1419 = vlaneseq
    %v1420 = vshrl.u32 %v1419, 7
    %v1421 = vsub.s32 %v1418, %v1420
    %v1422 = vrot.slane %v1406, %v1421
    %v1424 = vunpack.c.l.s4 1983009808
    %v1425 = vunpack.c.0.s8 %v1424
    %v1426 = vlaneseq
    %v1427 = vshrl.u32 %v1426, 7
    %v1428 = vsub.s32 %v1425, %v1427
    %v1429 = vrot.slane %v1407, %v1428
    %v1431 = vunpack.c.l.s4 1983009808
    %v1432 = vunpack.c.0.s8 %v1431
    %v1433 = vlaneseq
    %v1434 = vshrl.u32 %v1433, 7
    %v1435 = vsub.s32 %v1432, %v1434
    %v1436 = vrot.slane %v1408, %v1435
    %v1437 = vcombine.low %v1415, %v1429
    %v1438 = vcombine.high %v1415, %v1429
    %v1439 = vcombine.low %v1422, %v1436
    %v1440 = vcombine.high %v1422, %v1436
    %v1441 = vcombine.low %v161, %v163
    %v1442 = vcombine.high %v161, %v163
    %v1443 = vcombine.low %v165, %v167
    %v1444 = vcombine.high %v165, %v167
    %v1446 = vunpack.c.l.s4 1983009808
    %v1447 = vunpack.c.0.s8 %v1446
    %v1448 = vlaneseq
    %v1449 = vshrl.u32 %v1448, 7
    %v1450 = vsub.s32 %v1447, %v1449
    %v1451 = vrot.slane %v1441, %v1450
    %v1453 = vunpack.c.l.s4 1983009808
    %v1454 = vunpack.c.0.s8 %v1453
    %v1455 = vlaneseq
    %v1456 = vshrl.u32 %v1455, 7
    %v1457 = vsub.s32 %v1454, %v1456
    %v1458 = vrot.slane %v1442, %v1457
    %v1460 = vunpack.c.l.s4 1983009808
    %v1461 = vunpack.c.0.s8 %v1460
    %v1462 = vlaneseq
    %v1463 = vshrl.u32 %v1462, 7
    %v1464 = vsub.s32 %v1461, %v1463
    %v1465 = vrot.slane %v1443, %v1464
    %v1467 = vunpack.c.l.s4 1983009808
    %v1468 = vunpack.c.0.s8 %v1467
    %v1469 = vlaneseq
    %v1470 = vshrl.u32 %v1469, 7
    %v1471 = vsub.s32 %v1468, %v1470
    %v1472 = vrot.slane %v1444, %v1471
    %v1473 = vcombine.low %v1451, %v1465
    %v1474 = vcombine.high %v1451, %v1465
    %v1475 = vcombine.low %v1458, %v1472
    %v1476 = vcombine.high %v1458, %v1472
    %v1477 = vcombine.low %v162, %v164
    %v1478 = vcombine.high %v162, %v164
    %v1479 = vcombine.low %v166, %v168
    %v1480 = vcombine.high %v166, %v168
    %v1482 = vunpack.c.l.s4 1983009808
    %v1483 = vunpack.c.0.s8 %v1482
    %v1484 = vlaneseq
    %v1485 = vshrl.u32 %v1484, 7
    %v1486 = vsub.s32 %v1483, %v1485
    %v1487 = vrot.slane %v1477, %v1486
    %v1489 = vunpack.c.l.s4 1983009808
    %v1490 = vunpack.c.0.s8 %v1489
    %v1491 = vlaneseq
    %v1492 = vshrl.u32 %v1491, 7
    %v1493 = vsub.s32 %v1490, %v1492
    %v1494 = vrot.slane %v1478, %v1493
    %v1496 = vunpack.c.l.s4 1983009808
    %v1497 = vunpack.c.0.s8 %v1496
    %v1498 = vlaneseq
    %v1499 = vshrl.u32 %v1498, 7
    %v1500 = vsub.s32 %v1497, %v1499
    %v1501 = vrot.slane %v1479, %v1500
    %v1503 = vunpack.c.l.s4 1983009808
    %v1504 = vunpack.c.0.s8 %v1503
    %v1505 = vlaneseq
    %v1506 = vshrl.u32 %v1505, 7
    %v1507 = vsub.s32 %v1504, %v1506
    %v1508 = vrot.slane %v1480, %v1507
    %v1509 = vcombine.low %v1487, %v1501
    %v1510 = vcombine.high %v1487, %v1501
    %v1511 = vcombine.low %v1494, %v1508
    %v1512 = vcombine.high %v1494, %v1508
    %v1641 = vpack.c.bf16 %v465, %v393
    %v1642 = vpack.c.bf16 %v466, %v394
    %v1643 = vpack.c.bf16 %v467, %v395
    %v1644 = vpack.c.bf16 %v468, %v396
    %v1645 = vpack.c.bf16 %v501, %v429
    %v1646 = vpack.c.bf16 %v502, %v430
    %v1647 = vpack.c.bf16 %v503, %v431
    %v1648 = vpack.c.bf16 %v504, %v432
    %v1649 = vpack.c.bf16 %v609, %v537
    %v1650 = vpack.c.bf16 %v610, %v538
    %v1651 = vpack.c.bf16 %v611, %v539
    %v1652 = vpack.c.bf16 %v612, %v540
    %v1653 = vpack.c.bf16 %v645, %v573
    %v1654 = vpack.c.bf16 %v646, %v574
    %v1655 = vpack.c.bf16 %v647, %v575
    %v1656 = vpack.c.bf16 %v648, %v576
    %v1657 = vpack.c.bf16 %v753, %v681
    %v1658 = vpack.c.bf16 %v754, %v682
    %v1659 = vpack.c.bf16 %v755, %v683
    %v1660 = vpack.c.bf16 %v756, %v684
    %v1661 = vpack.c.bf16 %v789, %v717
    %v1662 = vpack.c.bf16 %v790, %v718
    %v1663 = vpack.c.bf16 %v791, %v719
    %v1664 = vpack.c.bf16 %v792, %v720
    %v1665 = vpack.c.bf16 %v897, %v825
    %v1666 = vpack.c.bf16 %v898, %v826
    %v1667 = vpack.c.bf16 %v899, %v827
    %v1668 = vpack.c.bf16 %v900, %v828
    %v1669 = vpack.c.bf16 %v933, %v861
    %v1670 = vpack.c.bf16 %v934, %v862
    %v1671 = vpack.c.bf16 %v935, %v863
    %v1672 = vpack.c.bf16 %v936, %v864
    %v1673 = vpack.c.bf16 %v1041, %v969
    %v1674 = vpack.c.bf16 %v1042, %v970
    %v1675 = vpack.c.bf16 %v1043, %v971
    %v1676 = vpack.c.bf16 %v1044, %v972
    %v1677 = vpack.c.bf16 %v1077, %v1005
    %v1678 = vpack.c.bf16 %v1078, %v1006
    %v1679 = vpack.c.bf16 %v1079, %v1007
    %v1680 = vpack.c.bf16 %v1080, %v1008
    %v1681 = vpack.c.bf16 %v1185, %v1113
    %v1682 = vpack.c.bf16 %v1186, %v1114
    %v1683 = vpack.c.bf16 %v1187, %v1115
    %v1684 = vpack.c.bf16 %v1188, %v1116
    %v1685 = vpack.c.bf16 %v1221, %v1149
    %v1686 = vpack.c.bf16 %v1222, %v1150
    %v1687 = vpack.c.bf16 %v1223, %v1151
    %v1688 = vpack.c.bf16 %v1224, %v1152
    %v1689 = vpack.c.bf16 %v1329, %v1257
    %v1690 = vpack.c.bf16 %v1330, %v1258
    %v1691 = vpack.c.bf16 %v1331, %v1259
    %v1692 = vpack.c.bf16 %v1332, %v1260
    %v1693 = vpack.c.bf16 %v1365, %v1293
    %v1694 = vpack.c.bf16 %v1366, %v1294
    %v1695 = vpack.c.bf16 %v1367, %v1295
    %v1696 = vpack.c.bf16 %v1368, %v1296
    %v1697 = vpack.c.bf16 %v1473, %v1401
    %v1698 = vpack.c.bf16 %v1474, %v1402
    %v1699 = vpack.c.bf16 %v1475, %v1403
    %v1700 = vpack.c.bf16 %v1476, %v1404
    %v1701 = vpack.c.bf16 %v1509, %v1437
    %v1702 = vpack.c.bf16 %v1510, %v1438
    %v1703 = vpack.c.bf16 %v1511, %v1439
    %v1704 = vpack.c.bf16 %v1512, %v1440
    %v1705 = vld [vmem:[%s2] sm:$0xf]
    %v1706 = vld [vmem:[%s2 + $0x4] sm:$0xf]
    %v1707 = vld [vmem:[%s2 + $0x8] sm:$0xf]
    %v1708 = vld [vmem:[%s2 + $0xc] sm:$0xf]
    %v1709 = vld [vmem:[%s2 + $0x10] sm:$0xf]
    %v1710 = vld [vmem:[%s2 + $0x14] sm:$0xf]
    %v1711 = vld [vmem:[%s2 + $0x18] sm:$0xf]
    %v1712 = vld [vmem:[%s2 + $0x1c] sm:$0xf]
    %v1713 = vld [vmem:[%s2 + $0x20] sm:$0xf]
    %v1714 = vld [vmem:[%s2 + $0x24] sm:$0xf]
    %v1715 = vld [vmem:[%s2 + $0x28] sm:$0xf]
    %v1716 = vld [vmem:[%s2 + $0x2c] sm:$0xf]
    %v1717 = vld [vmem:[%s2 + $0x30] sm:$0xf]
    %v1718 = vld [vmem:[%s2 + $0x34] sm:$0xf]
    %v1719 = vld [vmem:[%s2 + $0x38] sm:$0xf]
    %v1720 = vld [vmem:[%s2 + $0x3c] sm:$0xf]
    %v1721 = vld [vmem:[%s2 + $0x40] sm:$0xf]
    %v1722 = vld [vmem:[%s2 + $0x44] sm:$0xf]
    %v1723 = vld [vmem:[%s2 + $0x48] sm:$0xf]
    %v1724 = vld [vmem:[%s2 + $0x4c] sm:$0xf]
    %v1725 = vld [vmem:[%s2 + $0x50] sm:$0xf]
    %v1726 = vld [vmem:[%s2 + $0x54] sm:$0xf]
    %v1727 = vld [vmem:[%s2 + $0x58] sm:$0xf]
    %v1728 = vld [vmem:[%s2 + $0x5c] sm:$0xf]
    %v1729 = vld [vmem:[%s2 + $0x60] sm:$0xf]
    %v1730 = vld [vmem:[%s2 + $0x64] sm:$0xf]
    %v1731 = vld [vmem:[%s2 + $0x68] sm:$0xf]
    %v1732 = vld [vmem:[%s2 + $0x6c] sm:$0xf]
    %v1733 = vld [vmem:[%s2 + $0x70] sm:$0xf]
    %v1734 = vld [vmem:[%s2 + $0x74] sm:$0xf]
    %v1735 = vld [vmem:[%s2 + $0x78] sm:$0xf]
    %v1736 = vld [vmem:[%s2 + $0x7c] sm:$0xf]
    %v1737 = vld [vmem:[%s2 + $0x80] sm:$0xf]
    %v1738 = vld [vmem:[%s2 + $0x84] sm:$0xf]
    %v1739 = vld [vmem:[%s2 + $0x88] sm:$0xf]
    %v1740 = vld [vmem:[%s2 + $0x8c] sm:$0xf]
    %v1741 = vld [vmem:[%s2 + $0x90] sm:$0xf]
    %v1742 = vld [vmem:[%s2 + $0x94] sm:$0xf]
    %v1743 = vld [vmem:[%s2 + $0x98] sm:$0xf]
    %v1744 = vld [vmem:[%s2 + $0x9c] sm:$0xf]
    %v1745 = vld [vmem:[%s2 + $0xa0] sm:$0xf]
    %v1746 = vld [vmem:[%s2 + $0xa4] sm:$0xf]
    %v1747 = vld [vmem:[%s2 + $0xa8] sm:$0xf]
    %v1748 = vld [vmem:[%s2 + $0xac] sm:$0xf]
    %v1749 = vld [vmem:[%s2 + $0xb0] sm:$0xf]
    %v1750 = vld [vmem:[%s2 + $0xb4] sm:$0xf]
    %v1751 = vld [vmem:[%s2 + $0xb8] sm:$0xf]
    %v1752 = vld [vmem:[%s2 + $0xbc] sm:$0xf]
    %v1753 = vld [vmem:[%s2 + $0xc0] sm:$0xf]
    %v1754 = vld [vmem:[%s2 + $0xc4] sm:$0xf]
    %v1755 = vld [vmem:[%s2 + $0xc8] sm:$0xf]
    %v1756 = vld [vmem:[%s2 + $0xcc] sm:$0xf]
    %v1757 = vld [vmem:[%s2 + $0xd0] sm:$0xf]
    %v1758 = vld [vmem:[%s2 + $0xd4] sm:$0xf]
    %v1759 = vld [vmem:[%s2 + $0xd8] sm:$0xf]
    %v1760 = vld [vmem:[%s2 + $0xdc] sm:$0xf]
    %v1761 = vld [vmem:[%s2 + $0xe0] sm:$0xf]
    %v1762 = vld [vmem:[%s2 + $0xe4] sm:$0xf]
    %v1763 = vld [vmem:[%s2 + $0xe8] sm:$0xf]
    %v1764 = vld [vmem:[%s2 + $0xec] sm:$0xf]
    %v1765 = vld [vmem:[%s2 + $0xf0] sm:$0xf]
    %v1766 = vld [vmem:[%s2 + $0xf4] sm:$0xf]
    %v1767 = vld [vmem:[%s2 + $0xf8] sm:$0xf]
    %v1768 = vld [vmem:[%s2 + $0xfc] sm:$0xf]
    %v1769 = vld [vmem:[%s2 + $0x100] sm:$0xf]
    %v1770 = vld [vmem:[%s2 + $0x104] sm:$0xf]
    %v1771 = vld [vmem:[%s2 + $0x108] sm:$0xf]
    %v1772 = vld [vmem:[%s2 + $0x10c] sm:$0xf]
    %v1773 = vld [vmem:[%s2 + $0x110] sm:$0xf]
    %v1774 = vld [vmem:[%s2 + $0x114] sm:$0xf]
    %v1775 = vld [vmem:[%s2 + $0x118] sm:$0xf]
    %v1776 = vld [vmem:[%s2 + $0x11c] sm:$0xf]
    %v1777 = vld [vmem:[%s2 + $0x120] sm:$0xf]
    %v1778 = vld [vmem:[%s2 + $0x124] sm:$0xf]
    %v1779 = vld [vmem:[%s2 + $0x128] sm:$0xf]
    %v1780 = vld [vmem:[%s2 + $0x12c] sm:$0xf]
    %v1781 = vld [vmem:[%s2 + $0x130] sm:$0xf]
    %v1782 = vld [vmem:[%s2 + $0x134] sm:$0xf]
    %v1783 = vld [vmem:[%s2 + $0x138] sm:$0xf]
    %v1784 = vld [vmem:[%s2 + $0x13c] sm:$0xf]
    %v1785 = vld [vmem:[%s2 + $0x140] sm:$0xf]
    %v1786 = vld [vmem:[%s2 + $0x144] sm:$0xf]
    %v1787 = vld [vmem:[%s2 + $0x148] sm:$0xf]
    %v1788 = vld [vmem:[%s2 + $0x14c] sm:$0xf]
    %v1789 = vld [vmem:[%s2 + $0x150] sm:$0xf]
    %v1790 = vld [vmem:[%s2 + $0x154] sm:$0xf]
    %v1791 = vld [vmem:[%s2 + $0x158] sm:$0xf]
    %v1792 = vld [vmem:[%s2 + $0x15c] sm:$0xf]
    %v1793 = vld [vmem:[%s2 + $0x160] sm:$0xf]
    %v1794 = vld [vmem:[%s2 + $0x164] sm:$0xf]
    %v1795 = vld [vmem:[%s2 + $0x168] sm:$0xf]
    %v1796 = vld [vmem:[%s2 + $0x16c] sm:$0xf]
    %v1797 = vld [vmem:[%s2 + $0x170] sm:$0xf]
    %v1798 = vld [vmem:[%s2 + $0x174] sm:$0xf]
    %v1799 = vld [vmem:[%s2 + $0x178] sm:$0xf]
    %v1800 = vld [vmem:[%s2 + $0x17c] sm:$0xf]
    %v1801 = vld [vmem:[%s2 + $0x180] sm:$0xf]
    %v1802 = vld [vmem:[%s2 + $0x184] sm:$0xf]
    %v1803 = vld [vmem:[%s2 + $0x188] sm:$0xf]
    %v1804 = vld [vmem:[%s2 + $0x18c] sm:$0xf]
    %v1805 = vld [vmem:[%s2 + $0x190] sm:$0xf]
    %v1806 = vld [vmem:[%s2 + $0x194] sm:$0xf]
    %v1807 = vld [vmem:[%s2 + $0x198] sm:$0xf]
    %v1808 = vld [vmem:[%s2 + $0x19c] sm:$0xf]
    %v1809 = vld [vmem:[%s2 + $0x1a0] sm:$0xf]
    %v1810 = vld [vmem:[%s2 + $0x1a4] sm:$0xf]
    %v1811 = vld [vmem:[%s2 + $0x1a8] sm:$0xf]
    %v1812 = vld [vmem:[%s2 + $0x1ac] sm:$0xf]
    %v1813 = vld [vmem:[%s2 + $0x1b0] sm:$0xf]
    %v1814 = vld [vmem:[%s2 + $0x1b4] sm:$0xf]
    %v1815 = vld [vmem:[%s2 + $0x1b8] sm:$0xf]
    %v1816 = vld [vmem:[%s2 + $0x1bc] sm:$0xf]
    %v1817 = vld [vmem:[%s2 + $0x1c0] sm:$0xf]
    %v1818 = vld [vmem:[%s2 + $0x1c4] sm:$0xf]
    %v1819 = vld [vmem:[%s2 + $0x1c8] sm:$0xf]
    %v1820 = vld [vmem:[%s2 + $0x1cc] sm:$0xf]
    %v1821 = vld [vmem:[%s2 + $0x1d0] sm:$0xf]
    %v1822 = vld [vmem:[%s2 + $0x1d4] sm:$0xf]
    %v1823 = vld [vmem:[%s2 + $0x1d8] sm:$0xf]
    %v1824 = vld [vmem:[%s2 + $0x1dc] sm:$0xf]
    %v1825 = vld [vmem:[%s2 + $0x1e0] sm:$0xf]
    %v1826 = vld [vmem:[%s2 + $0x1e4] sm:$0xf]
    %v1827 = vld [vmem:[%s2 + $0x1e8] sm:$0xf]
    %v1828 = vld [vmem:[%s2 + $0x1ec] sm:$0xf]
    %v1829 = vld [vmem:[%s2 + $0x1f0] sm:$0xf]
    %v1830 = vld [vmem:[%s2 + $0x1f4] sm:$0xf]
    %v1831 = vld [vmem:[%s2 + $0x1f8] sm:$0xf]
    %v1832 = vld [vmem:[%s2 + $0x1fc] sm:$0xf]
    %v1833 = vld [vmem:[%s3] sm:$0x1]
    %v1835 = vlaneseq
    %v1836 = vshrl.u32 %v1835, 7
    %v1837 = vsub.s32 0, %v1836
    %v1838 = vrot.slane %v1833, %v1837
    %v1968 = vunpack.c.l.b16 %v1705
    %v1969 = vunpack.c.l.b16 %v1706
    %v1970 = vunpack.c.l.b16 %v1707
    %v1971 = vunpack.c.l.b16 %v1708
    %v1972 = vunpack.c.l.b16 %v1709
    %v1973 = vunpack.c.l.b16 %v1710
    %v1974 = vunpack.c.l.b16 %v1711
    %v1975 = vunpack.c.l.b16 %v1712
    %v1976 = vunpack.c.l.b16 %v1713
    %v1977 = vunpack.c.l.b16 %v1714
    %v1978 = vunpack.c.l.b16 %v1715
    %v1979 = vunpack.c.l.b16 %v1716
    %v1980 = vunpack.c.l.b16 %v1717
    %v1981 = vunpack.c.l.b16 %v1718
    %v1982 = vunpack.c.l.b16 %v1719
    %v1983 = vunpack.c.l.b16 %v1720
    %v1984 = vunpack.c.l.b16 %v1721
    %v1985 = vunpack.c.l.b16 %v1722
    %v1986 = vunpack.c.l.b16 %v1723
    %v1987 = vunpack.c.l.b16 %v1724
    %v1988 = vunpack.c.l.b16 %v1725
    %v1989 = vunpack.c.l.b16 %v1726
    %v1990 = vunpack.c.l.b16 %v1727
    %v1991 = vunpack.c.l.b16 %v1728
    %v1992 = vunpack.c.l.b16 %v1729
    %v1993 = vunpack.c.l.b16 %v1730
    %v1994 = vunpack.c.l.b16 %v1731
    %v1995 = vunpack.c.l.b16 %v1732
    %v1996 = vunpack.c.l.b16 %v1733
    %v1997 = vunpack.c.l.b16 %v1734
    %v1998 = vunpack.c.l.b16 %v1735
    %v1999 = vunpack.c.l.b16 %v1736
    %v2000 = vunpack.c.l.b16 %v1737
    %v2001 = vunpack.c.l.b16 %v1738
    %v2002 = vunpack.c.l.b16 %v1739
    %v2003 = vunpack.c.l.b16 %v1740
    %v2004 = vunpack.c.l.b16 %v1741
    %v2005 = vunpack.c.l.b16 %v1742
    %v2006 = vunpack.c.l.b16 %v1743
    %v2007 = vunpack.c.l.b16 %v1744
    %v2008 = vunpack.c.l.b16 %v1745
    %v2009 = vunpack.c.l.b16 %v1746
    %v2010 = vunpack.c.l.b16 %v1747
    %v2011 = vunpack.c.l.b16 %v1748
    %v2012 = vunpack.c.l.b16 %v1749
    %v2013 = vunpack.c.l.b16 %v1750
    %v2014 = vunpack.c.l.b16 %v1751
    %v2015 = vunpack.c.l.b16 %v1752
    %v2016 = vunpack.c.l.b16 %v1753
    %v2017 = vunpack.c.l.b16 %v1754
    %v2018 = vunpack.c.l.b16 %v1755
    %v2019 = vunpack.c.l.b16 %v1756
    %v2020 = vunpack.c.l.b16 %v1757
    %v2021 = vunpack.c.l.b16 %v1758
    %v2022 = vunpack.c.l.b16 %v1759
    %v2023 = vunpack.c.l.b16 %v1760
    %v2024 = vunpack.c.l.b16 %v1761
    %v2025 = vunpack.c.l.b16 %v1762
    %v2026 = vunpack.c.l.b16 %v1763
    %v2027 = vunpack.c.l.b16 %v1764
    %v2028 = vunpack.c.l.b16 %v1765
    %v2029 = vunpack.c.l.b16 %v1766
    %v2030 = vunpack.c.l.b16 %v1767
    %v2031 = vunpack.c.l.b16 %v1768
    %v2032 = vunpack.c.l.b16 %v1769
    %v2033 = vunpack.c.l.b16 %v1770
    %v2034 = vunpack.c.l.b16 %v1771
    %v2035 = vunpack.c.l.b16 %v1772
    %v2036 = vunpack.c.l.b16 %v1773
    %v2037 = vunpack.c.l.b16 %v1774
    %v2038 = vunpack.c.l.b16 %v1775
    %v2039 = vunpack.c.l.b16 %v1776
    %v2040 = vunpack.c.l.b16 %v1777
    %v2041 = vunpack.c.l.b16 %v1778
    %v2042 = vunpack.c.l.b16 %v1779
    %v2043 = vunpack.c.l.b16 %v1780
    %v2044 = vunpack.c.l.b16 %v1781
    %v2045 = vunpack.c.l.b16 %v1782
    %v2046 = vunpack.c.l.b16 %v1783
    %v2047 = vunpack.c.l.b16 %v1784
    %v2048 = vunpack.c.l.b16 %v1785
    %v2049 = vunpack.c.l.b16 %v1786
    %v2050 = vunpack.c.l.b16 %v1787
    %v2051 = vunpack.c.l.b16 %v1788
    %v2052 = vunpack.c.l.b16 %v1789
    %v2053 = vunpack.c.l.b16 %v1790
    %v2054 = vunpack.c.l.b16 %v1791
    %v2055 = vunpack.c.l.b16 %v1792
    %v2056 = vunpack.c.l.b16 %v1793
    %v2057 = vunpack.c.l.b16 %v1794
    %v2058 = vunpack.c.l.b16 %v1795
    %v2059 = vunpack.c.l.b16 %v1796
    %v2060 = vunpack.c.l.b16 %v1797
    %v2061 = vunpack.c.l.b16 %v1798
    %v2062 = vunpack.c.l.b16 %v1799
    %v2063 = vunpack.c.l.b16 %v1800
    %v2064 = vunpack.c.l.b16 %v1801
    %v2065 = vunpack.c.l.b16 %v1802
    %v2066 = vunpack.c.l.b16 %v1803
    %v2067 = vunpack.c.l.b16 %v1804
    %v2068 = vunpack.c.l.b16 %v1805
    %v2069 = vunpack.c.l.b16 %v1806
    %v2070 = vunpack.c.l.b16 %v1807
    %v2071 = vunpack.c.l.b16 %v1808
    %v2072 = vunpack.c.l.b16 %v1809
    %v2073 = vunpack.c.l.b16 %v1810
    %v2074 = vunpack.c.l.b16 %v1811
    %v2075 = vunpack.c.l.b16 %v1812
    %v2076 = vunpack.c.l.b16 %v1813
    %v2077 = vunpack.c.l.b16 %v1814
    %v2078 = vunpack.c.l.b16 %v1815
    %v2079 = vunpack.c.l.b16 %v1816
    %v2080 = vunpack.c.l.b16 %v1817
    %v2081 = vunpack.c.l.b16 %v1818
    %v2082 = vunpack.c.l.b16 %v1819
    %v2083 = vunpack.c.l.b16 %v1820
    %v2084 = vunpack.c.l.b16 %v1821
    %v2085 = vunpack.c.l.b16 %v1822
    %v2086 = vunpack.c.l.b16 %v1823
    %v2087 = vunpack.c.l.b16 %v1824
    %v2088 = vunpack.c.l.b16 %v1825
    %v2089 = vunpack.c.l.b16 %v1826
    %v2090 = vunpack.c.l.b16 %v1827
    %v2091 = vunpack.c.l.b16 %v1828
    %v2092 = vunpack.c.l.b16 %v1829
    %v2093 = vunpack.c.l.b16 %v1830
    %v2094 = vunpack.c.l.b16 %v1831
    %v2095 = vunpack.c.l.b16 %v1832
    %v2096 = vpack.c.b16 %v1969, %v1968
    %v2097 = vpack.c.b16 %v1971, %v1970
    %v2098 = vpack.c.b16 %v1973, %v1972
    %v2099 = vpack.c.b16 %v1975, %v1974
    %v2100 = vpack.c.b16 %v1977, %v1976
    %v2101 = vpack.c.b16 %v1979, %v1978
    %v2102 = vpack.c.b16 %v1981, %v1980
    %v2103 = vpack.c.b16 %v1983, %v1982
    %v2104 = vpack.c.b16 %v1985, %v1984
    %v2105 = vpack.c.b16 %v1987, %v1986
    %v2106 = vpack.c.b16 %v1989, %v1988
    %v2107 = vpack.c.b16 %v1991, %v1990
    %v2108 = vpack.c.b16 %v1993, %v1992
    %v2109 = vpack.c.b16 %v1995, %v1994
    %v2110 = vpack.c.b16 %v1997, %v1996
    %v2111 = vpack.c.b16 %v1999, %v1998
    %v2112 = vpack.c.b16 %v2001, %v2000
    %v2113 = vpack.c.b16 %v2003, %v2002
    %v2114 = vpack.c.b16 %v2005, %v2004
    %v2115 = vpack.c.b16 %v2007, %v2006
    %v2116 = vpack.c.b16 %v2009, %v2008
    %v2117 = vpack.c.b16 %v2011, %v2010
    %v2118 = vpack.c.b16 %v2013, %v2012
    %v2119 = vpack.c.b16 %v2015, %v2014
    %v2120 = vpack.c.b16 %v2017, %v2016
    %v2121 = vpack.c.b16 %v2019, %v2018
    %v2122 = vpack.c.b16 %v2021, %v2020
    %v2123 = vpack.c.b16 %v2023, %v2022
    %v2124 = vpack.c.b16 %v2025, %v2024
    %v2125 = vpack.c.b16 %v2027, %v2026
    %v2126 = vpack.c.b16 %v2029, %v2028
    %v2127 = vpack.c.b16 %v2031, %v2030
    %v2128 = vpack.c.b16 %v2033, %v2032
    %v2129 = vpack.c.b16 %v2035, %v2034
    %v2130 = vpack.c.b16 %v2037, %v2036
    %v2131 = vpack.c.b16 %v2039, %v2038
    %v2132 = vpack.c.b16 %v2041, %v2040
    %v2133 = vpack.c.b16 %v2043, %v2042
    %v2134 = vpack.c.b16 %v2045, %v2044
    %v2135 = vpack.c.b16 %v2047, %v2046
    %v2136 = vpack.c.b16 %v2049, %v2048
    %v2137 = vpack.c.b16 %v2051, %v2050
    %v2138 = vpack.c.b16 %v2053, %v2052
    %v2139 = vpack.c.b16 %v2055, %v2054
    %v2140 = vpack.c.b16 %v2057, %v2056
    %v2141 = vpack.c.b16 %v2059, %v2058
    %v2142 = vpack.c.b16 %v2061, %v2060
    %v2143 = vpack.c.b16 %v2063, %v2062
    %v2144 = vpack.c.b16 %v2065, %v2064
    %v2145 = vpack.c.b16 %v2067, %v2066
    %v2146 = vpack.c.b16 %v2069, %v2068
    %v2147 = vpack.c.b16 %v2071, %v2070
    %v2148 = vpack.c.b16 %v2073, %v2072
    %v2149 = vpack.c.b16 %v2075, %v2074
    %v2150 = vpack.c.b16 %v2077, %v2076
    %v2151 = vpack.c.b16 %v2079, %v2078
    %v2152 = vpack.c.b16 %v2081, %v2080
    %v2153 = vpack.c.b16 %v2083, %v2082
    %v2154 = vpack.c.b16 %v2085, %v2084
    %v2155 = vpack.c.b16 %v2087, %v2086
    %v2156 = vpack.c.b16 %v2089, %v2088
    %v2157 = vpack.c.b16 %v2091, %v2090
    %v2158 = vpack.c.b16 %v2093, %v2092
    %v2159 = vpack.c.b16 %v2095, %v2094
    %2224 = vmatprep.subr.bf16.mxu0 0
    %2225 = vmatpush1.bf16.msra.mxu0 %v2103
    %2226 = vmatprep.subr.bf16.mxu0 0
    %2227 = vmatpush1.bf16.msra.mxu0 %v2102
    %2228 = vmatprep.subr.bf16.mxu0 0
    %2229 = vmatpush1.bf16.msra.mxu0 %v2101
    %2230 = vmatprep.subr.bf16.mxu0 0
    %2231 = vmatpush1.bf16.msra.mxu0 %v2100
    %2232 = vmatprep.subr.bf16.mxu0 0
    %2233 = vmatpush1.bf16.msra.mxu0 %v2099
    %2234 = vmatprep.subr.bf16.mxu0 0
    %2235 = vmatpush1.bf16.msra.mxu0 %v2098
    %2236 = vmatprep.subr.bf16.mxu0 0
    %2237 = vmatpush1.bf16.msra.mxu0 %v2097
    %2238 = vmatprep.subr.bf16.mxu0 0
    %2239 = vmatpush1.bf16.msra.mxu0 %v2096
    %2240 = vmatprep.subr.bf16.mxu0 0
    %2241 = vmatpush2.bf16.msra.mxu0 %v2111
    %2242 = vmatprep.subr.bf16.mxu0 0
    %2243 = vmatpush2.bf16.msra.mxu0 %v2110
    %2244 = vmatprep.subr.bf16.mxu0 0
    %2245 = vmatpush2.bf16.msra.mxu0 %v2109
    %2246 = vmatprep.subr.bf16.mxu0 0
    %2247 = vmatpush2.bf16.msra.mxu0 %v2108
    %2248 = vmatprep.subr.bf16.mxu0 0
    %2249 = vmatpush2.bf16.msra.mxu0 %v2107
    %2250 = vmatprep.subr.bf16.mxu0 0
    %2251 = vmatpush2.bf16.msra.mxu0 %v2106
    %2252 = vmatprep.subr.bf16.mxu0 0
    %2253 = vmatpush2.bf16.msra.mxu0 %v2105
    %2254 = vmatprep.subr.bf16.mxu0 0
    %2255 = vmatpush2.bf16.msra.mxu0 %v2104
    %2256 = vmatprep.mubr.bf16.mxu0 %v1642
    %2257 = vmatmul.mubr.bf16.gmra.mxu0 %v1641
    %v2258 = vpop.f32.mrf.mxu0
    %v2259 = vadd.f32 %v1838, %v2258
    %v2260 = vpop.f32.mrf.mxu0
    %v2261 = vpop.f32.mrf.mxu0
    %v2262 = vadd.f32 %v1838, %v2261
    %v2263 = vpop.f32.mrf.mxu0
    %2264 = vmatprep.mubr.bf16.mxu0 %v1650
    %2265 = vmatmul.mubr.bf16.gmra.mxu0 %v1649
    %v2266 = vpop.f32.mrf.mxu0
    %v2267 = vadd.f32 %v1838, %v2266
    %v2268 = vpop.f32.mrf.mxu0
    %v2269 = vpop.f32.mrf.mxu0
    %v2270 = vadd.f32 %v1838, %v2269
    %v2271 = vpop.f32.mrf.mxu0
    %2272 = vmatprep.mubr.bf16.mxu0 %v1658
    %2273 = vmatmul.mubr.bf16.gmra.mxu0 %v1657
    %v2274 = vpop.f32.mrf.mxu0
    %v2275 = vadd.f32 %v1838, %v2274
    %v2276 = vpop.f32.mrf.mxu0
    %v2277 = vpop.f32.mrf.mxu0
    %v2278 = vadd.f32 %v1838, %v2277
    %v2279 = vpop.f32.mrf.mxu0
    %2280 = vmatprep.mubr.bf16.mxu0 %v1666
    %2281 = vmatmul.mubr.bf16.gmra.mxu0 %v1665
    %v2282 = vpop.f32.mrf.mxu0
    %v2283 = vadd.f32 %v1838, %v2282
    %v2284 = vpop.f32.mrf.mxu0
    %v2285 = vpop.f32.mrf.mxu0
    %v2286 = vadd.f32 %v1838, %v2285
    %v2287 = vpop.f32.mrf.mxu0
    %2288 = vmatprep.mubr.bf16.mxu0 %v1674
    %2289 = vmatmul.mubr.bf16.gmra.mxu0 %v1673
    %v2290 = vpop.f32.mrf.mxu0
    %v2291 = vadd.f32 %v1838, %v2290
    %v2292 = vpop.f32.mrf.mxu0
    %v2293 = vpop.f32.mrf.mxu0
    %v2294 = vadd.f32 %v1838, %v2293
    %v2295 = vpop.f32.mrf.mxu0
    %2296 = vmatprep.mubr.bf16.mxu0 %v1682
    %2297 = vmatmul.mubr.bf16.gmra.mxu0 %v1681
    %v2298 = vpop.f32.mrf.mxu0
    %v2299 = vadd.f32 %v1838, %v2298
    %v2300 = vpop.f32.mrf.mxu0
    %v2301 = vpop.f32.mrf.mxu0
    %v2302 = vadd.f32 %v1838, %v2301
    %v2303 = vpop.f32.mrf.mxu0
    %2304 = vmatprep.mubr.bf16.mxu0 %v1690
    %2305 = vmatmul.mubr.bf16.gmra.mxu0 %v1689
    %v2306 = vpop.f32.mrf.mxu0
    %v2307 = vadd.f32 %v1838, %v2306
    %v2308 = vpop.f32.mrf.mxu0
    %v2309 = vpop.f32.mrf.mxu0
    %v2310 = vadd.f32 %v1838, %v2309
    %v2311 = vpop.f32.mrf.mxu0
    %2312 = vmatprep.mubr.bf16.mxu0 %v1698
    %2313 = vmatmul.mubr.bf16.gmra.mxu0 %v1697
    %v2314 = vpop.f32.mrf.mxu0
    %v2315 = vadd.f32 %v1838, %v2314
    %v2316 = vpop.f32.mrf.mxu0
    %v2317 = vpop.f32.mrf.mxu0
    %v2318 = vadd.f32 %v1838, %v2317
    %v2319 = vpop.f32.mrf.mxu0
    %2320 = vdwg.mxu0
    %2321 = vmatprep.subr.bf16.mxu0 0
    %2322 = vmatpush1.bf16.msra.mxu0 %v2119
    %2323 = vmatprep.subr.bf16.mxu0 0
    %2324 = vmatpush1.bf16.msra.mxu0 %v2118
    %2325 = vmatprep.subr.bf16.mxu0 0
    %2326 = vmatpush1.bf16.msra.mxu0 %v2117
    %2327 = vmatprep.subr.bf16.mxu0 0
    %2328 = vmatpush1.bf16.msra.mxu0 %v2116
    %2329 = vmatprep.subr.bf16.mxu0 0
    %2330 = vmatpush1.bf16.msra.mxu0 %v2115
    %2331 = vmatprep.subr.bf16.mxu0 0
    %2332 = vmatpush1.bf16.msra.mxu0 %v2114
    %2333 = vmatprep.subr.bf16.mxu0 0
    %2334 = vmatpush1.bf16.msra.mxu0 %v2113
    %2335 = vmatprep.subr.bf16.mxu0 0
    %2336 = vmatpush1.bf16.msra.mxu0 %v2112
    %2337 = vmatprep.subr.bf16.mxu0 0
    %2338 = vmatpush2.bf16.msra.mxu0 %v2127
    %2339 = vmatprep.subr.bf16.mxu0 0
    %2340 = vmatpush2.bf16.msra.mxu0 %v2126
    %2341 = vmatprep.subr.bf16.mxu0 0
    %2342 = vmatpush2.bf16.msra.mxu0 %v2125
    %2343 = vmatprep.subr.bf16.mxu0 0
    %2344 = vmatpush2.bf16.msra.mxu0 %v2124
    %2345 = vmatprep.subr.bf16.mxu0 0
    %2346 = vmatpush2.bf16.msra.mxu0 %v2123
    %2347 = vmatprep.subr.bf16.mxu0 0
    %2348 = vmatpush2.bf16.msra.mxu0 %v2122
    %2349 = vmatprep.subr.bf16.mxu0 0
    %2350 = vmatpush2.bf16.msra.mxu0 %v2121
    %2351 = vmatprep.subr.bf16.mxu0 0
    %2352 = vmatpush2.bf16.msra.mxu0 %v2120
    %2353 = vmatprep.mubr.bf16.mxu0 %v1644
    %2354 = vmatmul.mubr.bf16.gmra.mxu0 %v1643
    %v2355 = vpop.f32.mrf.mxu0
    %v2356 = vadd.f32 %v2259, %v2355
    %v2357 = vpop.f32.mrf.mxu0
    %v2358 = vpop.f32.mrf.mxu0
    %v2359 = vadd.f32 %v2262, %v2358
    %v2360 = vpop.f32.mrf.mxu0
    %2361 = vmatprep.mubr.bf16.mxu0 %v1652
    %2362 = vmatmul.mubr.bf16.gmra.mxu0 %v1651
    %v2363 = vpop.f32.mrf.mxu0
    %v2364 = vadd.f32 %v2267, %v2363
    %v2365 = vpop.f32.mrf.mxu0
    %v2366 = vpop.f32.mrf.mxu0
    %v2367 = vadd.f32 %v2270, %v2366
    %v2368 = vpop.f32.mrf.mxu0
    %2369 = vmatprep.mubr.bf16.mxu0 %v1660
    %2370 = vmatmul.mubr.bf16.gmra.mxu0 %v1659
    %v2371 = vpop.f32.mrf.mxu0
    %v2372 = vadd.f32 %v2275, %v2371
    %v2373 = vpop.f32.mrf.mxu0
    %v2374 = vpop.f32.mrf.mxu0
    %v2375 = vadd.f32 %v2278, %v2374
    %v2376 = vpop.f32.mrf.mxu0
    %2377 = vmatprep.mubr.bf16.mxu0 %v1668
    %2378 = vmatmul.mubr.bf16.gmra.mxu0 %v1667
    %v2379 = vpop.f32.mrf.mxu0
    %v2380 = vadd.f32 %v2283, %v2379
    %v2381 = vpop.f32.mrf.mxu0
    %v2382 = vpop.f32.mrf.mxu0
    %v2383 = vadd.f32 %v2286, %v2382
    %v2384 = vpop.f32.mrf.mxu0
    %2385 = vmatprep.mubr.bf16.mxu0 %v1676
    %2386 = vmatmul.mubr.bf16.gmra.mxu0 %v1675
    %v2387 = vpop.f32.mrf.mxu0
    %v2388 = vadd.f32 %v2291, %v2387
    %v2389 = vpop.f32.mrf.mxu0
    %v2390 = vpop.f32.mrf.mxu0
    %v2391 = vadd.f32 %v2294, %v2390
    %v2392 = vpop.f32.mrf.mxu0
    %2393 = vmatprep.mubr.bf16.mxu0 %v1684
    %2394 = vmatmul.mubr.bf16.gmra.mxu0 %v1683
    %v2395 = vpop.f32.mrf.mxu0
    %v2396 = vadd.f32 %v2299, %v2395
    %v2397 = vpop.f32.mrf.mxu0
    %v2398 = vpop.f32.mrf.mxu0
    %v2399 = vadd.f32 %v2302, %v2398
    %v2400 = vpop.f32.mrf.mxu0
    %2401 = vmatprep.mubr.bf16.mxu0 %v1692
    %2402 = vmatmul.mubr.bf16.gmra.mxu0 %v1691
    %v2403 = vpop.f32.mrf.mxu0
    %v2404 = vadd.f32 %v2307, %v2403
    %v2405 = vpop.f32.mrf.mxu0
    %v2406 = vpop.f32.mrf.mxu0
    %v2407 = vadd.f32 %v2310, %v2406
    %v2408 = vpop.f32.mrf.mxu0
    %2409 = vmatprep.mubr.bf16.mxu0 %v1700
    %2410 = vmatmul.mubr.bf16.gmra.mxu0 %v1699
    %v2411 = vpop.f32.mrf.mxu0
    %v2412 = vadd.f32 %v2315, %v2411
    %v2413 = vpop.f32.mrf.mxu0
    %v2414 = vpop.f32.mrf.mxu0
    %v2415 = vadd.f32 %v2318, %v2414
    %v2416 = vpop.f32.mrf.mxu0
    %2417 = vdwg.mxu0
    %2418 = vmatprep.subr.bf16.mxu0 0
    %2419 = vmatpush1.bf16.msra.mxu0 %v2135
    %2420 = vmatprep.subr.bf16.mxu0 0
    %2421 = vmatpush1.bf16.msra.mxu0 %v2134
    %2422 = vmatprep.subr.bf16.mxu0 0
    %2423 = vmatpush1.bf16.msra.mxu0 %v2133
    %2424 = vmatprep.subr.bf16.mxu0 0
    %2425 = vmatpush1.bf16.msra.mxu0 %v2132
    %2426 = vmatprep.subr.bf16.mxu0 0
    %2427 = vmatpush1.bf16.msra.mxu0 %v2131
    %2428 = vmatprep.subr.bf16.mxu0 0
    %2429 = vmatpush1.bf16.msra.mxu0 %v2130
    %2430 = vmatprep.subr.bf16.mxu0 0
    %2431 = vmatpush1.bf16.msra.mxu0 %v2129
    %2432 = vmatprep.subr.bf16.mxu0 0
    %2433 = vmatpush1.bf16.msra.mxu0 %v2128
    %2434 = vmatprep.subr.bf16.mxu0 0
    %2435 = vmatpush2.bf16.msra.mxu0 %v2143
    %2436 = vmatprep.subr.bf16.mxu0 0
    %2437 = vmatpush2.bf16.msra.mxu0 %v2142
    %2438 = vmatprep.subr.bf16.mxu0 0
    %2439 = vmatpush2.bf16.msra.mxu0 %v2141
    %2440 = vmatprep.subr.bf16.mxu0 0
    %2441 = vmatpush2.bf16.msra.mxu0 %v2140
    %2442 = vmatprep.subr.bf16.mxu0 0
    %2443 = vmatpush2.bf16.msra.mxu0 %v2139
    %2444 = vmatprep.subr.bf16.mxu0 0
    %2445 = vmatpush2.bf16.msra.mxu0 %v2138
    %2446 = vmatprep.subr.bf16.mxu0 0
    %2447 = vmatpush2.bf16.msra.mxu0 %v2137
    %2448 = vmatprep.subr.bf16.mxu0 0
    %2449 = vmatpush2.bf16.msra.mxu0 %v2136
    %2450 = vmatprep.mubr.bf16.mxu0 %v1646
    %2451 = vmatmul.mubr.bf16.gmra.mxu0 %v1645
    %v2452 = vpop.f32.mrf.mxu0
    %v2453 = vadd.f32 %v2356, %v2452
    %v2454 = vpop.f32.mrf.mxu0
    %v2455 = vpop.f32.mrf.mxu0
    %v2456 = vadd.f32 %v2359, %v2455
    %v2457 = vpop.f32.mrf.mxu0
    %2458 = vmatprep.mubr.bf16.mxu0 %v1654
    %2459 = vmatmul.mubr.bf16.gmra.mxu0 %v1653
    %v2460 = vpop.f32.mrf.mxu0
    %v2461 = vadd.f32 %v2364, %v2460
    %v2462 = vpop.f32.mrf.mxu0
    %v2463 = vpop.f32.mrf.mxu0
    %v2464 = vadd.f32 %v2367, %v2463
    %v2465 = vpop.f32.mrf.mxu0
    %2466 = vmatprep.mubr.bf16.mxu0 %v1662
    %2467 = vmatmul.mubr.bf16.gmra.mxu0 %v1661
    %v2468 = vpop.f32.mrf.mxu0
    %v2469 = vadd.f32 %v2372, %v2468
    %v2470 = vpop.f32.mrf.mxu0
    %v2471 = vpop.f32.mrf.mxu0
    %v2472 = vadd.f32 %v2375, %v2471
    %v2473 = vpop.f32.mrf.mxu0
    %2474 = vmatprep.mubr.bf16.mxu0 %v1670
    %2475 = vmatmul.mubr.bf16.gmra.mxu0 %v1669
    %v2476 = vpop.f32.mrf.mxu0
    %v2477 = vadd.f32 %v2380, %v2476
    %v2478 = vpop.f32.mrf.mxu0
    %v2479 = vpop.f32.mrf.mxu0
    %v2480 = vadd.f32 %v2383, %v2479
    %v2481 = vpop.f32.mrf.mxu0
    %2482 = vmatprep.mubr.bf16.mxu0 %v1678
    %2483 = vmatmul.mubr.bf16.gmra.mxu0 %v1677
    %v2484 = vpop.f32.mrf.mxu0
    %v2485 = vadd.f32 %v2388, %v2484
    %v2486 = vpop.f32.mrf.mxu0
    %v2487 = vpop.f32.mrf.mxu0
    %v2488 = vadd.f32 %v2391, %v2487
    %v2489 = vpop.f32.mrf.mxu0
    %2490 = vmatprep.mubr.bf16.mxu0 %v1686
    %2491 = vmatmul.mubr.bf16.gmra.mxu0 %v1685
    %v2492 = vpop.f32.mrf.mxu0
    %v2493 = vadd.f32 %v2396, %v2492
    %v2494 = vpop.f32.mrf.mxu0
    %v2495 = vpop.f32.mrf.mxu0
    %v2496 = vadd.f32 %v2399, %v2495
    %v2497 = vpop.f32.mrf.mxu0
    %2498 = vmatprep.mubr.bf16.mxu0 %v1694
    %2499 = vmatmul.mubr.bf16.gmra.mxu0 %v1693
    %v2500 = vpop.f32.mrf.mxu0
    %v2501 = vadd.f32 %v2404, %v2500
    %v2502 = vpop.f32.mrf.mxu0
    %v2503 = vpop.f32.mrf.mxu0
    %v2504 = vadd.f32 %v2407, %v2503
    %v2505 = vpop.f32.mrf.mxu0
    %2506 = vmatprep.mubr.bf16.mxu0 %v1702
    %2507 = vmatmul.mubr.bf16.gmra.mxu0 %v1701
    %v2508 = vpop.f32.mrf.mxu0
    %v2509 = vadd.f32 %v2412, %v2508
    %v2510 = vpop.f32.mrf.mxu0
    %v2511 = vpop.f32.mrf.mxu0
    %v2512 = vadd.f32 %v2415, %v2511
    %v2513 = vpop.f32.mrf.mxu0
    %2514 = vdwg.mxu0
    %2515 = vmatprep.subr.bf16.mxu0 0
    %2516 = vmatpush1.bf16.msra.mxu0 %v2151
    %2517 = vmatprep.subr.bf16.mxu0 0
    %2518 = vmatpush1.bf16.msra.mxu0 %v2150
    %2519 = vmatprep.subr.bf16.mxu0 0
    %2520 = vmatpush1.bf16.msra.mxu0 %v2149
    %2521 = vmatprep.subr.bf16.mxu0 0
    %2522 = vmatpush1.bf16.msra.mxu0 %v2148
    %2523 = vmatprep.subr.bf16.mxu0 0
    %2524 = vmatpush1.bf16.msra.mxu0 %v2147
    %2525 = vmatprep.subr.bf16.mxu0 0
    %2526 = vmatpush1.bf16.msra.mxu0 %v2146
    %2527 = vmatprep.subr.bf16.mxu0 0
    %2528 = vmatpush1.bf16.msra.mxu0 %v2145
    %2529 = vmatprep.subr.bf16.mxu0 0
    %2530 = vmatpush1.bf16.msra.mxu0 %v2144
    %2531 = vmatprep.subr.bf16.mxu0 0
    %2532 = vmatpush2.bf16.msra.mxu0 %v2159
    %2533 = vmatprep.subr.bf16.mxu0 0
    %2534 = vmatpush2.bf16.msra.mxu0 %v2158
    %2535 = vmatprep.subr.bf16.mxu0 0
    %2536 = vmatpush2.bf16.msra.mxu0 %v2157
    %2537 = vmatprep.subr.bf16.mxu0 0
    %2538 = vmatpush2.bf16.msra.mxu0 %v2156
    %2539 = vmatprep.subr.bf16.mxu0 0
    %2540 = vmatpush2.bf16.msra.mxu0 %v2155
    %2541 = vmatprep.subr.bf16.mxu0 0
    %2542 = vmatpush2.bf16.msra.mxu0 %v2154
    %2543 = vmatprep.subr.bf16.mxu0 0
    %2544 = vmatpush2.bf16.msra.mxu0 %v2153
    %2545 = vmatprep.subr.bf16.mxu0 0
    %2546 = vmatpush2.bf16.msra.mxu0 %v2152
    %2547 = vmatprep.mubr.bf16.mxu0 %v1648
    %2548 = vmatmul.mubr.bf16.gmra.mxu0 %v1647
    %v2549 = vpop.f32.mrf.mxu0
    %v2550 = vadd.f32 %v2453, %v2549
    %v2551 = vpop.f32.mrf.mxu0
    %v2552 = vpop.f32.mrf.mxu0
    %v2553 = vadd.f32 %v2456, %v2552
    %v2554 = vpop.f32.mrf.mxu0
    %2555 = vmatprep.mubr.bf16.mxu0 %v1656
    %2556 = vmatmul.mubr.bf16.gmra.mxu0 %v1655
    %v2557 = vpop.f32.mrf.mxu0
    %v2558 = vadd.f32 %v2461, %v2557
    %v2559 = vpop.f32.mrf.mxu0
    %v2560 = vpop.f32.mrf.mxu0
    %v2561 = vadd.f32 %v2464, %v2560
    %v2562 = vpop.f32.mrf.mxu0
    %2563 = vmatprep.mubr.bf16.mxu0 %v1664
    %2564 = vmatmul.mubr.bf16.gmra.mxu0 %v1663
    %v2565 = vpop.f32.mrf.mxu0
    %v2566 = vadd.f32 %v2469, %v2565
    %v2567 = vpop.f32.mrf.mxu0
    %v2568 = vpop.f32.mrf.mxu0
    %v2569 = vadd.f32 %v2472, %v2568
    %v2570 = vpop.f32.mrf.mxu0
    %2571 = vmatprep.mubr.bf16.mxu0 %v1672
    %2572 = vmatmul.mubr.bf16.gmra.mxu0 %v1671
    %v2573 = vpop.f32.mrf.mxu0
    %v2574 = vadd.f32 %v2477, %v2573
    %v2575 = vpop.f32.mrf.mxu0
    %v2576 = vpop.f32.mrf.mxu0
    %v2577 = vadd.f32 %v2480, %v2576
    %v2578 = vpop.f32.mrf.mxu0
    %2579 = vmatprep.mubr.bf16.mxu0 %v1680
    %2580 = vmatmul.mubr.bf16.gmra.mxu0 %v1679
    %v2581 = vpop.f32.mrf.mxu0
    %v2582 = vadd.f32 %v2485, %v2581
    %v2583 = vpop.f32.mrf.mxu0
    %v2584 = vpop.f32.mrf.mxu0
    %v2585 = vadd.f32 %v2488, %v2584
    %v2586 = vpop.f32.mrf.mxu0
    %2587 = vmatprep.mubr.bf16.mxu0 %v1688
    %2588 = vmatmul.mubr.bf16.gmra.mxu0 %v1687
    %v2589 = vpop.f32.mrf.mxu0
    %v2590 = vadd.f32 %v2493, %v2589
    %v2591 = vpop.f32.mrf.mxu0
    %v2592 = vpop.f32.mrf.mxu0
    %v2593 = vadd.f32 %v2496, %v2592
    %v2594 = vpop.f32.mrf.mxu0
    %2595 = vmatprep.mubr.bf16.mxu0 %v1696
    %2596 = vmatmul.mubr.bf16.gmra.mxu0 %v1695
    %v2597 = vpop.f32.mrf.mxu0
    %v2598 = vadd.f32 %v2501, %v2597
    %v2599 = vpop.f32.mrf.mxu0
    %v2600 = vpop.f32.mrf.mxu0
    %v2601 = vadd.f32 %v2504, %v2600
    %v2602 = vpop.f32.mrf.mxu0
    %2603 = vmatprep.mubr.bf16.mxu0 %v1704
    %2604 = vmatmul.mubr.bf16.gmra.mxu0 %v1703
    %v2605 = vpop.f32.mrf.mxu0
    %v2606 = vadd.f32 %v2509, %v2605
    %v2607 = vpop.f32.mrf.mxu0
    %v2608 = vpop.f32.mrf.mxu0
    %v2609 = vadd.f32 %v2512, %v2608
    %v2610 = vpop.f32.mrf.mxu0
    %2611 = vdwg.mxu0
    %vm2612 = vcmp.gt.f32.partialorder %v2550, 0.0
    %vm2613 = vcmp.gt.f32.partialorder %v2553, 0.0
    %vm2614 = vcmp.gt.f32.partialorder %v2558, 0.0
    %vm2615 = vcmp.gt.f32.partialorder %v2561, 0.0
    %vm2616 = vcmp.gt.f32.partialorder %v2566, 0.0
    %vm2617 = vcmp.gt.f32.partialorder %v2569, 0.0
    %vm2618 = vcmp.gt.f32.partialorder %v2574, 0.0
    %vm2619 = vcmp.gt.f32.partialorder %v2577, 0.0
    %vm2620 = vcmp.gt.f32.partialorder %v2582, 0.0
    %vm2621 = vcmp.gt.f32.partialorder %v2585, 0.0
    %vm2622 = vcmp.gt.f32.partialorder %v2590, 0.0
    %vm2623 = vcmp.gt.f32.partialorder %v2593, 0.0
    %vm2624 = vcmp.gt.f32.partialorder %v2598, 0.0
    %vm2625 = vcmp.gt.f32.partialorder %v2601, 0.0
    %vm2626 = vcmp.gt.f32.partialorder %v2606, 0.0
    %vm2627 = vcmp.gt.f32.partialorder %v2609, 0.0
    %v2628 = vmul.f32 %v2550, 0.01
    %v2629 = vmul.f32 %v2553, 0.01
    %v2630 = vmul.f32 %v2558, 0.01
    %v2631 = vmul.f32 %v2561, 0.01
    %v2632 = vmul.f32 %v2566, 0.01
    %v2633 = vmul.f32 %v2569, 0.01
    %v2634 = vmul.f32 %v2574, 0.01
    %v2635 = vmul.f32 %v2577, 0.01
    %v2636 = vmul.f32 %v2582, 0.01
    %v2637 = vmul.f32 %v2585, 0.01
    %v2638 = vmul.f32 %v2590, 0.01
    %v2639 = vmul.f32 %v2593, 0.01
    %v2640 = vmul.f32 %v2598, 0.01
    %v2641 = vmul.f32 %v2601, 0.01
    %v2642 = vmul.f32 %v2606, 0.01
    %v2643 = vmul.f32 %v2609, 0.01
    %v2644 = vsel %vm2612, %v2550, %v2628
    %v2645 = vsel %vm2613, %v2553, %v2629
    %v2646 = vsel %vm2614, %v2558, %v2630
    %v2647 = vsel %vm2615, %v2561, %v2631
    %v2648 = vsel %vm2616, %v2566, %v2632
    %v2649 = vsel %vm2617, %v2569, %v2633
    %v2650 = vsel %vm2618, %v2574, %v2634
    %v2651 = vsel %vm2619, %v2577, %v2635
    %v2652 = vsel %vm2620, %v2582, %v2636
    %v2653 = vsel %vm2621, %v2585, %v2637
    %v2654 = vsel %vm2622, %v2590, %v2638
    %v2655 = vsel %vm2623, %v2593, %v2639
    %v2656 = vsel %vm2624, %v2598, %v2640
    %v2657 = vsel %vm2625, %v2601, %v2641
    %v2658 = vsel %vm2626, %v2606, %v2642
    %v2659 = vsel %vm2627, %v2609, %v2643
    %v2660 = vld [vmem:[%s6] sm:$0xf]
    %v2661 = vld [vmem:[%s6 + $0x4] sm:$0xf]
    %v2662 = vld [vmem:[%s6 + $0x8] sm:$0xf]
    %v2663 = vld [vmem:[%s6 + $0xc] sm:$0xf]
    %v2664 = vld [vmem:[%s6 + $0x10] sm:$0xf]
    %v2665 = vld [vmem:[%s6 + $0x14] sm:$0xf]
    %v2666 = vld [vmem:[%s6 + $0x18] sm:$0xf]
    %v2667 = vld [vmem:[%s6 + $0x1c] sm:$0xf]
    %v2668 = vld [vmem:[%s6 + $0x20] sm:$0xf]
    %v2669 = vld [vmem:[%s6 + $0x24] sm:$0xf]
    %v2670 = vld [vmem:[%s6 + $0x28] sm:$0xf]
    %v2671 = vld [vmem:[%s6 + $0x2c] sm:$0xf]
    %v2672 = vld [vmem:[%s6 + $0x30] sm:$0xf]
    %v2673 = vld [vmem:[%s6 + $0x34] sm:$0xf]
    %v2674 = vld [vmem:[%s6 + $0x38] sm:$0xf]
    %v2675 = vld [vmem:[%s6 + $0x3c] sm:$0xf]
    %v2676 = vld [vmem:[%s6 + $0x40] sm:$0xf]
    %v2677 = vld [vmem:[%s6 + $0x44] sm:$0xf]
    %v2678 = vld [vmem:[%s6 + $0x48] sm:$0xf]
    %v2679 = vld [vmem:[%s6 + $0x4c] sm:$0xf]
    %v2680 = vld [vmem:[%s6 + $0x50] sm:$0xf]
    %v2681 = vld [vmem:[%s6 + $0x54] sm:$0xf]
    %v2682 = vld [vmem:[%s6 + $0x58] sm:$0xf]
    %v2683 = vld [vmem:[%s6 + $0x5c] sm:$0xf]
    %v2684 = vld [vmem:[%s6 + $0x60] sm:$0xf]
    %v2685 = vld [vmem:[%s6 + $0x64] sm:$0xf]
    %v2686 = vld [vmem:[%s6 + $0x68] sm:$0xf]
    %v2687 = vld [vmem:[%s6 + $0x6c] sm:$0xf]
    %v2688 = vld [vmem:[%s6 + $0x70] sm:$0xf]
    %v2689 = vld [vmem:[%s6 + $0x74] sm:$0xf]
    %v2690 = vld [vmem:[%s6 + $0x78] sm:$0xf]
    %v2691 = vld [vmem:[%s6 + $0x7c] sm:$0xf]
    %v2692 = vld [vmem:[%s7] sm:$0x1]
    %v2694 = vlaneseq
    %v2695 = vshrl.u32 %v2694, 7
    %v2696 = vsub.s32 0, %v2695
    %v2697 = vrot.slane %v2692, %v2696
    %v2763 = vcombine.low %v169, %v170
    %v2764 = vcombine.low %v171, %v172
    %v2765 = vcombine.low %v173, %v174
    %v2766 = vcombine.low %v175, %v176
    %v2768 = vunpack.c.l.s4 1966171168
    %v2769 = vunpack.c.0.s8 %v2768
    %v2770 = vlaneseq
    %v2771 = vshrl.u32 %v2770, 7
    %v2772 = vsub.s32 %v2769, %v2771
    %v2773 = vrot.slane %v2763, %v2772
    %v2775 = vunpack.c.l.s4 1966171168
    %v2776 = vunpack.c.0.s8 %v2775
    %v2777 = vlaneseq
    %v2778 = vshrl.u32 %v2777, 7
    %v2779 = vsub.s32 %v2776, %v2778
    %v2780 = vrot.slane %v2764, %v2779
    %v2782 = vunpack.c.l.s4 1966171168
    %v2783 = vunpack.c.0.s8 %v2782
    %v2784 = vlaneseq
    %v2785 = vshrl.u32 %v2784, 7
    %v2786 = vsub.s32 %v2783, %v2785
    %v2787 = vrot.slane %v2765, %v2786
    %v2789 = vunpack.c.l.s4 1966171168
    %v2790 = vunpack.c.0.s8 %v2789
    %v2791 = vlaneseq
    %v2792 = vshrl.u32 %v2791, 7
    %v2793 = vsub.s32 %v2790, %v2792
    %v2794 = vrot.slane %v2766, %v2793
    %v2795 = vcombine.low %v2773, %v2780
    %v2796 = vcombine.high %v2773, %v2780
    %v2797 = vcombine.low %v2787, %v2794
    %v2798 = vcombine.high %v2787, %v2794
    %v2800 = vunpack.c.l.s4 1966171168
    %v2801 = vunpack.c.0.s8 %v2800
    %v2802 = vlaneseq
    %v2803 = vshrl.u32 %v2802, 7
    %v2804 = vsub.s32 %v2801, %v2803
    %v2805 = vrot.slane %v2795, %v2804
    %v2807 = vunpack.c.l.s4 1966171168
    %v2808 = vunpack.c.0.s8 %v2807
    %v2809 = vlaneseq
    %v2810 = vshrl.u32 %v2809, 7
    %v2811 = vsub.s32 %v2808, %v2810
    %v2812 = vrot.slane %v2796, %v2811
    %v2814 = vunpack.c.l.s4 1966171168
    %v2815 = vunpack.c.0.s8 %v2814
    %v2816 = vlaneseq
    %v2817 = vshrl.u32 %v2816, 7
    %v2818 = vsub.s32 %v2815, %v2817
    %v2819 = vrot.slane %v2797, %v2818
    %v2821 = vunpack.c.l.s4 1966171168
    %v2822 = vunpack.c.0.s8 %v2821
    %v2823 = vlaneseq
    %v2824 = vshrl.u32 %v2823, 7
    %v2825 = vsub.s32 %v2822, %v2824
    %v2826 = vrot.slane %v2798, %v2825
    %v2827 = vcombine.low %v2805, %v2819
    %v2828 = vcombine.low %v2812, %v2826
    %v2829 = vcombine.low %v177, %v178
    %v2830 = vcombine.low %v179, %v180
    %v2831 = vcombine.low %v181, %v182
    %v2832 = vcombine.low %v183, %v184
    %v2834 = vunpack.c.l.s4 1966171168
    %v2835 = vunpack.c.0.s8 %v2834
    %v2836 = vlaneseq
    %v2837 = vshrl.u32 %v2836, 7
    %v2838 = vsub.s32 %v2835, %v2837
    %v2839 = vrot.slane %v2829, %v2838
    %v2841 = vunpack.c.l.s4 1966171168
    %v2842 = vunpack.c.0.s8 %v2841
    %v2843 = vlaneseq
    %v2844 = vshrl.u32 %v2843, 7
    %v2845 = vsub.s32 %v2842, %v2844
    %v2846 = vrot.slane %v2830, %v2845
    %v2848 = vunpack.c.l.s4 1966171168
    %v2849 = vunpack.c.0.s8 %v2848
    %v2850 = vlaneseq
    %v2851 = vshrl.u32 %v2850, 7
    %v2852 = vsub.s32 %v2849, %v2851
    %v2853 = vrot.slane %v2831, %v2852
    %v2855 = vunpack.c.l.s4 1966171168
    %v2856 = vunpack.c.0.s8 %v2855
    %v2857 = vlaneseq
    %v2858 = vshrl.u32 %v2857, 7
    %v2859 = vsub.s32 %v2856, %v2858
    %v2860 = vrot.slane %v2832, %v2859
    %v2861 = vcombine.low %v2839, %v2846
    %v2862 = vcombine.high %v2839, %v2846
    %v2863 = vcombine.low %v2853, %v2860
    %v2864 = vcombine.high %v2853, %v2860
    %v2866 = vunpack.c.l.s4 1966171168
    %v2867 = vunpack.c.0.s8 %v2866
    %v2868 = vlaneseq
    %v2869 = vshrl.u32 %v2868, 7
    %v2870 = vsub.s32 %v2867, %v2869
    %v2871 = vrot.slane %v2861, %v2870
    %v2873 = vunpack.c.l.s4 1966171168
    %v2874 = vunpack.c.0.s8 %v2873
    %v2875 = vlaneseq
    %v2876 = vshrl.u32 %v2875, 7
    %v2877 = vsub.s32 %v2874, %v2876
    %v2878 = vrot.slane %v2862, %v2877
    %v2880 = vunpack.c.l.s4 1966171168
    %v2881 = vunpack.c.0.s8 %v2880
    %v2882 = vlaneseq
    %v2883 = vshrl.u32 %v2882, 7
    %v2884 = vsub.s32 %v2881, %v2883
    %v2885 = vrot.slane %v2863, %v2884
    %v2887 = vunpack.c.l.s4 1966171168
    %v2888 = vunpack.c.0.s8 %v2887
    %v2889 = vlaneseq
    %v2890 = vshrl.u32 %v2889, 7
    %v2891 = vsub.s32 %v2888, %v2890
    %v2892 = vrot.slane %v2864, %v2891
    %v2893 = vcombine.low %v2871, %v2885
    %v2894 = vcombine.low %v2878, %v2892
    %v2895 = vcombine.low %v185, %v186
    %v2896 = vcombine.low %v187, %v188
    %v2897 = vcombine.low %v189, %v190
    %v2898 = vcombine.low %v191, %v192
    %v2900 = vunpack.c.l.s4 1966171168
    %v2901 = vunpack.c.0.s8 %v2900
    %v2902 = vlaneseq
    %v2903 = vshrl.u32 %v2902, 7
    %v2904 = vsub.s32 %v2901, %v2903
    %v2905 = vrot.slane %v2895, %v2904
    %v2907 = vunpack.c.l.s4 1966171168
    %v2908 = vunpack.c.0.s8 %v2907
    %v2909 = vlaneseq
    %v2910 = vshrl.u32 %v2909, 7
    %v2911 = vsub.s32 %v2908, %v2910
    %v2912 = vrot.slane %v2896, %v2911
    %v2914 = vunpack.c.l.s4 1966171168
    %v2915 = vunpack.c.0.s8 %v2914
    %v2916 = vlaneseq
    %v2917 = vshrl.u32 %v2916, 7
    %v2918 = vsub.s32 %v2915, %v2917
    %v2919 = vrot.slane %v2897, %v2918
    %v2921 = vunpack.c.l.s4 1966171168
    %v2922 = vunpack.c.0.s8 %v2921
    %v2923 = vlaneseq
    %v2924 = vshrl.u32 %v2923, 7
    %v2925 = vsub.s32 %v2922, %v2924
    %v2926 = vrot.slane %v2898, %v2925
    %v2927 = vcombine.low %v2905, %v2912
    %v2928 = vcombine.high %v2905, %v2912
    %v2929 = vcombine.low %v2919, %v2926
    %v2930 = vcombine.high %v2919, %v2926
    %v2932 = vunpack.c.l.s4 1966171168
    %v2933 = vunpack.c.0.s8 %v2932
    %v2934 = vlaneseq
    %v2935 = vshrl.u32 %v2934, 7
    %v2936 = vsub.s32 %v2933, %v2935
    %v2937 = vrot.slane %v2927, %v2936
    %v2939 = vunpack.c.l.s4 1966171168
    %v2940 = vunpack.c.0.s8 %v2939
    %v2941 = vlaneseq
    %v2942 = vshrl.u32 %v2941, 7
    %v2943 = vsub.s32 %v2940, %v2942
    %v2944 = vrot.slane %v2928, %v2943
    %v2946 = vunpack.c.l.s4 1966171168
    %v2947 = vunpack.c.0.s8 %v2946
    %v2948 = vlaneseq
    %v2949 = vshrl.u32 %v2948, 7
    %v2950 = vsub.s32 %v2947, %v2949
    %v2951 = vrot.slane %v2929, %v2950
    %v2953 = vunpack.c.l.s4 1966171168
    %v2954 = vunpack.c.0.s8 %v2953
    %v2955 = vlaneseq
    %v2956 = vshrl.u32 %v2955, 7
    %v2957 = vsub.s32 %v2954, %v2956
    %v2958 = vrot.slane %v2930, %v2957
    %v2959 = vcombine.low %v2937, %v2951
    %v2960 = vcombine.low %v2944, %v2958
    %v2961 = vcombine.low %v193, %v194
    %v2962 = vcombine.low %v195, %v196
    %v2963 = vcombine.low %v197, %v198
    %v2964 = vcombine.low %v199, %v200
    %v2966 = vunpack.c.l.s4 1966171168
    %v2967 = vunpack.c.0.s8 %v2966
    %v2968 = vlaneseq
    %v2969 = vshrl.u32 %v2968, 7
    %v2970 = vsub.s32 %v2967, %v2969
    %v2971 = vrot.slane %v2961, %v2970
    %v2973 = vunpack.c.l.s4 1966171168
    %v2974 = vunpack.c.0.s8 %v2973
    %v2975 = vlaneseq
    %v2976 = vshrl.u32 %v2975, 7
    %v2977 = vsub.s32 %v2974, %v2976
    %v2978 = vrot.slane %v2962, %v2977
    %v2980 = vunpack.c.l.s4 1966171168
    %v2981 = vunpack.c.0.s8 %v2980
    %v2982 = vlaneseq
    %v2983 = vshrl.u32 %v2982, 7
    %v2984 = vsub.s32 %v2981, %v2983
    %v2985 = vrot.slane %v2963, %v2984
    %v2987 = vunpack.c.l.s4 1966171168
    %v2988 = vunpack.c.0.s8 %v2987
    %v2989 = vlaneseq
    %v2990 = vshrl.u32 %v2989, 7
    %v2991 = vsub.s32 %v2988, %v2990
    %v2992 = vrot.slane %v2964, %v2991
    %v2993 = vcombine.low %v2971, %v2978
    %v2994 = vcombine.high %v2971, %v2978
    %v2995 = vcombine.low %v2985, %v2992
    %v2996 = vcombine.high %v2985, %v2992
    %v2998 = vunpack.c.l.s4 1966171168
    %v2999 = vunpack.c.0.s8 %v2998
    %v3000 = vlaneseq
    %v3001 = vshrl.u32 %v3000, 7
    %v3002 = vsub.s32 %v2999, %v3001
    %v3003 = vrot.slane %v2993, %v3002
    %v3005 = vunpack.c.l.s4 1966171168
    %v3006 = vunpack.c.0.s8 %v3005
    %v3007 = vlaneseq
    %v3008 = vshrl.u32 %v3007, 7
    %v3009 = vsub.s32 %v3006, %v3008
    %v3010 = vrot.slane %v2994, %v3009
    %v3012 = vunpack.c.l.s4 1966171168
    %v3013 = vunpack.c.0.s8 %v3012
    %v3014 = vlaneseq
    %v3015 = vshrl.u32 %v3014, 7
    %v3016 = vsub.s32 %v3013, %v3015
    %v3017 = vrot.slane %v2995, %v3016
    %v3019 = vunpack.c.l.s4 1966171168
    %v3020 = vunpack.c.0.s8 %v3019
    %v3021 = vlaneseq
    %v3022 = vshrl.u32 %v3021, 7
    %v3023 = vsub.s32 %v3020, %v3022
    %v3024 = vrot.slane %v2996, %v3023
    %v3025 = vcombine.low %v3003, %v3017
    %v3026 = vcombine.low %v3010, %v3024
    %v3027 = vcombine.low %v201, %v202
    %v3028 = vcombine.low %v203, %v204
    %v3029 = vcombine.low %v205, %v206
    %v3030 = vcombine.low %v207, %v208
    %v3032 = vunpack.c.l.s4 1966171168
    %v3033 = vunpack.c.0.s8 %v3032
    %v3034 = vlaneseq
    %v3035 = vshrl.u32 %v3034, 7
    %v3036 = vsub.s32 %v3033, %v3035
    %v3037 = vrot.slane %v3027, %v3036
    %v3039 = vunpack.c.l.s4 1966171168
    %v3040 = vunpack.c.0.s8 %v3039
    %v3041 = vlaneseq
    %v3042 = vshrl.u32 %v3041, 7
    %v3043 = vsub.s32 %v3040, %v3042
    %v3044 = vrot.slane %v3028, %v3043
    %v3046 = vunpack.c.l.s4 1966171168
    %v3047 = vunpack.c.0.s8 %v3046
    %v3048 = vlaneseq
    %v3049 = vshrl.u32 %v3048, 7
    %v3050 = vsub.s32 %v3047, %v3049
    %v3051 = vrot.slane %v3029, %v3050
    %v3053 = vunpack.c.l.s4 1966171168
    %v3054 = vunpack.c.0.s8 %v3053
    %v3055 = vlaneseq
    %v3056 = vshrl.u32 %v3055, 7
    %v3057 = vsub.s32 %v3054, %v3056
    %v3058 = vrot.slane %v3030, %v3057
    %v3059 = vcombine.low %v3037, %v3044
    %v3060 = vcombine.high %v3037, %v3044
    %v3061 = vcombine.low %v3051, %v3058
    %v3062 = vcombine.high %v3051, %v3058
    %v3064 = vunpack.c.l.s4 1966171168
    %v3065 = vunpack.c.0.s8 %v3064
    %v3066 = vlaneseq
    %v3067 = vshrl.u32 %v3066, 7
    %v3068 = vsub.s32 %v3065, %v3067
    %v3069 = vrot.slane %v3059, %v3068
    %v3071 = vunpack.c.l.s4 1966171168
    %v3072 = vunpack.c.0.s8 %v3071
    %v3073 = vlaneseq
    %v3074 = vshrl.u32 %v3073, 7
    %v3075 = vsub.s32 %v3072, %v3074
    %v3076 = vrot.slane %v3060, %v3075
    %v3078 = vunpack.c.l.s4 1966171168
    %v3079 = vunpack.c.0.s8 %v3078
    %v3080 = vlaneseq
    %v3081 = vshrl.u32 %v3080, 7
    %v3082 = vsub.s32 %v3079, %v3081
    %v3083 = vrot.slane %v3061, %v3082
    %v3085 = vunpack.c.l.s4 1966171168
    %v3086 = vunpack.c.0.s8 %v3085
    %v3087 = vlaneseq
    %v3088 = vshrl.u32 %v3087, 7
    %v3089 = vsub.s32 %v3086, %v3088
    %v3090 = vrot.slane %v3062, %v3089
    %v3091 = vcombine.low %v3069, %v3083
    %v3092 = vcombine.low %v3076, %v3090
    %v3093 = vcombine.low %v209, %v210
    %v3094 = vcombine.low %v211, %v212
    %v3095 = vcombine.low %v213, %v214
    %v3096 = vcombine.low %v215, %v216
    %v3098 = vunpack.c.l.s4 1966171168
    %v3099 = vunpack.c.0.s8 %v3098
    %v3100 = vlaneseq
    %v3101 = vshrl.u32 %v3100, 7
    %v3102 = vsub.s32 %v3099, %v3101
    %v3103 = vrot.slane %v3093, %v3102
    %v3105 = vunpack.c.l.s4 1966171168
    %v3106 = vunpack.c.0.s8 %v3105
    %v3107 = vlaneseq
    %v3108 = vshrl.u32 %v3107, 7
    %v3109 = vsub.s32 %v3106, %v3108
    %v3110 = vrot.slane %v3094, %v3109
    %v3112 = vunpack.c.l.s4 1966171168
    %v3113 = vunpack.c.0.s8 %v3112
    %v3114 = vlaneseq
    %v3115 = vshrl.u32 %v3114, 7
    %v3116 = vsub.s32 %v3113, %v3115
    %v3117 = vrot.slane %v3095, %v3116
    %v3119 = vunpack.c.l.s4 1966171168
    %v3120 = vunpack.c.0.s8 %v3119
    %v3121 = vlaneseq
    %v3122 = vshrl.u32 %v3121, 7
    %v3123 = vsub.s32 %v3120, %v3122
    %v3124 = vrot.slane %v3096, %v3123
    %v3125 = vcombine.low %v3103, %v3110
    %v3126 = vcombine.high %v3103, %v3110
    %v3127 = vcombine.low %v3117, %v3124
    %v3128 = vcombine.high %v3117, %v3124
    %v3130 = vunpack.c.l.s4 1966171168
    %v3131 = vunpack.c.0.s8 %v3130
    %v3132 = vlaneseq
    %v3133 = vshrl.u32 %v3132, 7
    %v3134 = vsub.s32 %v3131, %v3133
    %v3135 = vrot.slane %v3125, %v3134
    %v3137 = vunpack.c.l.s4 1966171168
    %v3138 = vunpack.c.0.s8 %v3137
    %v3139 = vlaneseq
    %v3140 = vshrl.u32 %v3139, 7
    %v3141 = vsub.s32 %v3138, %v3140
    %v3142 = vrot.slane %v3126, %v3141
    %v3144 = vunpack.c.l.s4 1966171168
    %v3145 = vunpack.c.0.s8 %v3144
    %v3146 = vlaneseq
    %v3147 = vshrl.u32 %v3146, 7
    %v3148 = vsub.s32 %v3145, %v3147
    %v3149 = vrot.slane %v3127, %v3148
    %v3151 = vunpack.c.l.s4 1966171168
    %v3152 = vunpack.c.0.s8 %v3151
    %v3153 = vlaneseq
    %v3154 = vshrl.u32 %v3153, 7
    %v3155 = vsub.s32 %v3152, %v3154
    %v3156 = vrot.slane %v3128, %v3155
    %v3157 = vcombine.low %v3135, %v3149
    %v3158 = vcombine.low %v3142, %v3156
    %v3159 = vcombine.low %v217, %v218
    %v3160 = vcombine.low %v219, %v220
    %v3161 = vcombine.low %v221, %v222
    %v3162 = vcombine.low %v223, %v224
    %v3164 = vunpack.c.l.s4 1966171168
    %v3165 = vunpack.c.0.s8 %v3164
    %v3166 = vlaneseq
    %v3167 = vshrl.u32 %v3166, 7
    %v3168 = vsub.s32 %v3165, %v3167
    %v3169 = vrot.slane %v3159, %v3168
    %v3171 = vunpack.c.l.s4 1966171168
    %v3172 = vunpack.c.0.s8 %v3171
    %v3173 = vlaneseq
    %v3174 = vshrl.u32 %v3173, 7
    %v3175 = vsub.s32 %v3172, %v3174
    %v3176 = vrot.slane %v3160, %v3175
    %v3178 = vunpack.c.l.s4 1966171168
    %v3179 = vunpack.c.0.s8 %v3178
    %v3180 = vlaneseq
    %v3181 = vshrl.u32 %v3180, 7
    %v3182 = vsub.s32 %v3179, %v3181
    %v3183 = vrot.slane %v3161, %v3182
    %v3185 = vunpack.c.l.s4 1966171168
    %v3186 = vunpack.c.0.s8 %v3185
    %v3187 = vlaneseq
    %v3188 = vshrl.u32 %v3187, 7
    %v3189 = vsub.s32 %v3186, %v3188
    %v3190 = vrot.slane %v3162, %v3189
    %v3191 = vcombine.low %v3169, %v3176
    %v3192 = vcombine.high %v3169, %v3176
    %v3193 = vcombine.low %v3183, %v3190
    %v3194 = vcombine.high %v3183, %v3190
    %v3196 = vunpack.c.l.s4 1966171168
    %v3197 = vunpack.c.0.s8 %v3196
    %v3198 = vlaneseq
    %v3199 = vshrl.u32 %v3198, 7
    %v3200 = vsub.s32 %v3197, %v3199
    %v3201 = vrot.slane %v3191, %v3200
    %v3203 = vunpack.c.l.s4 1966171168
    %v3204 = vunpack.c.0.s8 %v3203
    %v3205 = vlaneseq
    %v3206 = vshrl.u32 %v3205, 7
    %v3207 = vsub.s32 %v3204, %v3206
    %v3208 = vrot.slane %v3192, %v3207
    %v3210 = vunpack.c.l.s4 1966171168
    %v3211 = vunpack.c.0.s8 %v3210
    %v3212 = vlaneseq
    %v3213 = vshrl.u32 %v3212, 7
    %v3214 = vsub.s32 %v3211, %v3213
    %v3215 = vrot.slane %v3193, %v3214
    %v3217 = vunpack.c.l.s4 1966171168
    %v3218 = vunpack.c.0.s8 %v3217
    %v3219 = vlaneseq
    %v3220 = vshrl.u32 %v3219, 7
    %v3221 = vsub.s32 %v3218, %v3220
    %v3222 = vrot.slane %v3194, %v3221
    %v3223 = vcombine.low %v3201, %v3215
    %v3224 = vcombine.low %v3208, %v3222
    %v3225 = vcombine.low %v225, %v226
    %v3226 = vcombine.low %v227, %v228
    %v3227 = vcombine.low %v229, %v230
    %v3228 = vcombine.low %v231, %v232
    %v3230 = vunpack.c.l.s4 1966171168
    %v3231 = vunpack.c.0.s8 %v3230
    %v3232 = vlaneseq
    %v3233 = vshrl.u32 %v3232, 7
    %v3234 = vsub.s32 %v3231, %v3233
    %v3235 = vrot.slane %v3225, %v3234
    %v3237 = vunpack.c.l.s4 1966171168
    %v3238 = vunpack.c.0.s8 %v3237
    %v3239 = vlaneseq
    %v3240 = vshrl.u32 %v3239, 7
    %v3241 = vsub.s32 %v3238, %v3240
    %v3242 = vrot.slane %v3226, %v3241
    %v3244 = vunpack.c.l.s4 1966171168
    %v3245 = vunpack.c.0.s8 %v3244
    %v3246 = vlaneseq
    %v3247 = vshrl.u32 %v3246, 7
    %v3248 = vsub.s32 %v3245, %v3247
    %v3249 = vrot.slane %v3227, %v3248
    %v3251 = vunpack.c.l.s4 1966171168
    %v3252 = vunpack.c.0.s8 %v3251
    %v3253 = vlaneseq
    %v3254 = vshrl.u32 %v3253, 7
    %v3255 = vsub.s32 %v3252, %v3254
    %v3256 = vrot.slane %v3228, %v3255
    %v3257 = vcombine.low %v3235, %v3242
    %v3258 = vcombine.high %v3235, %v3242
    %v3259 = vcombine.low %v3249, %v3256
    %v3260 = vcombine.high %v3249, %v3256
    %v3262 = vunpack.c.l.s4 1966171168
    %v3263 = vunpack.c.0.s8 %v3262
    %v3264 = vlaneseq
    %v3265 = vshrl.u32 %v3264, 7
    %v3266 = vsub.s32 %v3263, %v3265
    %v3267 = vrot.slane %v3257, %v3266
    %v3269 = vunpack.c.l.s4 1966171168
    %v3270 = vunpack.c.0.s8 %v3269
    %v3271 = vlaneseq
    %v3272 = vshrl.u32 %v3271, 7
    %v3273 = vsub.s32 %v3270, %v3272
    %v3274 = vrot.slane %v3258, %v3273
    %v3276 = vunpack.c.l.s4 1966171168
    %v3277 = vunpack.c.0.s8 %v3276
    %v3278 = vlaneseq
    %v3279 = vshrl.u32 %v3278, 7
    %v3280 = vsub.s32 %v3277, %v3279
    %v3281 = vrot.slane %v3259, %v3280
    %v3283 = vunpack.c.l.s4 1966171168
    %v3284 = vunpack.c.0.s8 %v3283
    %v3285 = vlaneseq
    %v3286 = vshrl.u32 %v3285, 7
    %v3287 = vsub.s32 %v3284, %v3286
    %v3288 = vrot.slane %v3260, %v3287
    %v3289 = vcombine.low %v3267, %v3281
    %v3290 = vcombine.low %v3274, %v3288
    %v3339 = vunpack.c.l.b16 %v2660
    %v3340 = vunpack.c.l.b16 %v2661
    %v3341 = vunpack.c.l.b16 %v2662
    %v3342 = vunpack.c.l.b16 %v2663
    %v3343 = vunpack.c.l.b16 %v2664
    %v3344 = vunpack.c.l.b16 %v2665
    %v3345 = vunpack.c.l.b16 %v2666
    %v3346 = vunpack.c.l.b16 %v2667
    %v3347 = vunpack.c.l.b16 %v2668
    %v3348 = vunpack.c.l.b16 %v2669
    %v3349 = vunpack.c.l.b16 %v2670
    %v3350 = vunpack.c.l.b16 %v2671
    %v3351 = vunpack.c.l.b16 %v2672
    %v3352 = vunpack.c.l.b16 %v2673
    %v3353 = vunpack.c.l.b16 %v2674
    %v3354 = vunpack.c.l.b16 %v2675
    %v3355 = vunpack.c.l.b16 %v2676
    %v3356 = vunpack.c.l.b16 %v2677
    %v3357 = vunpack.c.l.b16 %v2678
    %v3358 = vunpack.c.l.b16 %v2679
    %v3359 = vunpack.c.l.b16 %v2680
    %v3360 = vunpack.c.l.b16 %v2681
    %v3361 = vunpack.c.l.b16 %v2682
    %v3362 = vunpack.c.l.b16 %v2683
    %v3363 = vunpack.c.l.b16 %v2684
    %v3364 = vunpack.c.l.b16 %v2685
    %v3365 = vunpack.c.l.b16 %v2686
    %v3366 = vunpack.c.l.b16 %v2687
    %v3367 = vunpack.c.l.b16 %v2688
    %v3368 = vunpack.c.l.b16 %v2689
    %v3369 = vunpack.c.l.b16 %v2690
    %v3370 = vunpack.c.l.b16 %v2691
    %v3371 = vpack.c.b16 %v3340, %v3339
    %v3372 = vpack.c.b16 %v3342, %v3341
    %v3373 = vpack.c.b16 %v3344, %v3343
    %v3374 = vpack.c.b16 %v3346, %v3345
    %v3375 = vpack.c.b16 %v3348, %v3347
    %v3376 = vpack.c.b16 %v3350, %v3349
    %v3377 = vpack.c.b16 %v3352, %v3351
    %v3378 = vpack.c.b16 %v3354, %v3353
    %v3379 = vpack.c.b16 %v3356, %v3355
    %v3380 = vpack.c.b16 %v3358, %v3357
    %v3381 = vpack.c.b16 %v3360, %v3359
    %v3382 = vpack.c.b16 %v3362, %v3361
    %v3383 = vpack.c.b16 %v3364, %v3363
    %v3384 = vpack.c.b16 %v3366, %v3365
    %v3385 = vpack.c.b16 %v3368, %v3367
    %v3386 = vpack.c.b16 %v3370, %v3369
    %3403 = vmatprep.subr.bf16.mxu0 0
    %3404 = vmatpush1.bf16.msra.mxu0 %v3378
    %3405 = vmatprep.subr.bf16.mxu0 0
    %3406 = vmatpush1.bf16.msra.mxu0 %v3377
    %3407 = vmatprep.subr.bf16.mxu0 0
    %3408 = vmatpush1.bf16.msra.mxu0 %v3376
    %3409 = vmatprep.subr.bf16.mxu0 0
    %3410 = vmatpush1.bf16.msra.mxu0 %v3375
    %3411 = vmatprep.subr.bf16.mxu0 0
    %3412 = vmatpush1.bf16.msra.mxu0 %v3374
    %3413 = vmatprep.subr.bf16.mxu0 0
    %3414 = vmatpush1.bf16.msra.mxu0 %v3373
    %3415 = vmatprep.subr.bf16.mxu0 0
    %3416 = vmatpush1.bf16.msra.mxu0 %v3372
    %3417 = vmatprep.subr.bf16.mxu0 0
    %3418 = vmatpush1.bf16.msra.mxu0 %v3371
    %3419 = vmatprep.subr.bf16.mxu0 0
    %3420 = vmatpush2.bf16.msra.mxu0 %v3386
    %3421 = vmatprep.subr.bf16.mxu0 0
    %3422 = vmatpush2.bf16.msra.mxu0 %v3385
    %3423 = vmatprep.subr.bf16.mxu0 0
    %3424 = vmatpush2.bf16.msra.mxu0 %v3384
    %3425 = vmatprep.subr.bf16.mxu0 0
    %3426 = vmatpush2.bf16.msra.mxu0 %v3383
    %3427 = vmatprep.subr.bf16.mxu0 0
    %3428 = vmatpush2.bf16.msra.mxu0 %v3382
    %3429 = vmatprep.subr.bf16.mxu0 0
    %3430 = vmatpush2.bf16.msra.mxu0 %v3381
    %3431 = vmatprep.subr.bf16.mxu0 0
    %3432 = vmatpush2.bf16.msra.mxu0 %v3380
    %3433 = vmatprep.subr.bf16.mxu0 0
    %3434 = vmatpush2.bf16.msra.mxu0 %v3379
    %3435 = vmatprep.mubr.bf16.mxu0 %v2828
    %3436 = vmatmul.mubr.bf16.gmra.mxu0 %v2827
    %v3437 = vpop.f32.mrf.mxu0
    %v3438 = vadd.f32 %v2697, %v3437
    %v3439 = vpop.f32.mrf.mxu0
    %v3440 = vpop.f32.mrf.mxu0
    %v3441 = vadd.f32 %v2697, %v3440
    %v3442 = vpop.f32.mrf.mxu0
    %3443 = vmatprep.mubr.bf16.mxu0 %v2894
    %3444 = vmatmul.mubr.bf16.gmra.mxu0 %v2893
    %v3445 = vpop.f32.mrf.mxu0
    %v3446 = vadd.f32 %v2697, %v3445
    %v3447 = vpop.f32.mrf.mxu0
    %v3448 = vpop.f32.mrf.mxu0
    %v3449 = vadd.f32 %v2697, %v3448
    %v3450 = vpop.f32.mrf.mxu0
    %3451 = vmatprep.mubr.bf16.mxu0 %v2960
    %3452 = vmatmul.mubr.bf16.gmra.mxu0 %v2959
    %v3453 = vpop.f32.mrf.mxu0
    %v3454 = vadd.f32 %v2697, %v3453
    %v3455 = vpop.f32.mrf.mxu0
    %v3456 = vpop.f32.mrf.mxu0
    %v3457 = vadd.f32 %v2697, %v3456
    %v3458 = vpop.f32.mrf.mxu0
    %3459 = vmatprep.mubr.bf16.mxu0 %v3026
    %3460 = vmatmul.mubr.bf16.gmra.mxu0 %v3025
    %v3461 = vpop.f32.mrf.mxu0
    %v3462 = vadd.f32 %v2697, %v3461
    %v3463 = vpop.f32.mrf.mxu0
    %v3464 = vpop.f32.mrf.mxu0
    %v3465 = vadd.f32 %v2697, %v3464
    %v3466 = vpop.f32.mrf.mxu0
    %3467 = vmatprep.mubr.bf16.mxu0 %v3092
    %3468 = vmatmul.mubr.bf16.gmra.mxu0 %v3091
    %v3469 = vpop.f32.mrf.mxu0
    %v3470 = vadd.f32 %v2697, %v3469
    %v3471 = vpop.f32.mrf.mxu0
    %v3472 = vpop.f32.mrf.mxu0
    %v3473 = vadd.f32 %v2697, %v3472
    %v3474 = vpop.f32.mrf.mxu0
    %3475 = vmatprep.mubr.bf16.mxu0 %v3158
    %3476 = vmatmul.mubr.bf16.gmra.mxu0 %v3157
    %v3477 = vpop.f32.mrf.mxu0
    %v3478 = vadd.f32 %v2697, %v3477
    %v3479 = vpop.f32.mrf.mxu0
    %v3480 = vpop.f32.mrf.mxu0
    %v3481 = vadd.f32 %v2697, %v3480
    %v3482 = vpop.f32.mrf.mxu0
    %3483 = vmatprep.mubr.bf16.mxu0 %v3224
    %3484 = vmatmul.mubr.bf16.gmra.mxu0 %v3223
    %v3485 = vpop.f32.mrf.mxu0
    %v3486 = vadd.f32 %v2697, %v3485
    %v3487 = vpop.f32.mrf.mxu0
    %v3488 = vpop.f32.mrf.mxu0
    %v3489 = vadd.f32 %v2697, %v3488
    %v3490 = vpop.f32.mrf.mxu0
    %3491 = vmatprep.mubr.bf16.mxu0 %v3290
    %3492 = vmatmul.mubr.bf16.gmra.mxu0 %v3289
    %v3493 = vpop.f32.mrf.mxu0
    %v3494 = vadd.f32 %v2697, %v3493
    %v3495 = vpop.f32.mrf.mxu0
    %v3496 = vpop.f32.mrf.mxu0
    %v3497 = vadd.f32 %v2697, %v3496
    %v3498 = vpop.f32.mrf.mxu0
    %3499 = vdwg.mxu0
    %vm3500 = vcmp.gt.f32.partialorder %v3438, 0.0
    %vm3501 = vcmp.gt.f32.partialorder %v3441, 0.0
    %vm3502 = vcmp.gt.f32.partialorder %v3446, 0.0
    %vm3503 = vcmp.gt.f32.partialorder %v3449, 0.0
    %vm3504 = vcmp.gt.f32.partialorder %v3454, 0.0
    %vm3505 = vcmp.gt.f32.partialorder %v3457, 0.0
    %vm3506 = vcmp.gt.f32.partialorder %v3462, 0.0
    %vm3507 = vcmp.gt.f32.partialorder %v3465, 0.0
    %vm3508 = vcmp.gt.f32.partialorder %v3470, 0.0
    %vm3509 = vcmp.gt.f32.partialorder %v3473, 0.0
    %vm3510 = vcmp.gt.f32.partialorder %v3478, 0.0
    %vm3511 = vcmp.gt.f32.partialorder %v3481, 0.0
    %vm3512 = vcmp.gt.f32.partialorder %v3486, 0.0
    %vm3513 = vcmp.gt.f32.partialorder %v3489, 0.0
    %vm3514 = vcmp.gt.f32.partialorder %v3494, 0.0
    %vm3515 = vcmp.gt.f32.partialorder %v3497, 0.0
    %v3516 = vmul.f32 %v3438, 0.01
    %v3517 = vmul.f32 %v3441, 0.01
    %v3518 = vmul.f32 %v3446, 0.01
    %v3519 = vmul.f32 %v3449, 0.01
    %v3520 = vmul.f32 %v3454, 0.01
    %v3521 = vmul.f32 %v3457, 0.01
    %v3522 = vmul.f32 %v3462, 0.01
    %v3523 = vmul.f32 %v3465, 0.01
    %v3524 = vmul.f32 %v3470, 0.01
    %v3525 = vmul.f32 %v3473, 0.01
    %v3526 = vmul.f32 %v3478, 0.01
    %v3527 = vmul.f32 %v3481, 0.01
    %v3528 = vmul.f32 %v3486, 0.01
    %v3529 = vmul.f32 %v3489, 0.01
    %v3530 = vmul.f32 %v3494, 0.01
    %v3531 = vmul.f32 %v3497, 0.01
    %v3532 = vsel %vm3500, %v3438, %v3516
    %v3533 = vsel %vm3501, %v3441, %v3517
    %v3534 = vsel %vm3502, %v3446, %v3518
    %v3535 = vsel %vm3503, %v3449, %v3519
    %v3536 = vsel %vm3504, %v3454, %v3520
    %v3537 = vsel %vm3505, %v3457, %v3521
    %v3538 = vsel %vm3506, %v3462, %v3522
    %v3539 = vsel %vm3507, %v3465, %v3523
    %v3540 = vsel %vm3508, %v3470, %v3524
    %v3541 = vsel %vm3509, %v3473, %v3525
    %v3542 = vsel %vm3510, %v3478, %v3526
    %v3543 = vsel %vm3511, %v3481, %v3527
    %v3544 = vsel %vm3512, %v3486, %v3528
    %v3545 = vsel %vm3513, %v3489, %v3529
    %v3546 = vsel %vm3514, %v3494, %v3530
    %v3547 = vsel %vm3515, %v3497, %v3531
    %v3548 = vpack.c.bf16 %v3533, %v3532
    %v3549 = vpack.c.bf16 %v3535, %v3534
    %v3550 = vpack.c.bf16 %v3537, %v3536
    %v3551 = vpack.c.bf16 %v3539, %v3538
    %v3552 = vpack.c.bf16 %v3541, %v3540
    %v3553 = vpack.c.bf16 %v3543, %v3542
    %v3554 = vpack.c.bf16 %v3545, %v3544
    %v3555 = vpack.c.bf16 %v3547, %v3546
    %v3556 = vld [vmem:[%s8] sm:$0xf]
    %v3557 = vld [vmem:[%s8 + $0x4] sm:$0xf]
    %v3558 = vld [vmem:[%s8 + $0x8] sm:$0xf]
    %v3559 = vld [vmem:[%s8 + $0xc] sm:$0xf]
    %v3560 = vld [vmem:[%s8 + $0x10] sm:$0xf]
    %v3561 = vld [vmem:[%s8 + $0x14] sm:$0xf]
    %v3562 = vld [vmem:[%s8 + $0x18] sm:$0xf]
    %v3563 = vld [vmem:[%s8 + $0x1c] sm:$0xf]
    %v3564 = vld [vmem:[%s8 + $0x20] sm:$0xf]
    %v3565 = vld [vmem:[%s8 + $0x24] sm:$0xf]
    %v3566 = vld [vmem:[%s8 + $0x28] sm:$0xf]
    %v3567 = vld [vmem:[%s8 + $0x2c] sm:$0xf]
    %v3568 = vld [vmem:[%s8 + $0x30] sm:$0xf]
    %v3569 = vld [vmem:[%s8 + $0x34] sm:$0xf]
    %v3570 = vld [vmem:[%s8 + $0x38] sm:$0xf]
    %v3571 = vld [vmem:[%s8 + $0x3c] sm:$0xf]
    %v3572 = vld [vmem:[%s9] sm:$0x1]
    %v3574 = vlaneseq
    %v3575 = vshrl.u32 %v3574, 7
    %v3576 = vsub.s32 0, %v3575
    %v3577 = vrot.slane %v3572, %v3576
    %v3595 = vunpack.c.l.b16 %v3556
    %v3596 = vunpack.c.l.b16 %v3557
    %v3597 = vunpack.c.l.b16 %v3558
    %v3598 = vunpack.c.l.b16 %v3559
    %v3599 = vunpack.c.l.b16 %v3560
    %v3600 = vunpack.c.l.b16 %v3561
    %v3601 = vunpack.c.l.b16 %v3562
    %v3602 = vunpack.c.l.b16 %v3563
    %v3603 = vunpack.c.l.b16 %v3564
    %v3604 = vunpack.c.l.b16 %v3565
    %v3605 = vunpack.c.l.b16 %v3566
    %v3606 = vunpack.c.l.b16 %v3567
    %v3607 = vunpack.c.l.b16 %v3568
    %v3608 = vunpack.c.l.b16 %v3569
    %v3609 = vunpack.c.l.b16 %v3570
    %v3610 = vunpack.c.l.b16 %v3571
    %v3611 = vpack.c.b16 %v3596, %v3595
    %v3612 = vpack.c.b16 %v3598, %v3597
    %v3613 = vpack.c.b16 %v3600, %v3599
    %v3614 = vpack.c.b16 %v3602, %v3601
    %v3615 = vpack.c.b16 %v3604, %v3603
    %v3616 = vpack.c.b16 %v3606, %v3605
    %v3617 = vpack.c.b16 %v3608, %v3607
    %v3618 = vpack.c.b16 %v3610, %v3609
    %3627 = vmatprep.subr.bf16.mxu0 0
    %3628 = vmatpush1.bf16.msra.mxu0 %v3618
    %3629 = vmatprep.subr.bf16.mxu0 0
    %3630 = vmatpush1.bf16.msra.mxu0 %v3617
    %3631 = vmatprep.subr.bf16.mxu0 0
    %3632 = vmatpush1.bf16.msra.mxu0 %v3616
    %3633 = vmatprep.subr.bf16.mxu0 0
    %3634 = vmatpush1.bf16.msra.mxu0 %v3615
    %3635 = vmatprep.subr.bf16.mxu0 0
    %3636 = vmatpush1.bf16.msra.mxu0 %v3614
    %3637 = vmatprep.subr.bf16.mxu0 0
    %3638 = vmatpush1.bf16.msra.mxu0 %v3613
    %3639 = vmatprep.subr.bf16.mxu0 0
    %3640 = vmatpush1.bf16.msra.mxu0 %v3612
    %3641 = vmatprep.subr.bf16.mxu0 0
    %3642 = vmatpush1.bf16.msra.mxu0 %v3611
    %3643 = vmatprep.subr.bf16.mxu0 0
    %3644 = vmatpush2.bf16.msra.mxu0 0
    %3645 = vmatprep.subr.bf16.mxu0 0
    %3646 = vmatpush2.bf16.msra.mxu0 0
    %3647 = vmatprep.subr.bf16.mxu0 0
    %3648 = vmatpush2.bf16.msra.mxu0 0
    %3649 = vmatprep.subr.bf16.mxu0 0
    %3650 = vmatpush2.bf16.msra.mxu0 0
    %3651 = vmatprep.subr.bf16.mxu0 0
    %3652 = vmatpush2.bf16.msra.mxu0 0
    %3653 = vmatprep.subr.bf16.mxu0 0
    %3654 = vmatpush2.bf16.msra.mxu0 0
    %3655 = vmatprep.subr.bf16.mxu0 0
    %3656 = vmatpush2.bf16.msra.mxu0 0
    %3657 = vmatprep.subr.bf16.mxu0 0
    %3658 = vmatpush2.bf16.msra.mxu0 0
    %3659 = vmatprep.mubr.bf16.mxu0 0
    %3660 = vmatmul.mubr.bf16.gmra.mxu0 %v3548
    %v3661 = vpop.f32.mrf.mxu0
    %v3662 = vadd.f32 %v3577, %v3661
    %v3663 = vpop.f32.mrf.mxu0
    %v3664 = vpop.f32.mrf.mxu0
    %v3665 = vadd.f32 %v3577, %v3664
    %v3666 = vpop.f32.mrf.mxu0
    %3667 = vmatprep.mubr.bf16.mxu0 0
    %3668 = vmatmul.mubr.bf16.gmra.mxu0 %v3549
    %v3669 = vpop.f32.mrf.mxu0
    %v3670 = vadd.f32 %v3577, %v3669
    %v3671 = vpop.f32.mrf.mxu0
    %v3672 = vpop.f32.mrf.mxu0
    %v3673 = vadd.f32 %v3577, %v3672
    %v3674 = vpop.f32.mrf.mxu0
    %3675 = vmatprep.mubr.bf16.mxu0 0
    %3676 = vmatmul.mubr.bf16.gmra.mxu0 %v3550
    %v3677 = vpop.f32.mrf.mxu0
    %v3678 = vadd.f32 %v3577, %v3677
    %v3679 = vpop.f32.mrf.mxu0
    %v3680 = vpop.f32.mrf.mxu0
    %v3681 = vadd.f32 %v3577, %v3680
    %v3682 = vpop.f32.mrf.mxu0
    %3683 = vmatprep.mubr.bf16.mxu0 0
    %3684 = vmatmul.mubr.bf16.gmra.mxu0 %v3551
    %v3685 = vpop.f32.mrf.mxu0
    %v3686 = vadd.f32 %v3577, %v3685
    %v3687 = vpop.f32.mrf.mxu0
    %v3688 = vpop.f32.mrf.mxu0
    %v3689 = vadd.f32 %v3577, %v3688
    %v3690 = vpop.f32.mrf.mxu0
    %3691 = vmatprep.mubr.bf16.mxu0 0
    %3692 = vmatmul.mubr.bf16.gmra.mxu0 %v3552
    %v3693 = vpop.f32.mrf.mxu0
    %v3694 = vadd.f32 %v3577, %v3693
    %v3695 = vpop.f32.mrf.mxu0
    %v3696 = vpop.f32.mrf.mxu0
    %v3697 = vadd.f32 %v3577, %v3696
    %v3698 = vpop.f32.mrf.mxu0
    %3699 = vmatprep.mubr.bf16.mxu0 0
    %3700 = vmatmul.mubr.bf16.gmra.mxu0 %v3553
    %v3701 = vpop.f32.mrf.mxu0
    %v3702 = vadd.f32 %v3577, %v3701
    %v3703 = vpop.f32.mrf.mxu0
    %v3704 = vpop.f32.mrf.mxu0
    %v3705 = vadd.f32 %v3577, %v3704
    %v3706 = vpop.f32.mrf.mxu0
    %3707 = vmatprep.mubr.bf16.mxu0 0
    %3708 = vmatmul.mubr.bf16.gmra.mxu0 %v3554
    %v3709 = vpop.f32.mrf.mxu0
    %v3710 = vadd.f32 %v3577, %v3709
    %v3711 = vpop.f32.mrf.mxu0
    %v3712 = vpop.f32.mrf.mxu0
    %v3713 = vadd.f32 %v3577, %v3712
    %v3714 = vpop.f32.mrf.mxu0
    %3715 = vmatprep.mubr.bf16.mxu0 0
    %3716 = vmatmul.mubr.bf16.gmra.mxu0 %v3555
    %v3717 = vpop.f32.mrf.mxu0
    %v3718 = vadd.f32 %v3577, %v3717
    %v3719 = vpop.f32.mrf.mxu0
    %v3720 = vpop.f32.mrf.mxu0
    %v3721 = vadd.f32 %v3577, %v3720
    %v3722 = vpop.f32.mrf.mxu0
    %3723 = vdwg.mxu0
    %v3724 = vpack.c.bf16 %v3665, %v3662
    %v3725 = vpack.c.bf16 %v3673, %v3670
    %v3726 = vpack.c.bf16 %v3681, %v3678
    %v3727 = vpack.c.bf16 %v3689, %v3686
    %v3728 = vpack.c.bf16 %v3697, %v3694
    %v3729 = vpack.c.bf16 %v3705, %v3702
    %v3730 = vpack.c.bf16 %v3713, %v3710
    %v3731 = vpack.c.bf16 %v3721, %v3718
    %v3732 = vld [vmem:[%s4] sm:$0xff]
    %v3733 = vld [vmem:[%s4 + $0x8] sm:$0xff]
    %v3734 = vld [vmem:[%s4 + $0x10] sm:$0xff]
    %v3735 = vld [vmem:[%s4 + $0x18] sm:$0xff]
    %v3736 = vld [vmem:[%s4 + $0x20] sm:$0xff]
    %v3737 = vld [vmem:[%s4 + $0x28] sm:$0xff]
    %v3738 = vld [vmem:[%s4 + $0x30] sm:$0xff]
    %v3739 = vld [vmem:[%s4 + $0x38] sm:$0xff]
    %v3740 = vld [vmem:[%s4 + $0x40] sm:$0xff]
    %v3741 = vld [vmem:[%s4 + $0x48] sm:$0xff]
    %v3742 = vld [vmem:[%s4 + $0x50] sm:$0xff]
    %v3743 = vld [vmem:[%s4 + $0x58] sm:$0xff]
    %v3744 = vld [vmem:[%s4 + $0x60] sm:$0xff]
    %v3745 = vld [vmem:[%s4 + $0x68] sm:$0xff]
    %v3746 = vld [vmem:[%s4 + $0x70] sm:$0xff]
    %v3747 = vld [vmem:[%s4 + $0x78] sm:$0xff]
    %v3748 = vld [vmem:[%s4 + $0x80] sm:$0xff]
    %v3749 = vld [vmem:[%s4 + $0x88] sm:$0xff]
    %v3750 = vld [vmem:[%s4 + $0x90] sm:$0xff]
    %v3751 = vld [vmem:[%s4 + $0x98] sm:$0xff]
    %v3752 = vld [vmem:[%s4 + $0xa0] sm:$0xff]
    %v3753 = vld [vmem:[%s4 + $0xa8] sm:$0xff]
    %v3754 = vld [vmem:[%s4 + $0xb0] sm:$0xff]
    %v3755 = vld [vmem:[%s4 + $0xb8] sm:$0xff]
    %v3756 = vld [vmem:[%s4 + $0xc0] sm:$0xff]
    %v3757 = vld [vmem:[%s4 + $0xc8] sm:$0xff]
    %v3758 = vld [vmem:[%s4 + $0xd0] sm:$0xff]
    %v3759 = vld [vmem:[%s4 + $0xd8] sm:$0xff]
    %v3760 = vld [vmem:[%s4 + $0xe0] sm:$0xff]
    %v3761 = vld [vmem:[%s4 + $0xe8] sm:$0xff]
    %v3762 = vld [vmem:[%s4 + $0xf0] sm:$0xff]
    %v3763 = vld [vmem:[%s4 + $0xf8] sm:$0xff]
    %v3764 = vld [vmem:[%s4 + $0x100] sm:$0xff]
    %v3765 = vld [vmem:[%s4 + $0x108] sm:$0xff]
    %v3766 = vld [vmem:[%s4 + $0x110] sm:$0xff]
    %v3767 = vld [vmem:[%s4 + $0x118] sm:$0xff]
    %v3768 = vld [vmem:[%s4 + $0x120] sm:$0xff]
    %v3769 = vld [vmem:[%s4 + $0x128] sm:$0xff]
    %v3770 = vld [vmem:[%s4 + $0x130] sm:$0xff]
    %v3771 = vld [vmem:[%s4 + $0x138] sm:$0xff]
    %v3772 = vld [vmem:[%s4 + $0x140] sm:$0xff]
    %v3773 = vld [vmem:[%s4 + $0x148] sm:$0xff]
    %v3774 = vld [vmem:[%s4 + $0x150] sm:$0xff]
    %v3775 = vld [vmem:[%s4 + $0x158] sm:$0xff]
    %v3776 = vld [vmem:[%s4 + $0x160] sm:$0xff]
    %v3777 = vld [vmem:[%s4 + $0x168] sm:$0xff]
    %v3778 = vld [vmem:[%s4 + $0x170] sm:$0xff]
    %v3779 = vld [vmem:[%s4 + $0x178] sm:$0xff]
    %v3780 = vld [vmem:[%s4 + $0x180] sm:$0xff]
    %v3781 = vld [vmem:[%s4 + $0x188] sm:$0xff]
    %v3782 = vld [vmem:[%s4 + $0x190] sm:$0xff]
    %v3783 = vld [vmem:[%s4 + $0x198] sm:$0xff]
    %v3784 = vld [vmem:[%s4 + $0x1a0] sm:$0xff]
    %v3785 = vld [vmem:[%s4 + $0x1a8] sm:$0xff]
    %v3786 = vld [vmem:[%s4 + $0x1b0] sm:$0xff]
    %v3787 = vld [vmem:[%s4 + $0x1b8] sm:$0xff]
    %v3788 = vld [vmem:[%s4 + $0x1c0] sm:$0xff]
    %v3789 = vld [vmem:[%s4 + $0x1c8] sm:$0xff]
    %v3790 = vld [vmem:[%s4 + $0x1d0] sm:$0xff]
    %v3791 = vld [vmem:[%s4 + $0x1d8] sm:$0xff]
    %v3792 = vld [vmem:[%s4 + $0x1e0] sm:$0xff]
    %v3793 = vld [vmem:[%s4 + $0x1e8] sm:$0xff]
    %v3794 = vld [vmem:[%s4 + $0x1f0] sm:$0xff]
    %v3795 = vld [vmem:[%s4 + $0x1f8] sm:$0xff]
    %v3796 = vld [vmem:[%s5] sm:$0xff]
    %v3798 = vlaneseq
    %v3799 = vshrl.u32 %v3798, 7
    %v3800 = vsub.s32 0, %v3799
    %v3801 = vrot.slane %v3796, %v3800
    %v3802 = vlaneseq
    %v3803 = vshrl.u32 %v3802, 7
    %v3804 = vsub.s32 1, %v3803
    %v3805 = vrot.slane %v3796, %v3804
    %v3806 = vlaneseq
    %v3807 = vshrl.u32 %v3806, 7
    %v3808 = vsub.s32 2, %v3807
    %v3809 = vrot.slane %v3796, %v3808
    %v3810 = vlaneseq
    %v3811 = vshrl.u32 %v3810, 7
    %v3812 = vsub.s32 3, %v3811
    %v3813 = vrot.slane %v3796, %v3812
    %v3814 = vlaneseq
    %v3815 = vshrl.u32 %v3814, 7
    %v3816 = vsub.s32 4, %v3815
    %v3817 = vrot.slane %v3796, %v3816
    %v3818 = vlaneseq
    %v3819 = vshrl.u32 %v3818, 7
    %v3820 = vsub.s32 5, %v3819
    %v3821 = vrot.slane %v3796, %v3820
    %v3822 = vlaneseq
    %v3823 = vshrl.u32 %v3822, 7
    %v3824 = vsub.s32 6, %v3823
    %v3825 = vrot.slane %v3796, %v3824
    %v3826 = vlaneseq
    %v3827 = vshrl.u32 %v3826, 7
    %v3828 = vsub.s32 7, %v3827
    %v3829 = vrot.slane %v3796, %v3828
    %v3902 = vunpack.c.l.b16 %v3732
    %v3903 = vunpack.c.h.b16 %v3732
    %v3904 = vunpack.c.l.b16 %v3733
    %v3905 = vunpack.c.h.b16 %v3733
    %v3906 = vunpack.c.l.b16 %v3734
    %v3907 = vunpack.c.h.b16 %v3734
    %v3908 = vunpack.c.l.b16 %v3735
    %v3909 = vunpack.c.h.b16 %v3735
    %v3910 = vunpack.c.l.b16 %v3736
    %v3911 = vunpack.c.h.b16 %v3736
    %v3912 = vunpack.c.l.b16 %v3737
    %v3913 = vunpack.c.h.b16 %v3737
    %v3914 = vunpack.c.l.b16 %v3738
    %v3915 = vunpack.c.h.b16 %v3738
    %v3916 = vunpack.c.l.b16 %v3739
    %v3917 = vunpack.c.h.b16 %v3739
    %v3918 = vunpack.c.l.b16 %v3740
    %v3919 = vunpack.c.h.b16 %v3740
    %v3920 = vunpack.c.l.b16 %v3741
    %v3921 = vunpack.c.h.b16 %v3741
    %v3922 = vunpack.c.l.b16 %v3742
    %v3923 = vunpack.c.h.b16 %v3742
    %v3924 = vunpack.c.l.b16 %v3743
    %v3925 = vunpack.c.h.b16 %v3743
    %v3926 = vunpack.c.l.b16 %v3744
    %v3927 = vunpack.c.h.b16 %v3744
    %v3928 = vunpack.c.l.b16 %v3745
    %v3929 = vunpack.c.h.b16 %v3745
    %v3930 = vunpack.c.l.b16 %v3746
    %v3931 = vunpack.c.h.b16 %v3746
    %v3932 = vunpack.c.l.b16 %v3747
    %v3933 = vunpack.c.h.b16 %v3747
    %v3934 = vunpack.c.l.b16 %v3748
    %v3935 = vunpack.c.h.b16 %v3748
    %v3936 = vunpack.c.l.b16 %v3749
    %v3937 = vunpack.c.h.b16 %v3749
    %v3938 = vunpack.c.l.b16 %v3750
    %v3939 = vunpack.c.h.b16 %v3750
    %v3940 = vunpack.c.l.b16 %v3751
    %v3941 = vunpack.c.h.b16 %v3751
    %v3942 = vunpack.c.l.b16 %v3752
    %v3943 = vunpack.c.h.b16 %v3752
    %v3944 = vunpack.c.l.b16 %v3753
    %v3945 = vunpack.c.h.b16 %v3753
    %v3946 = vunpack.c.l.b16 %v3754
    %v3947 = vunpack.c.h.b16 %v3754
    %v3948 = vunpack.c.l.b16 %v3755
    %v3949 = vunpack.c.h.b16 %v3755
    %v3950 = vunpack.c.l.b16 %v3756
    %v3951 = vunpack.c.h.b16 %v3756
    %v3952 = vunpack.c.l.b16 %v3757
    %v3953 = vunpack.c.h.b16 %v3757
    %v3954 = vunpack.c.l.b16 %v3758
    %v3955 = vunpack.c.h.b16 %v3758
    %v3956 = vunpack.c.l.b16 %v3759
    %v3957 = vunpack.c.h.b16 %v3759
    %v3958 = vunpack.c.l.b16 %v3760
    %v3959 = vunpack.c.h.b16 %v3760
    %v3960 = vunpack.c.l.b16 %v3761
    %v3961 = vunpack.c.h.b16 %v3761
    %v3962 = vunpack.c.l.b16 %v3762
    %v3963 = vunpack.c.h.b16 %v3762
    %v3964 = vunpack.c.l.b16 %v3763
    %v3965 = vunpack.c.h.b16 %v3763
    %v3966 = vunpack.c.l.b16 %v3764
    %v3967 = vunpack.c.h.b16 %v3764
    %v3968 = vunpack.c.l.b16 %v3765
    %v3969 = vunpack.c.h.b16 %v3765
    %v3970 = vunpack.c.l.b16 %v3766
    %v3971 = vunpack.c.h.b16 %v3766
    %v3972 = vunpack.c.l.b16 %v3767
    %v3973 = vunpack.c.h.b16 %v3767
    %v3974 = vunpack.c.l.b16 %v3768
    %v3975 = vunpack.c.h.b16 %v3768
    %v3976 = vunpack.c.l.b16 %v3769
    %v3977 = vunpack.c.h.b16 %v3769
    %v3978 = vunpack.c.l.b16 %v3770
    %v3979 = vunpack.c.h.b16 %v3770
    %v3980 = vunpack.c.l.b16 %v3771
    %v3981 = vunpack.c.h.b16 %v3771
    %v3982 = vunpack.c.l.b16 %v3772
    %v3983 = vunpack.c.h.b16 %v3772
    %v3984 = vunpack.c.l.b16 %v3773
    %v3985 = vunpack.c.h.b16 %v3773
    %v3986 = vunpack.c.l.b16 %v3774
    %v3987 = vunpack.c.h.b16 %v3774
    %v3988 = vunpack.c.l.b16 %v3775
    %v3989 = vunpack.c.h.b16 %v3775
    %v3990 = vunpack.c.l.b16 %v3776
    %v3991 = vunpack.c.h.b16 %v3776
    %v3992 = vunpack.c.l.b16 %v3777
    %v3993 = vunpack.c.h.b16 %v3777
    %v3994 = vunpack.c.l.b16 %v3778
    %v3995 = vunpack.c.h.b16 %v3778
    %v3996 = vunpack.c.l.b16 %v3779
    %v3997 = vunpack.c.h.b16 %v3779
    %v3998 = vunpack.c.l.b16 %v3780
    %v3999 = vunpack.c.h.b16 %v3780
    %v4000 = vunpack.c.l.b16 %v3781
    %v4001 = vunpack.c.h.b16 %v3781
    %v4002 = vunpack.c.l.b16 %v3782
    %v4003 = vunpack.c.h.b16 %v3782
    %v4004 = vunpack.c.l.b16 %v3783
    %v4005 = vunpack.c.h.b16 %v3783
    %v4006 = vunpack.c.l.b16 %v3784
    %v4007 = vunpack.c.h.b16 %v3784
    %v4008 = vunpack.c.l.b16 %v3785
    %v4009 = vunpack.c.h.b16 %v3785
    %v4010 = vunpack.c.l.b16 %v3786
    %v4011 = vunpack.c.h.b16 %v3786
    %v4012 = vunpack.c.l.b16 %v3787
    %v4013 = vunpack.c.h.b16 %v3787
    %v4014 = vunpack.c.l.b16 %v3788
    %v4015 = vunpack.c.h.b16 %v3788
    %v4016 = vunpack.c.l.b16 %v3789
    %v4017 = vunpack.c.h.b16 %v3789
    %v4018 = vunpack.c.l.b16 %v3790
    %v4019 = vunpack.c.h.b16 %v3790
    %v4020 = vunpack.c.l.b16 %v3791
    %v4021 = vunpack.c.h.b16 %v3791
    %v4022 = vunpack.c.l.b16 %v3792
    %v4023 = vunpack.c.h.b16 %v3792
    %v4024 = vunpack.c.l.b16 %v3793
    %v4025 = vunpack.c.h.b16 %v3793
    %v4026 = vunpack.c.l.b16 %v3794
    %v4027 = vunpack.c.h.b16 %v3794
    %v4028 = vunpack.c.l.b16 %v3795
    %v4029 = vunpack.c.h.b16 %v3795
    %v4030 = vpack.c.b16 %v3910, %v3902
    %v4031 = vpack.c.b16 %v3911, %v3903
    %v4032 = vpack.c.b16 %v3912, %v3904
    %v4033 = vpack.c.b16 %v3913, %v3905
    %v4034 = vpack.c.b16 %v3914, %v3906
    %v4035 = vpack.c.b16 %v3915, %v3907
    %v4036 = vpack.c.b16 %v3916, %v3908
    %v4037 = vpack.c.b16 %v3917, %v3909
    %v4038 = vpack.c.b16 %v3926, %v3918
    %v4039 = vpack.c.b16 %v3927, %v3919
    %v4040 = vpack.c.b16 %v3928, %v3920
    %v4041 = vpack.c.b16 %v3929, %v3921
    %v4042 = vpack.c.b16 %v3930, %v3922
    %v4043 = vpack.c.b16 %v3931, %v3923
    %v4044 = vpack.c.b16 %v3932, %v3924
    %v4045 = vpack.c.b16 %v3933, %v3925
    %v4046 = vpack.c.b16 %v3942, %v3934
    %v4047 = vpack.c.b16 %v3943, %v3935
    %v4048 = vpack.c.b16 %v3944, %v3936
    %v4049 = vpack.c.b16 %v3945, %v3937
    %v4050 = vpack.c.b16 %v3946, %v3938
    %v4051 = vpack.c.b16 %v3947, %v3939
    %v4052 = vpack.c.b16 %v3948, %v3940
    %v4053 = vpack.c.b16 %v3949, %v3941
    %v4054 = vpack.c.b16 %v3958, %v3950
    %v4055 = vpack.c.b16 %v3959, %v3951
    %v4056 = vpack.c.b16 %v3960, %v3952
    %v4057 = vpack.c.b16 %v3961, %v3953
    %v4058 = vpack.c.b16 %v3962, %v3954
    %v4059 = vpack.c.b16 %v3963, %v3955
    %v4060 = vpack.c.b16 %v3964, %v3956
    %v4061 = vpack.c.b16 %v3965, %v3957
    %v4062 = vpack.c.b16 %v3974, %v3966
    %v4063 = vpack.c.b16 %v3975, %v3967
    %v4064 = vpack.c.b16 %v3976, %v3968
    %v4065 = vpack.c.b16 %v3977, %v3969
    %v4066 = vpack.c.b16 %v3978, %v3970
    %v4067 = vpack.c.b16 %v3979, %v3971
    %v4068 = vpack.c.b16 %v3980, %v3972
    %v4069 = vpack.c.b16 %v3981, %v3973
    %v4070 = vpack.c.b16 %v3990, %v3982
    %v4071 = vpack.c.b16 %v3991, %v3983
    %v4072 = vpack.c.b16 %v3992, %v3984
    %v4073 = vpack.c.b16 %v3993, %v3985
    %v4074 = vpack.c.b16 %v3994, %v3986
    %v4075 = vpack.c.b16 %v3995, %v3987
    %v4076 = vpack.c.b16 %v3996, %v3988
    %v4077 = vpack.c.b16 %v3997, %v3989
    %v4078 = vpack.c.b16 %v4006, %v3998
    %v4079 = vpack.c.b16 %v4007, %v3999
    %v4080 = vpack.c.b16 %v4008, %v4000
    %v4081 = vpack.c.b16 %v4009, %v4001
    %v4082 = vpack.c.b16 %v4010, %v4002
    %v4083 = vpack.c.b16 %v4011, %v4003
    %v4084 = vpack.c.b16 %v4012, %v4004
    %v4085 = vpack.c.b16 %v4013, %v4005
    %v4086 = vpack.c.b16 %v4022, %v4014
    %v4087 = vpack.c.b16 %v4023, %v4015
    %v4088 = vpack.c.b16 %v4024, %v4016
    %v4089 = vpack.c.b16 %v4025, %v4017
    %v4090 = vpack.c.b16 %v4026, %v4018
    %v4091 = vpack.c.b16 %v4027, %v4019
    %v4092 = vpack.c.b16 %v4028, %v4020
    %v4093 = vpack.c.b16 %v4029, %v4021
    %4158 = vmatprep.subr.bf16.mxu0 %v4087
    %4159 = vmatpush1.bf16.msra.mxu0 %v4086
    %4160 = vmatprep.subr.bf16.mxu0 %v4079
    %4161 = vmatpush1.bf16.msra.mxu0 %v4078
    %4162 = vmatprep.subr.bf16.mxu0 %v4071
    %4163 = vmatpush1.bf16.msra.mxu0 %v4070
    %4164 = vmatprep.subr.bf16.mxu0 %v4063
    %4165 = vmatpush1.bf16.msra.mxu0 %v4062
    %4166 = vmatprep.subr.bf16.mxu0 %v4055
    %4167 = vmatpush1.bf16.msra.mxu0 %v4054
    %4168 = vmatprep.subr.bf16.mxu0 %v4047
    %4169 = vmatpush1.bf16.msra.mxu0 %v4046
    %4170 = vmatprep.subr.bf16.mxu0 %v4039
    %4171 = vmatpush1.bf16.msra.mxu0 %v4038
    %4172 = vmatprep.subr.bf16.mxu0 %v4031
    %4173 = vmatpush1.bf16.msra.mxu0 %v4030
    %4174 = vmatprep.subr.bf16.mxu0 0
    %4175 = vmatpush2.bf16.msra.mxu0 0
    %4176 = vmatprep.subr.bf16.mxu0 0
    %4177 = vmatpush2.bf16.msra.mxu0 0
    %4178 = vmatprep.subr.bf16.mxu0 0
    %4179 = vmatpush2.bf16.msra.mxu0 0
    %4180 = vmatprep.subr.bf16.mxu0 0
    %4181 = vmatpush2.bf16.msra.mxu0 0
    %4182 = vmatprep.subr.bf16.mxu0 0
    %4183 = vmatpush2.bf16.msra.mxu0 0
    %4184 = vmatprep.subr.bf16.mxu0 0
    %4185 = vmatpush2.bf16.msra.mxu0 0
    %4186 = vmatprep.subr.bf16.mxu0 0
    %4187 = vmatpush2.bf16.msra.mxu0 0
    %4188 = vmatprep.subr.bf16.mxu0 0
    %4189 = vmatpush2.bf16.msra.mxu0 0
    %4190 = vmatprep.mubr.bf16.mxu0 0
    %4191 = vmatmul.mubr.bf16.gmra.mxu0 %v3724
    %v4192 = vpop.f32.mrf.mxu0
    %v4193 = vadd.f32 %v3801, %v4192
    %v4194 = vpop.f32.mrf.mxu0
    %v4195 = vadd.f32 %v3805, %v4194
    %v4196 = vpop.f32.mrf.mxu0
    %v4197 = vadd.f32 %v3801, %v4196
    %v4198 = vpop.f32.mrf.mxu0
    %v4199 = vadd.f32 %v3805, %v4198
    %4200 = vmatprep.mubr.bf16.mxu0 0
    %4201 = vmatmul.mubr.bf16.gmra.mxu0 %v3725
    %v4202 = vpop.f32.mrf.mxu0
    %v4203 = vadd.f32 %v3801, %v4202
    %v4204 = vpop.f32.mrf.mxu0
    %v4205 = vadd.f32 %v3805, %v4204
    %v4206 = vpop.f32.mrf.mxu0
    %v4207 = vadd.f32 %v3801, %v4206
    %v4208 = vpop.f32.mrf.mxu0
    %v4209 = vadd.f32 %v3805, %v4208
    %4210 = vmatprep.mubr.bf16.mxu0 0
    %4211 = vmatmul.mubr.bf16.gmra.mxu0 %v3726
    %v4212 = vpop.f32.mrf.mxu0
    %v4213 = vadd.f32 %v3801, %v4212
    %v4214 = vpop.f32.mrf.mxu0
    %v4215 = vadd.f32 %v3805, %v4214
    %v4216 = vpop.f32.mrf.mxu0
    %v4217 = vadd.f32 %v3801, %v4216
    %v4218 = vpop.f32.mrf.mxu0
    %v4219 = vadd.f32 %v3805, %v4218
    %4220 = vmatprep.mubr.bf16.mxu0 0
    %4221 = vmatmul.mubr.bf16.gmra.mxu0 %v3727
    %v4222 = vpop.f32.mrf.mxu0
    %v4223 = vadd.f32 %v3801, %v4222
    %v4224 = vpop.f32.mrf.mxu0
    %v4225 = vadd.f32 %v3805, %v4224
    %v4226 = vpop.f32.mrf.mxu0
    %v4227 = vadd.f32 %v3801, %v4226
    %v4228 = vpop.f32.mrf.mxu0
    %v4229 = vadd.f32 %v3805, %v4228
    %4230 = vmatprep.mubr.bf16.mxu0 0
    %4231 = vmatmul.mubr.bf16.gmra.mxu0 %v3728
    %v4232 = vpop.f32.mrf.mxu0
    %v4233 = vadd.f32 %v3801, %v4232
    %v4234 = vpop.f32.mrf.mxu0
    %v4235 = vadd.f32 %v3805, %v4234
    %v4236 = vpop.f32.mrf.mxu0
    %v4237 = vadd.f32 %v3801, %v4236
    %v4238 = vpop.f32.mrf.mxu0
    %v4239 = vadd.f32 %v3805, %v4238
    %4240 = vmatprep.mubr.bf16.mxu0 0
    %4241 = vmatmul.mubr.bf16.gmra.mxu0 %v3729
    %v4242 = vpop.f32.mrf.mxu0
    %v4243 = vadd.f32 %v3801, %v4242
    %v4244 = vpop.f32.mrf.mxu0
    %v4245 = vadd.f32 %v3805, %v4244
    %v4246 = vpop.f32.mrf.mxu0
    %v4247 = vadd.f32 %v3801, %v4246
    %v4248 = vpop.f32.mrf.mxu0
    %v4249 = vadd.f32 %v3805, %v4248
    %4250 = vmatprep.mubr.bf16.mxu0 0
    %4251 = vmatmul.mubr.bf16.gmra.mxu0 %v3730
    %v4252 = vpop.f32.mrf.mxu0
    %v4253 = vadd.f32 %v3801, %v4252
    %v4254 = vpop.f32.mrf.mxu0
    %v4255 = vadd.f32 %v3805, %v4254
    %v4256 = vpop.f32.mrf.mxu0
    %v4257 = vadd.f32 %v3801, %v4256
    %v4258 = vpop.f32.mrf.mxu0
    %v4259 = vadd.f32 %v3805, %v4258
    %4260 = vmatprep.mubr.bf16.mxu0 0
    %4261 = vmatmul.mubr.bf16.gmra.mxu0 %v3731
    %v4262 = vpop.f32.mrf.mxu0
    %v4263 = vadd.f32 %v3801, %v4262
    %v4264 = vpop.f32.mrf.mxu0
    %v4265 = vadd.f32 %v3805, %v4264
    %v4266 = vpop.f32.mrf.mxu0
    %v4267 = vadd.f32 %v3801, %v4266
    %v4268 = vpop.f32.mrf.mxu0
    %v4269 = vadd.f32 %v3805, %v4268
    %4270 = vdwg.mxu0
    %4271 = vmatprep.subr.bf16.mxu0 %v4089
    %4272 = vmatpush1.bf16.msra.mxu0 %v4088
    %4273 = vmatprep.subr.bf16.mxu0 %v4081
    %4274 = vmatpush1.bf16.msra.mxu0 %v4080
    %4275 = vmatprep.subr.bf16.mxu0 %v4073
    %4276 = vmatpush1.bf16.msra.mxu0 %v4072
    %4277 = vmatprep.subr.bf16.mxu0 %v4065
    %4278 = vmatpush1.bf16.msra.mxu0 %v4064
    %4279 = vmatprep.subr.bf16.mxu0 %v4057
    %4280 = vmatpush1.bf16.msra.mxu0 %v4056
    %4281 = vmatprep.subr.bf16.mxu0 %v4049
    %4282 = vmatpush1.bf16.msra.mxu0 %v4048
    %4283 = vmatprep.subr.bf16.mxu0 %v4041
    %4284 = vmatpush1.bf16.msra.mxu0 %v4040
    %4285 = vmatprep.subr.bf16.mxu0 %v4033
    %4286 = vmatpush1.bf16.msra.mxu0 %v4032
    %4287 = vmatprep.subr.bf16.mxu0 0
    %4288 = vmatpush2.bf16.msra.mxu0 0
    %4289 = vmatprep.subr.bf16.mxu0 0
    %4290 = vmatpush2.bf16.msra.mxu0 0
    %4291 = vmatprep.subr.bf16.mxu0 0
    %4292 = vmatpush2.bf16.msra.mxu0 0
    %4293 = vmatprep.subr.bf16.mxu0 0
    %4294 = vmatpush2.bf16.msra.mxu0 0
    %4295 = vmatprep.subr.bf16.mxu0 0
    %4296 = vmatpush2.bf16.msra.mxu0 0
    %4297 = vmatprep.subr.bf16.mxu0 0
    %4298 = vmatpush2.bf16.msra.mxu0 0
    %4299 = vmatprep.subr.bf16.mxu0 0
    %4300 = vmatpush2.bf16.msra.mxu0 0
    %4301 = vmatprep.subr.bf16.mxu0 0
    %4302 = vmatpush2.bf16.msra.mxu0 0
    %4303 = vmatprep.mubr.bf16.mxu0 0
    %4304 = vmatmul.mubr.bf16.gmra.mxu0 %v3724
    %v4305 = vpop.f32.mrf.mxu0
    %v4306 = vadd.f32 %v3809, %v4305
    %v4307 = vpop.f32.mrf.mxu0
    %v4308 = vadd.f32 %v3813, %v4307
    %v4309 = vpop.f32.mrf.mxu0
    %v4310 = vadd.f32 %v3809, %v4309
    %v4311 = vpop.f32.mrf.mxu0
    %v4312 = vadd.f32 %v3813, %v4311
    %4313 = vmatprep.mubr.bf16.mxu0 0
    %4314 = vmatmul.mubr.bf16.gmra.mxu0 %v3725
    %v4315 = vpop.f32.mrf.mxu0
    %v4316 = vadd.f32 %v3809, %v4315
    %v4317 = vpop.f32.mrf.mxu0
    %v4318 = vadd.f32 %v3813, %v4317
    %v4319 = vpop.f32.mrf.mxu0
    %v4320 = vadd.f32 %v3809, %v4319
    %v4321 = vpop.f32.mrf.mxu0
    %v4322 = vadd.f32 %v3813, %v4321
    %4323 = vmatprep.mubr.bf16.mxu0 0
    %4324 = vmatmul.mubr.bf16.gmra.mxu0 %v3726
    %v4325 = vpop.f32.mrf.mxu0
    %v4326 = vadd.f32 %v3809, %v4325
    %v4327 = vpop.f32.mrf.mxu0
    %v4328 = vadd.f32 %v3813, %v4327
    %v4329 = vpop.f32.mrf.mxu0
    %v4330 = vadd.f32 %v3809, %v4329
    %v4331 = vpop.f32.mrf.mxu0
    %v4332 = vadd.f32 %v3813, %v4331
    %4333 = vmatprep.mubr.bf16.mxu0 0
    %4334 = vmatmul.mubr.bf16.gmra.mxu0 %v3727
    %v4335 = vpop.f32.mrf.mxu0
    %v4336 = vadd.f32 %v3809, %v4335
    %v4337 = vpop.f32.mrf.mxu0
    %v4338 = vadd.f32 %v3813, %v4337
    %v4339 = vpop.f32.mrf.mxu0
    %v4340 = vadd.f32 %v3809, %v4339
    %v4341 = vpop.f32.mrf.mxu0
    %v4342 = vadd.f32 %v3813, %v4341
    %4343 = vmatprep.mubr.bf16.mxu0 0
    %4344 = vmatmul.mubr.bf16.gmra.mxu0 %v3728
    %v4345 = vpop.f32.mrf.mxu0
    %v4346 = vadd.f32 %v3809, %v4345
    %v4347 = vpop.f32.mrf.mxu0
    %v4348 = vadd.f32 %v3813, %v4347
    %v4349 = vpop.f32.mrf.mxu0
    %v4350 = vadd.f32 %v3809, %v4349
    %v4351 = vpop.f32.mrf.mxu0
    %v4352 = vadd.f32 %v3813, %v4351
    %4353 = vmatprep.mubr.bf16.mxu0 0
    %4354 = vmatmul.mubr.bf16.gmra.mxu0 %v3729
    %v4355 = vpop.f32.mrf.mxu0
    %v4356 = vadd.f32 %v3809, %v4355
    %v4357 = vpop.f32.mrf.mxu0
    %v4358 = vadd.f32 %v3813, %v4357
    %v4359 = vpop.f32.mrf.mxu0
    %v4360 = vadd.f32 %v3809, %v4359
    %v4361 = vpop.f32.mrf.mxu0
    %v4362 = vadd.f32 %v3813, %v4361
    %4363 = vmatprep.mubr.bf16.mxu0 0
    %4364 = vmatmul.mubr.bf16.gmra.mxu0 %v3730
    %v4365 = vpop.f32.mrf.mxu0
    %v4366 = vadd.f32 %v3809, %v4365
    %v4367 = vpop.f32.mrf.mxu0
    %v4368 = vadd.f32 %v3813, %v4367
    %v4369 = vpop.f32.mrf.mxu0
    %v4370 = vadd.f32 %v3809, %v4369
    %v4371 = vpop.f32.mrf.mxu0
    %v4372 = vadd.f32 %v3813, %v4371
    %4373 = vmatprep.mubr.bf16.mxu0 0
    %4374 = vmatmul.mubr.bf16.gmra.mxu0 %v3731
    %v4375 = vpop.f32.mrf.mxu0
    %v4376 = vadd.f32 %v3809, %v4375
    %v4377 = vpop.f32.mrf.mxu0
    %v4378 = vadd.f32 %v3813, %v4377
    %v4379 = vpop.f32.mrf.mxu0
    %v4380 = vadd.f32 %v3809, %v4379
    %v4381 = vpop.f32.mrf.mxu0
    %v4382 = vadd.f32 %v3813, %v4381
    %4383 = vdwg.mxu0
    %4384 = vmatprep.subr.bf16.mxu0 %v4091
    %4385 = vmatpush1.bf16.msra.mxu0 %v4090
    %4386 = vmatprep.subr.bf16.mxu0 %v4083
    %4387 = vmatpush1.bf16.msra.mxu0 %v4082
    %4388 = vmatprep.subr.bf16.mxu0 %v4075
    %4389 = vmatpush1.bf16.msra.mxu0 %v4074
    %4390 = vmatprep.subr.bf16.mxu0 %v4067
    %4391 = vmatpush1.bf16.msra.mxu0 %v4066
    %4392 = vmatprep.subr.bf16.mxu0 %v4059
    %4393 = vmatpush1.bf16.msra.mxu0 %v4058
    %4394 = vmatprep.subr.bf16.mxu0 %v4051
    %4395 = vmatpush1.bf16.msra.mxu0 %v4050
    %4396 = vmatprep.subr.bf16.mxu0 %v4043
    %4397 = vmatpush1.bf16.msra.mxu0 %v4042
    %4398 = vmatprep.subr.bf16.mxu0 %v4035
    %4399 = vmatpush1.bf16.msra.mxu0 %v4034
    %4400 = vmatprep.subr.bf16.mxu0 0
    %4401 = vmatpush2.bf16.msra.mxu0 0
    %4402 = vmatprep.subr.bf16.mxu0 0
    %4403 = vmatpush2.bf16.msra.mxu0 0
    %4404 = vmatprep.subr.bf16.mxu0 0
    %4405 = vmatpush2.bf16.msra.mxu0 0
    %4406 = vmatprep.subr.bf16.mxu0 0
    %4407 = vmatpush2.bf16.msra.mxu0 0
    %4408 = vmatprep.subr.bf16.mxu0 0
    %4409 = vmatpush2.bf16.msra.mxu0 0
    %4410 = vmatprep.subr.bf16.mxu0 0
    %4411 = vmatpush2.bf16.msra.mxu0 0
    %4412 = vmatprep.subr.bf16.mxu0 0
    %4413 = vmatpush2.bf16.msra.mxu0 0
    %4414 = vmatprep.subr.bf16.mxu0 0
    %4415 = vmatpush2.bf16.msra.mxu0 0
    %4416 = vmatprep.mubr.bf16.mxu0 0
    %4417 = vmatmul.mubr.bf16.gmra.mxu0 %v3724
    %v4418 = vpop.f32.mrf.mxu0
    %v4419 = vadd.f32 %v3817, %v4418
    %v4420 = vpop.f32.mrf.mxu0
    %v4421 = vadd.f32 %v3821, %v4420
    %v4422 = vpop.f32.mrf.mxu0
    %v4423 = vadd.f32 %v3817, %v4422
    %v4424 = vpop.f32.mrf.mxu0
    %v4425 = vadd.f32 %v3821, %v4424
    %4426 = vmatprep.mubr.bf16.mxu0 0
    %4427 = vmatmul.mubr.bf16.gmra.mxu0 %v3725
    %v4428 = vpop.f32.mrf.mxu0
    %v4429 = vadd.f32 %v3817, %v4428
    %v4430 = vpop.f32.mrf.mxu0
    %v4431 = vadd.f32 %v3821, %v4430
    %v4432 = vpop.f32.mrf.mxu0
    %v4433 = vadd.f32 %v3817, %v4432
    %v4434 = vpop.f32.mrf.mxu0
    %v4435 = vadd.f32 %v3821, %v4434
    %4436 = vmatprep.mubr.bf16.mxu0 0
    %4437 = vmatmul.mubr.bf16.gmra.mxu0 %v3726
    %v4438 = vpop.f32.mrf.mxu0
    %v4439 = vadd.f32 %v3817, %v4438
    %v4440 = vpop.f32.mrf.mxu0
    %v4441 = vadd.f32 %v3821, %v4440
    %v4442 = vpop.f32.mrf.mxu0
    %v4443 = vadd.f32 %v3817, %v4442
    %v4444 = vpop.f32.mrf.mxu0
    %v4445 = vadd.f32 %v3821, %v4444
    %4446 = vmatprep.mubr.bf16.mxu0 0
    %4447 = vmatmul.mubr.bf16.gmra.mxu0 %v3727
    %v4448 = vpop.f32.mrf.mxu0
    %v4449 = vadd.f32 %v3817, %v4448
    %v4450 = vpop.f32.mrf.mxu0
    %v4451 = vadd.f32 %v3821, %v4450
    %v4452 = vpop.f32.mrf.mxu0
    %v4453 = vadd.f32 %v3817, %v4452
    %v4454 = vpop.f32.mrf.mxu0
    %v4455 = vadd.f32 %v3821, %v4454
    %4456 = vmatprep.mubr.bf16.mxu0 0
    %4457 = vmatmul.mubr.bf16.gmra.mxu0 %v3728
    %v4458 = vpop.f32.mrf.mxu0
    %v4459 = vadd.f32 %v3817, %v4458
    %v4460 = vpop.f32.mrf.mxu0
    %v4461 = vadd.f32 %v3821, %v4460
    %v4462 = vpop.f32.mrf.mxu0
    %v4463 = vadd.f32 %v3817, %v4462
    %v4464 = vpop.f32.mrf.mxu0
    %v4465 = vadd.f32 %v3821, %v4464
    %4466 = vmatprep.mubr.bf16.mxu0 0
    %4467 = vmatmul.mubr.bf16.gmra.mxu0 %v3729
    %v4468 = vpop.f32.mrf.mxu0
    %v4469 = vadd.f32 %v3817, %v4468
    %v4470 = vpop.f32.mrf.mxu0
    %v4471 = vadd.f32 %v3821, %v4470
    %v4472 = vpop.f32.mrf.mxu0
    %v4473 = vadd.f32 %v3817, %v4472
    %v4474 = vpop.f32.mrf.mxu0
    %v4475 = vadd.f32 %v3821, %v4474
    %4476 = vmatprep.mubr.bf16.mxu0 0
    %4477 = vmatmul.mubr.bf16.gmra.mxu0 %v3730
    %v4478 = vpop.f32.mrf.mxu0
    %v4479 = vadd.f32 %v3817, %v4478
    %v4480 = vpop.f32.mrf.mxu0
    %v4481 = vadd.f32 %v3821, %v4480
    %v4482 = vpop.f32.mrf.mxu0
    %v4483 = vadd.f32 %v3817, %v4482
    %v4484 = vpop.f32.mrf.mxu0
    %v4485 = vadd.f32 %v3821, %v4484
    %4486 = vmatprep.mubr.bf16.mxu0 0
    %4487 = vmatmul.mubr.bf16.gmra.mxu0 %v3731
    %v4488 = vpop.f32.mrf.mxu0
    %v4489 = vadd.f32 %v3817, %v4488
    %v4490 = vpop.f32.mrf.mxu0
    %v4491 = vadd.f32 %v3821, %v4490
    %v4492 = vpop.f32.mrf.mxu0
    %v4493 = vadd.f32 %v3817, %v4492
    %v4494 = vpop.f32.mrf.mxu0
    %v4495 = vadd.f32 %v3821, %v4494
    %4496 = vdwg.mxu0
    %4497 = vmatprep.subr.bf16.mxu0 %v4093
    %4498 = vmatpush1.bf16.msra.mxu0 %v4092
    %4499 = vmatprep.subr.bf16.mxu0 %v4085
    %4500 = vmatpush1.bf16.msra.mxu0 %v4084
    %4501 = vmatprep.subr.bf16.mxu0 %v4077
    %4502 = vmatpush1.bf16.msra.mxu0 %v4076
    %4503 = vmatprep.subr.bf16.mxu0 %v4069
    %4504 = vmatpush1.bf16.msra.mxu0 %v4068
    %4505 = vmatprep.subr.bf16.mxu0 %v4061
    %4506 = vmatpush1.bf16.msra.mxu0 %v4060
    %4507 = vmatprep.subr.bf16.mxu0 %v4053
    %4508 = vmatpush1.bf16.msra.mxu0 %v4052
    %4509 = vmatprep.subr.bf16.mxu0 %v4045
    %4510 = vmatpush1.bf16.msra.mxu0 %v4044
    %4511 = vmatprep.subr.bf16.mxu0 %v4037
    %4512 = vmatpush1.bf16.msra.mxu0 %v4036
    %4513 = vmatprep.subr.bf16.mxu0 0
    %4514 = vmatpush2.bf16.msra.mxu0 0
    %4515 = vmatprep.subr.bf16.mxu0 0
    %4516 = vmatpush2.bf16.msra.mxu0 0
    %4517 = vmatprep.subr.bf16.mxu0 0
    %4518 = vmatpush2.bf16.msra.mxu0 0
    %4519 = vmatprep.subr.bf16.mxu0 0
    %4520 = vmatpush2.bf16.msra.mxu0 0
    %4521 = vmatprep.subr.bf16.mxu0 0
    %4522 = vmatpush2.bf16.msra.mxu0 0
    %4523 = vmatprep.subr.bf16.mxu0 0
    %4524 = vmatpush2.bf16.msra.mxu0 0
    %4525 = vmatprep.subr.bf16.mxu0 0
    %4526 = vmatpush2.bf16.msra.mxu0 0
    %4527 = vmatprep.subr.bf16.mxu0 0
    %4528 = vmatpush2.bf16.msra.mxu0 0
    %4529 = vmatprep.mubr.bf16.mxu0 0
    %4530 = vmatmul.mubr.bf16.gmra.mxu0 %v3724
    %v4531 = vpop.f32.mrf.mxu0
    %v4532 = vadd.f32 %v3825, %v4531
    %v4533 = vpop.f32.mrf.mxu0
    %v4534 = vadd.f32 %v3829, %v4533
    %v4535 = vpop.f32.mrf.mxu0
    %v4536 = vadd.f32 %v3825, %v4535
    %v4537 = vpop.f32.mrf.mxu0
    %v4538 = vadd.f32 %v3829, %v4537
    %4539 = vmatprep.mubr.bf16.mxu0 0
    %4540 = vmatmul.mubr.bf16.gmra.mxu0 %v3725
    %v4541 = vpop.f32.mrf.mxu0
    %v4542 = vadd.f32 %v3825, %v4541
    %v4543 = vpop.f32.mrf.mxu0
    %v4544 = vadd.f32 %v3829, %v4543
    %v4545 = vpop.f32.mrf.mxu0
    %v4546 = vadd.f32 %v3825, %v4545
    %v4547 = vpop.f32.mrf.mxu0
    %v4548 = vadd.f32 %v3829, %v4547
    %4549 = vmatprep.mubr.bf16.mxu0 0
    %4550 = vmatmul.mubr.bf16.gmra.mxu0 %v3726
    %v4551 = vpop.f32.mrf.mxu0
    %v4552 = vadd.f32 %v3825, %v4551
    %v4553 = vpop.f32.mrf.mxu0
    %v4554 = vadd.f32 %v3829, %v4553
    %v4555 = vpop.f32.mrf.mxu0
    %v4556 = vadd.f32 %v3825, %v4555
    %v4557 = vpop.f32.mrf.mxu0
    %v4558 = vadd.f32 %v3829, %v4557
    %4559 = vmatprep.mubr.bf16.mxu0 0
    %4560 = vmatmul.mubr.bf16.gmra.mxu0 %v3727
    %v4561 = vpop.f32.mrf.mxu0
    %v4562 = vadd.f32 %v3825, %v4561
    %v4563 = vpop.f32.mrf.mxu0
    %v4564 = vadd.f32 %v3829, %v4563
    %v4565 = vpop.f32.mrf.mxu0
    %v4566 = vadd.f32 %v3825, %v4565
    %v4567 = vpop.f32.mrf.mxu0
    %v4568 = vadd.f32 %v3829, %v4567
    %4569 = vmatprep.mubr.bf16.mxu0 0
    %4570 = vmatmul.mubr.bf16.gmra.mxu0 %v3728
    %v4571 = vpop.f32.mrf.mxu0
    %v4572 = vadd.f32 %v3825, %v4571
    %v4573 = vpop.f32.mrf.mxu0
    %v4574 = vadd.f32 %v3829, %v4573
    %v4575 = vpop.f32.mrf.mxu0
    %v4576 = vadd.f32 %v3825, %v4575
    %v4577 = vpop.f32.mrf.mxu0
    %v4578 = vadd.f32 %v3829, %v4577
    %4579 = vmatprep.mubr.bf16.mxu0 0
    %4580 = vmatmul.mubr.bf16.gmra.mxu0 %v3729
    %v4581 = vpop.f32.mrf.mxu0
    %v4582 = vadd.f32 %v3825, %v4581
    %v4583 = vpop.f32.mrf.mxu0
    %v4584 = vadd.f32 %v3829, %v4583
    %v4585 = vpop.f32.mrf.mxu0
    %v4586 = vadd.f32 %v3825, %v4585
    %v4587 = vpop.f32.mrf.mxu0
    %v4588 = vadd.f32 %v3829, %v4587
    %4589 = vmatprep.mubr.bf16.mxu0 0
    %4590 = vmatmul.mubr.bf16.gmra.mxu0 %v3730
    %v4591 = vpop.f32.mrf.mxu0
    %v4592 = vadd.f32 %v3825, %v4591
    %v4593 = vpop.f32.mrf.mxu0
    %v4594 = vadd.f32 %v3829, %v4593
    %v4595 = vpop.f32.mrf.mxu0
    %v4596 = vadd.f32 %v3825, %v4595
    %v4597 = vpop.f32.mrf.mxu0
    %v4598 = vadd.f32 %v3829, %v4597
    %4599 = vmatprep.mubr.bf16.mxu0 0
    %4600 = vmatmul.mubr.bf16.gmra.mxu0 %v3731
    %v4601 = vpop.f32.mrf.mxu0
    %v4602 = vadd.f32 %v3825, %v4601
    %v4603 = vpop.f32.mrf.mxu0
    %v4604 = vadd.f32 %v3829, %v4603
    %v4605 = vpop.f32.mrf.mxu0
    %v4606 = vadd.f32 %v3825, %v4605
    %v4607 = vpop.f32.mrf.mxu0
    %v4608 = vadd.f32 %v3829, %v4607
    %4609 = vdwg.mxu0
    %v4610 = vlaneseq
    %v4611 = vshrl.u32 %v4610, 7
    %v4612 = vadd.s32 %v4611, 8
    %v4613 = vadd.s32 %v4611, 16
    %v4614 = vadd.s32 %v4611, 24
    %v4615 = vadd.s32 %v4611, 32
    %v4616 = vadd.s32 %v4611, 40
    %v4617 = vadd.s32 %v4611, 48
    %v4618 = vadd.s32 %v4611, 56
    %v4619 = vadd.s32 %v4611, 64
    %v4620 = vadd.s32 %v4611, 72
    %v4621 = vadd.s32 %v4611, 80
    %v4622 = vadd.s32 %v4611, 88
    %v4623 = vadd.s32 %v4611, 96
    %v4624 = vadd.s32 %v4611, 104
    %v4625 = vadd.s32 %v4611, 112
    %v4626 = vadd.s32 %v4611, 120
    %s4627 = smul.u32 0, 128
    %v4628 = vstv %s4627
    %v4629 = vadd.s32 %v4611, %v4628
    %v4630 = vadd.s32 %v4612, %v4628
    %v4631 = vadd.s32 %v4613, %v4628
    %v4632 = vadd.s32 %v4614, %v4628
    %v4633 = vadd.s32 %v4615, %v4628
    %v4634 = vadd.s32 %v4616, %v4628
    %v4635 = vadd.s32 %v4617, %v4628
    %v4636 = vadd.s32 %v4618, %v4628
    %v4637 = vadd.s32 %v4619, %v4628
    %v4638 = vadd.s32 %v4620, %v4628
    %v4639 = vadd.s32 %v4621, %v4628
    %v4640 = vadd.s32 %v4622, %v4628
    %v4641 = vadd.s32 %v4623, %v4628
    %v4642 = vadd.s32 %v4624, %v4628
    %v4643 = vadd.s32 %v4625, %v4628
    %v4644 = vadd.s32 %v4626, %v4628
    %vm4645 = vcmp.lt.s32.totalorder %v4629, 2
    %vm4646 = vcmp.lt.s32.totalorder %v4630, 2
    %vm4647 = vcmp.lt.s32.totalorder %v4631, 2
    %vm4648 = vcmp.lt.s32.totalorder %v4632, 2
    %vm4649 = vcmp.lt.s32.totalorder %v4633, 2
    %vm4650 = vcmp.lt.s32.totalorder %v4634, 2
    %vm4651 = vcmp.lt.s32.totalorder %v4635, 2
    %vm4652 = vcmp.lt.s32.totalorder %v4636, 2
    %vm4653 = vcmp.lt.s32.totalorder %v4637, 2
    %vm4654 = vcmp.lt.s32.totalorder %v4638, 2
    %vm4655 = vcmp.lt.s32.totalorder %v4639, 2
    %vm4656 = vcmp.lt.s32.totalorder %v4640, 2
    %vm4657 = vcmp.lt.s32.totalorder %v4641, 2
    %vm4658 = vcmp.lt.s32.totalorder %v4642, 2
    %vm4659 = vcmp.lt.s32.totalorder %v4643, 2
    %vm4660 = vcmp.lt.s32.totalorder %v4644, 2
    %v4661 = vsub.f32 %v3662, %v2644
    %v4662 = vsub.f32 %v3665, %v2645
    %v4663 = vsub.f32 %v3670, %v2646
    %v4664 = vsub.f32 %v3673, %v2647
    %v4665 = vsub.f32 %v3678, %v2648
    %v4666 = vsub.f32 %v3681, %v2649
    %v4667 = vsub.f32 %v3686, %v2650
    %v4668 = vsub.f32 %v3689, %v2651
    %v4669 = vsub.f32 %v3694, %v2652
    %v4670 = vsub.f32 %v3697, %v2653
    %v4671 = vsub.f32 %v3702, %v2654
    %v4672 = vsub.f32 %v3705, %v2655
    %v4673 = vsub.f32 %v3710, %v2656
    %v4674 = vsub.f32 %v3713, %v2657
    %v4675 = vsub.f32 %v3718, %v2658
    %v4676 = vsub.f32 %v3721, %v2659
    %v4677 = vsel %vm4645, 1, 0
    %v4678 = vsel %vm4646, 1, 0
    %v4679 = vsel %vm4647, 1, 0
    %v4680 = vsel %vm4648, 1, 0
    %v4681 = vsel %vm4649, 1, 0
    %v4682 = vsel %vm4650, 1, 0
    %v4683 = vsel %vm4651, 1, 0
    %v4684 = vsel %vm4652, 1, 0
    %v4685 = vsel %vm4653, 1, 0
    %v4686 = vsel %vm4654, 1, 0
    %v4687 = vsel %vm4655, 1, 0
    %v4688 = vsel %vm4656, 1, 0
    %v4689 = vsel %vm4657, 1, 0
    %v4690 = vsel %vm4658, 1, 0
    %v4691 = vsel %vm4659, 1, 0
    %v4692 = vsel %vm4660, 1, 0
    %vm4693 = vcmp.eq.s32.totalorder %v4677, 1
    %vm4694 = vcmp.eq.s32.totalorder %v4678, 1
    %vm4695 = vcmp.eq.s32.totalorder %v4679, 1
    %vm4696 = vcmp.eq.s32.totalorder %v4680, 1
    %vm4697 = vcmp.eq.s32.totalorder %v4681, 1
    %vm4698 = vcmp.eq.s32.totalorder %v4682, 1
    %vm4699 = vcmp.eq.s32.totalorder %v4683, 1
    %vm4700 = vcmp.eq.s32.totalorder %v4684, 1
    %vm4701 = vcmp.eq.s32.totalorder %v4685, 1
    %vm4702 = vcmp.eq.s32.totalorder %v4686, 1
    %vm4703 = vcmp.eq.s32.totalorder %v4687, 1
    %vm4704 = vcmp.eq.s32.totalorder %v4688, 1
    %vm4705 = vcmp.eq.s32.totalorder %v4689, 1
    %vm4706 = vcmp.eq.s32.totalorder %v4690, 1
    %vm4707 = vcmp.eq.s32.totalorder %v4691, 1
    %vm4708 = vcmp.eq.s32.totalorder %v4692, 1
    %v4709 = vsel %vm4693, %v4661, 0.0
    %v4710 = vsel %vm4694, %v4662, 0.0
    %v4711 = vsel %vm4695, %v4663, 0.0
    %v4712 = vsel %vm4696, %v4664, 0.0
    %v4713 = vsel %vm4697, %v4665, 0.0
    %v4714 = vsel %vm4698, %v4666, 0.0
    %v4715 = vsel %vm4699, %v4667, 0.0
    %v4716 = vsel %vm4700, %v4668, 0.0
    %v4717 = vsel %vm4701, %v4669, 0.0
    %v4718 = vsel %vm4702, %v4670, 0.0
    %v4719 = vsel %vm4703, %v4671, 0.0
    %v4720 = vsel %vm4704, %v4672, 0.0
    %v4721 = vsel %vm4705, %v4673, 0.0
    %v4722 = vsel %vm4706, %v4674, 0.0
    %v4723 = vsel %vm4707, %v4675, 0.0
    %v4724 = vsel %vm4708, %v4676, 0.0
    %v4725 = vsub.f32 %v4193, %v393
    %v4726 = vsub.f32 %v4195, %v394
    %v4727 = vsub.f32 %v4306, %v395
    %v4728 = vsub.f32 %v4308, %v396
    %v4729 = vsub.f32 %v4419, %v429
    %v4730 = vsub.f32 %v4421, %v430
    %v4731 = vsub.f32 %v4532, %v431
    %v4732 = vsub.f32 %v4534, %v432
    %v4733 = vsub.f32 %v4197, %v465
    %v4734 = vsub.f32 %v4199, %v466
    %v4735 = vsub.f32 %v4310, %v467
    %v4736 = vsub.f32 %v4312, %v468
    %v4737 = vsub.f32 %v4423, %v501
    %v4738 = vsub.f32 %v4425, %v502
    %v4739 = vsub.f32 %v4536, %v503
    %v4740 = vsub.f32 %v4538, %v504
    %v4741 = vsub.f32 %v4203, %v537
    %v4742 = vsub.f32 %v4205, %v538
    %v4743 = vsub.f32 %v4316, %v539
    %v4744 = vsub.f32 %v4318, %v540
    %v4745 = vsub.f32 %v4429, %v573
    %v4746 = vsub.f32 %v4431, %v574
    %v4747 = vsub.f32 %v4542, %v575
    %v4748 = vsub.f32 %v4544, %v576
    %v4749 = vsub.f32 %v4207, %v609
    %v4750 = vsub.f32 %v4209, %v610
    %v4751 = vsub.f32 %v4320, %v611
    %v4752 = vsub.f32 %v4322, %v612
    %v4753 = vsub.f32 %v4433, %v645
    %v4754 = vsub.f32 %v4435, %v646
    %v4755 = vsub.f32 %v4546, %v647
    %v4756 = vsub.f32 %v4548, %v648
    %v4757 = vsub.f32 %v4213, %v681
    %v4758 = vsub.f32 %v4215, %v682
    %v4759 = vsub.f32 %v4326, %v683
    %v4760 = vsub.f32 %v4328, %v684
    %v4761 = vsub.f32 %v4439, %v717
    %v4762 = vsub.f32 %v4441, %v718
    %v4763 = vsub.f32 %v4552, %v719
    %v4764 = vsub.f32 %v4554, %v720
    %v4765 = vsub.f32 %v4217, %v753
    %v4766 = vsub.f32 %v4219, %v754
    %v4767 = vsub.f32 %v4330, %v755
    %v4768 = vsub.f32 %v4332, %v756
    %v4769 = vsub.f32 %v4443, %v789
    %v4770 = vsub.f32 %v4445, %v790
    %v4771 = vsub.f32 %v4556, %v791
    %v4772 = vsub.f32 %v4558, %v792
    %v4773 = vsub.f32 %v4223, %v825
    %v4774 = vsub.f32 %v4225, %v826
    %v4775 = vsub.f32 %v4336, %v827
    %v4776 = vsub.f32 %v4338, %v828
    %v4777 = vsub.f32 %v4449, %v861
    %v4778 = vsub.f32 %v4451, %v862
    %v4779 = vsub.f32 %v4562, %v863
    %v4780 = vsub.f32 %v4564, %v864
    %v4781 = vsub.f32 %v4227, %v897
    %v4782 = vsub.f32 %v4229, %v898
    %v4783 = vsub.f32 %v4340, %v899
    %v4784 = vsub.f32 %v4342, %v900
    %v4785 = vsub.f32 %v4453, %v933
    %v4786 = vsub.f32 %v4455, %v934
    %v4787 = vsub.f32 %v4566, %v935
    %v4788 = vsub.f32 %v4568, %v936
    %v4789 = vsub.f32 %v4233, %v969
    %v4790 = vsub.f32 %v4235, %v970
    %v4791 = vsub.f32 %v4346, %v971
    %v4792 = vsub.f32 %v4348, %v972
    %v4793 = vsub.f32 %v4459, %v1005
    %v4794 = vsub.f32 %v4461, %v1006
    %v4795 = vsub.f32 %v4572, %v1007
    %v4796 = vsub.f32 %v4574, %v1008
    %v4797 = vsub.f32 %v4237, %v1041
    %v4798 = vsub.f32 %v4239, %v1042
    %v4799 = vsub.f32 %v4350, %v1043
    %v4800 = vsub.f32 %v4352, %v1044
    %v4801 = vsub.f32 %v4463, %v1077
    %v4802 = vsub.f32 %v4465, %v1078
    %v4803 = vsub.f32 %v4576, %v1079
    %v4804 = vsub.f32 %v4578, %v1080
    %v4805 = vsub.f32 %v4243, %v1113
    %v4806 = vsub.f32 %v4245, %v1114
    %v4807 = vsub.f32 %v4356, %v1115
    %v4808 = vsub.f32 %v4358, %v1116
    %v4809 = vsub.f32 %v4469, %v1149
    %v4810 = vsub.f32 %v4471, %v1150
    %v4811 = vsub.f32 %v4582, %v1151
    %v4812 = vsub.f32 %v4584, %v1152
    %v4813 = vsub.f32 %v4247, %v1185
    %v4814 = vsub.f32 %v4249, %v1186
    %v4815 = vsub.f32 %v4360, %v1187
    %v4816 = vsub.f32 %v4362, %v1188
    %v4817 = vsub.f32 %v4473, %v1221
    %v4818 = vsub.f32 %v4475, %v1222
    %v4819 = vsub.f32 %v4586, %v1223
    %v4820 = vsub.f32 %v4588, %v1224
    %v4821 = vsub.f32 %v4253, %v1257
    %v4822 = vsub.f32 %v4255, %v1258
    %v4823 = vsub.f32 %v4366, %v1259
    %v4824 = vsub.f32 %v4368, %v1260
    %v4825 = vsub.f32 %v4479, %v1293
    %v4826 = vsub.f32 %v4481, %v1294
    %v4827 = vsub.f32 %v4592, %v1295
    %v4828 = vsub.f32 %v4594, %v1296
    %v4829 = vsub.f32 %v4257, %v1329
    %v4830 = vsub.f32 %v4259, %v1330
    %v4831 = vsub.f32 %v4370, %v1331
    %v4832 = vsub.f32 %v4372, %v1332
    %v4833 = vsub.f32 %v4483, %v1365
    %v4834 = vsub.f32 %v4485, %v1366
    %v4835 = vsub.f32 %v4596, %v1367
    %v4836 = vsub.f32 %v4598, %v1368
    %v4837 = vsub.f32 %v4263, %v1401
    %v4838 = vsub.f32 %v4265, %v1402
    %v4839 = vsub.f32 %v4376, %v1403
    %v4840 = vsub.f32 %v4378, %v1404
    %v4841 = vsub.f32 %v4489, %v1437
    %v4842 = vsub.f32 %v4491, %v1438
    %v4843 = vsub.f32 %v4602, %v1439
    %v4844 = vsub.f32 %v4604, %v1440
    %v4845 = vsub.f32 %v4267, %v1473
    %v4846 = vsub.f32 %v4269, %v1474
    %v4847 = vsub.f32 %v4380, %v1475
    %v4848 = vsub.f32 %v4382, %v1476
    %v4849 = vsub.f32 %v4493, %v1509
    %v4850 = vsub.f32 %v4495, %v1510
    %v4851 = vsub.f32 %v4606, %v1511
    %v4852 = vsub.f32 %v4608, %v1512
    %v4853 = vsel %vm4693, %v4725, 0.0
    %v4854 = vsel %vm4693, %v4726, 0.0
    %v4855 = vsel %vm4693, %v4727, 0.0
    %v4856 = vsel %vm4693, %v4728, 0.0
    %v4857 = vsel %vm4693, %v4729, 0.0
    %v4858 = vsel %vm4693, %v4730, 0.0
    %v4859 = vsel %vm4693, %v4731, 0.0
    %v4860 = vsel %vm4693, %v4732, 0.0
    %v4861 = vsel %vm4694, %v4733, 0.0
    %v4862 = vsel %vm4694, %v4734, 0.0
    %v4863 = vsel %vm4694, %v4735, 0.0
    %v4864 = vsel %vm4694, %v4736, 0.0
    %v4865 = vsel %vm4694, %v4737, 0.0
    %v4866 = vsel %vm4694, %v4738, 0.0
    %v4867 = vsel %vm4694, %v4739, 0.0
    %v4868 = vsel %vm4694, %v4740, 0.0
    %v4869 = vsel %vm4695, %v4741, 0.0
    %v4870 = vsel %vm4695, %v4742, 0.0
    %v4871 = vsel %vm4695, %v4743, 0.0
    %v4872 = vsel %vm4695, %v4744, 0.0
    %v4873 = vsel %vm4695, %v4745, 0.0
    %v4874 = vsel %vm4695, %v4746, 0.0
    %v4875 = vsel %vm4695, %v4747, 0.0
    %v4876 = vsel %vm4695, %v4748, 0.0
    %v4877 = vsel %vm4696, %v4749, 0.0
    %v4878 = vsel %vm4696, %v4750, 0.0
    %v4879 = vsel %vm4696, %v4751, 0.0
    %v4880 = vsel %vm4696, %v4752, 0.0
    %v4881 = vsel %vm4696, %v4753, 0.0
    %v4882 = vsel %vm4696, %v4754, 0.0
    %v4883 = vsel %vm4696, %v4755, 0.0
    %v4884 = vsel %vm4696, %v4756, 0.0
    %v4885 = vsel %vm4697, %v4757, 0.0
    %v4886 = vsel %vm4697, %v4758, 0.0
    %v4887 = vsel %vm4697, %v4759, 0.0
    %v4888 = vsel %vm4697, %v4760, 0.0
    %v4889 = vsel %vm4697, %v4761, 0.0
    %v4890 = vsel %vm4697, %v4762, 0.0
    %v4891 = vsel %vm4697, %v4763, 0.0
    %v4892 = vsel %vm4697, %v4764, 0.0
    %v4893 = vsel %vm4698, %v4765, 0.0
    %v4894 = vsel %vm4698, %v4766, 0.0
    %v4895 = vsel %vm4698, %v4767, 0.0
    %v4896 = vsel %vm4698, %v4768, 0.0
    %v4897 = vsel %vm4698, %v4769, 0.0
    %v4898 = vsel %vm4698, %v4770, 0.0
    %v4899 = vsel %vm4698, %v4771, 0.0
    %v4900 = vsel %vm4698, %v4772, 0.0
    %v4901 = vsel %vm4699, %v4773, 0.0
    %v4902 = vsel %vm4699, %v4774, 0.0
    %v4903 = vsel %vm4699, %v4775, 0.0
    %v4904 = vsel %vm4699, %v4776, 0.0
    %v4905 = vsel %vm4699, %v4777, 0.0
    %v4906 = vsel %vm4699, %v4778, 0.0
    %v4907 = vsel %vm4699, %v4779, 0.0
    %v4908 = vsel %vm4699, %v4780, 0.0
    %v4909 = vsel %vm4700, %v4781, 0.0
    %v4910 = vsel %vm4700, %v4782, 0.0
    %v4911 = vsel %vm4700, %v4783, 0.0
    %v4912 = vsel %vm4700, %v4784, 0.0
    %v4913 = vsel %vm4700, %v4785, 0.0
    %v4914 = vsel %vm4700, %v4786, 0.0
    %v4915 = vsel %vm4700, %v4787, 0.0
    %v4916 = vsel %vm4700, %v4788, 0.0
    %v4917 = vsel %vm4701, %v4789, 0.0
    %v4918 = vsel %vm4701, %v4790, 0.0
    %v4919 = vsel %vm4701, %v4791, 0.0
    %v4920 = vsel %vm4701, %v4792, 0.0
    %v4921 = vsel %vm4701, %v4793, 0.0
    %v4922 = vsel %vm4701, %v4794, 0.0
    %v4923 = vsel %vm4701, %v4795, 0.0
    %v4924 = vsel %vm4701, %v4796, 0.0
    %v4925 = vsel %vm4702, %v4797, 0.0
    %v4926 = vsel %vm4702, %v4798, 0.0
    %v4927 = vsel %vm4702, %v4799, 0.0
    %v4928 = vsel %vm4702, %v4800, 0.0
    %v4929 = vsel %vm4702, %v4801, 0.0
    %v4930 = vsel %vm4702, %v4802, 0.0
    %v4931 = vsel %vm4702, %v4803, 0.0
    %v4932 = vsel %vm4702, %v4804, 0.0
    %v4933 = vsel %vm4703, %v4805, 0.0
    %v4934 = vsel %vm4703, %v4806, 0.0
    %v4935 = vsel %vm4703, %v4807, 0.0
    %v4936 = vsel %vm4703, %v4808, 0.0
    %v4937 = vsel %vm4703, %v4809, 0.0
    %v4938 = vsel %vm4703, %v4810, 0.0
    %v4939 = vsel %vm4703, %v4811, 0.0
    %v4940 = vsel %vm4703, %v4812, 0.0
    %v4941 = vsel %vm4704, %v4813, 0.0
    %v4942 = vsel %vm4704, %v4814, 0.0
    %v4943 = vsel %vm4704, %v4815, 0.0
    %v4944 = vsel %vm4704, %v4816, 0.0
    %v4945 = vsel %vm4704, %v4817, 0.0
    %v4946 = vsel %vm4704, %v4818, 0.0
    %v4947 = vsel %vm4704, %v4819, 0.0
    %v4948 = vsel %vm4704, %v4820, 0.0
    %v4949 = vsel %vm4705, %v4821, 0.0
    %v4950 = vsel %vm4705, %v4822, 0.0
    %v4951 = vsel %vm4705, %v4823, 0.0
    %v4952 = vsel %vm4705, %v4824, 0.0
    %v4953 = vsel %vm4705, %v4825, 0.0
    %v4954 = vsel %vm4705, %v4826, 0.0
    %v4955 = vsel %vm4705, %v4827, 0.0
    %v4956 = vsel %vm4705, %v4828, 0.0
    %v4957 = vsel %vm4706, %v4829, 0.0
    %v4958 = vsel %vm4706, %v4830, 0.0
    %v4959 = vsel %vm4706, %v4831, 0.0
    %v4960 = vsel %vm4706, %v4832, 0.0
    %v4961 = vsel %vm4706, %v4833, 0.0
    %v4962 = vsel %vm4706, %v4834, 0.0
    %v4963 = vsel %vm4706, %v4835, 0.0
    %v4964 = vsel %vm4706, %v4836, 0.0
    %v4965 = vsel %vm4707, %v4837, 0.0
    %v4966 = vsel %vm4707, %v4838, 0.0
    %v4967 = vsel %vm4707, %v4839, 0.0
    %v4968 = vsel %vm4707, %v4840, 0.0
    %v4969 = vsel %vm4707, %v4841, 0.0
    %v4970 = vsel %vm4707, %v4842, 0.0
    %v4971 = vsel %vm4707, %v4843, 0.0
    %v4972 = vsel %vm4707, %v4844, 0.0
    %v4973 = vsel %vm4708, %v4845, 0.0
    %v4974 = vsel %vm4708, %v4846, 0.0
    %v4975 = vsel %vm4708, %v4847, 0.0
    %v4976 = vsel %vm4708, %v4848, 0.0
    %v4977 = vsel %vm4708, %v4849, 0.0
    %v4978 = vsel %vm4708, %v4850, 0.0
    %v4979 = vsel %vm4708, %v4851, 0.0
    %v4980 = vsel %vm4708, %v4852, 0.0
    %4981 = vst [vmem:[#allocation2] sm:$0xff] %v3662
    %4982 = vst [vmem:[#allocation2 + $0x8] sm:$0xff] %v3665
    %4983 = vst [vmem:[#allocation2 + $0x10] sm:$0xff] %v3670
    %4984 = vst [vmem:[#allocation2 + $0x18] sm:$0xff] %v3673
    %4985 = vst [vmem:[#allocation2 + $0x20] sm:$0xff] %v3678
    %4986 = vst [vmem:[#allocation2 + $0x28] sm:$0xff] %v3681
    %4987 = vst [vmem:[#allocation2 + $0x30] sm:$0xff] %v3686
    %4988 = vst [vmem:[#allocation2 + $0x38] sm:$0xff] %v3689
    %4989 = vst [vmem:[#allocation2 + $0x40] sm:$0xff] %v3694
    %4990 = vst [vmem:[#allocation2 + $0x48] sm:$0xff] %v3697
    %4991 = vst [vmem:[#allocation2 + $0x50] sm:$0xff] %v3702
    %4992 = vst [vmem:[#allocation2 + $0x58] sm:$0xff] %v3705
    %4993 = vst [vmem:[#allocation2 + $0x60] sm:$0xff] %v3710
    %4994 = vst [vmem:[#allocation2 + $0x68] sm:$0xff] %v3713
    %4995 = vst [vmem:[#allocation2 + $0x70] sm:$0xff] %v3718
    %4996 = vst [vmem:[#allocation2 + $0x78] sm:$0xff] %v3721
    %v4997 = vpack.c.bf16 %v4197, %v4193
    %v4998 = vpack.c.bf16 %v4199, %v4195
    %v4999 = vpack.c.bf16 %v4310, %v4306
    %v5000 = vpack.c.bf16 %v4312, %v4308
    %v5001 = vpack.c.bf16 %v4423, %v4419
    %v5002 = vpack.c.bf16 %v4425, %v4421
    %v5003 = vpack.c.bf16 %v4536, %v4532
    %v5004 = vpack.c.bf16 %v4538, %v4534
    %v5005 = vpack.c.bf16 %v4207, %v4203
    %v5006 = vpack.c.bf16 %v4209, %v4205
    %v5007 = vpack.c.bf16 %v4320, %v4316
    %v5008 = vpack.c.bf16 %v4322, %v4318
    %v5009 = vpack.c.bf16 %v4433, %v4429
    %v5010 = vpack.c.bf16 %v4435, %v4431
    %v5011 = vpack.c.bf16 %v4546, %v4542
    %v5012 = vpack.c.bf16 %v4548, %v4544
    %v5013 = vpack.c.bf16 %v4217, %v4213
    %v5014 = vpack.c.bf16 %v4219, %v4215
    %v5015 = vpack.c.bf16 %v4330, %v4326
    %v5016 = vpack.c.bf16 %v4332, %v4328
    %v5017 = vpack.c.bf16 %v4443, %v4439
    %v5018 = vpack.c.bf16 %v4445, %v4441
    %v5019 = vpack.c.bf16 %v4556, %v4552
    %v5020 = vpack.c.bf16 %v4558, %v4554
    %v5021 = vpack.c.bf16 %v4227, %v4223
    %v5022 = vpack.c.bf16 %v4229, %v4225
    %v5023 = vpack.c.bf16 %v4340, %v4336
    %v5024 = vpack.c.bf16 %v4342, %v4338
    %v5025 = vpack.c.bf16 %v4453, %v4449
    %v5026 = vpack.c.bf16 %v4455, %v4451
    %v5027 = vpack.c.bf16 %v4566, %v4562
    %v5028 = vpack.c.bf16 %v4568, %v4564
    %v5029 = vpack.c.bf16 %v4237, %v4233
    %v5030 = vpack.c.bf16 %v4239, %v4235
    %v5031 = vpack.c.bf16 %v4350, %v4346
    %v5032 = vpack.c.bf16 %v4352, %v4348
    %v5033 = vpack.c.bf16 %v4463, %v4459
    %v5034 = vpack.c.bf16 %v4465, %v4461
    %v5035 = vpack.c.bf16 %v4576, %v4572
    %v5036 = vpack.c.bf16 %v4578, %v4574
    %v5037 = vpack.c.bf16 %v4247, %v4243
    %v5038 = vpack.c.bf16 %v4249, %v4245
    %v5039 = vpack.c.bf16 %v4360, %v4356
    %v5040 = vpack.c.bf16 %v4362, %v4358
    %v5041 = vpack.c.bf16 %v4473, %v4469
    %v5042 = vpack.c.bf16 %v4475, %v4471
    %v5043 = vpack.c.bf16 %v4586, %v4582
    %v5044 = vpack.c.bf16 %v4588, %v4584
    %v5045 = vpack.c.bf16 %v4257, %v4253
    %v5046 = vpack.c.bf16 %v4259, %v4255
    %v5047 = vpack.c.bf16 %v4370, %v4366
    %v5048 = vpack.c.bf16 %v4372, %v4368
    %v5049 = vpack.c.bf16 %v4483, %v4479
    %v5050 = vpack.c.bf16 %v4485, %v4481
    %v5051 = vpack.c.bf16 %v4596, %v4592
    %v5052 = vpack.c.bf16 %v4598, %v4594
    %v5053 = vpack.c.bf16 %v4267, %v4263
    %v5054 = vpack.c.bf16 %v4269, %v4265
    %v5055 = vpack.c.bf16 %v4380, %v4376
    %v5056 = vpack.c.bf16 %v4382, %v4378
    %v5057 = vpack.c.bf16 %v4493, %v4489
    %v5058 = vpack.c.bf16 %v4495, %v4491
    %v5059 = vpack.c.bf16 %v4606, %v4602
    %v5060 = vpack.c.bf16 %v4608, %v4604
    %v5125 = vcombine.low %v4997, %v4998
    %v5126 = vcombine.high %v4997, %v4998
    %v5127 = vcombine.low %v4999, %v5000
    %v5128 = vcombine.high %v4999, %v5000
    %v5129 = vcombine.low %v5001, %v5002
    %v5130 = vcombine.high %v5001, %v5002
    %v5131 = vcombine.low %v5003, %v5004
    %v5132 = vcombine.high %v5003, %v5004
    %v5134 = vunpack.c.l.s4 1966171168
    %v5135 = vunpack.c.0.s8 %v5134
    %v5136 = vlaneseq
    %v5137 = vshrl.u32 %v5136, 7
    %v5138 = vsub.s32 %v5135, %v5137
    %v5139 = vrot.slane %v5125, %v5138
    %v5141 = vunpack.c.l.s4 1966171168
    %v5142 = vunpack.c.0.s8 %v5141
    %v5143 = vlaneseq
    %v5144 = vshrl.u32 %v5143, 7
    %v5145 = vsub.s32 %v5142, %v5144
    %v5146 = vrot.slane %v5126, %v5145
    %v5148 = vunpack.c.l.s4 1966171168
    %v5149 = vunpack.c.0.s8 %v5148
    %v5150 = vlaneseq
    %v5151 = vshrl.u32 %v5150, 7
    %v5152 = vsub.s32 %v5149, %v5151
    %v5153 = vrot.slane %v5127, %v5152
    %v5155 = vunpack.c.l.s4 1966171168
    %v5156 = vunpack.c.0.s8 %v5155
    %v5157 = vlaneseq
    %v5158 = vshrl.u32 %v5157, 7
    %v5159 = vsub.s32 %v5156, %v5158
    %v5160 = vrot.slane %v5128, %v5159
    %v5162 = vunpack.c.l.s4 1966171168
    %v5163 = vunpack.c.0.s8 %v5162
    %v5164 = vlaneseq
    %v5165 = vshrl.u32 %v5164, 7
    %v5166 = vsub.s32 %v5163, %v5165
    %v5167 = vrot.slane %v5129, %v5166
    %v5169 = vunpack.c.l.s4 1966171168
    %v5170 = vunpack.c.0.s8 %v5169
    %v5171 = vlaneseq
    %v5172 = vshrl.u32 %v5171, 7
    %v5173 = vsub.s32 %v5170, %v5172
    %v5174 = vrot.slane %v5130, %v5173
    %v5176 = vunpack.c.l.s4 1966171168
    %v5177 = vunpack.c.0.s8 %v5176
    %v5178 = vlaneseq
    %v5179 = vshrl.u32 %v5178, 7
    %v5180 = vsub.s32 %v5177, %v5179
    %v5181 = vrot.slane %v5131, %v5180
    %v5183 = vunpack.c.l.s4 1966171168
    %v5184 = vunpack.c.0.s8 %v5183
    %v5185 = vlaneseq
    %v5186 = vshrl.u32 %v5185, 7
    %v5187 = vsub.s32 %v5184, %v5186
    %v5188 = vrot.slane %v5132, %v5187
    %v5189 = vcombine.low %v5139, %v5153
    %v5190 = vcombine.high %v5139, %v5153
    %v5191 = vcombine.low %v5146, %v5160
    %v5192 = vcombine.high %v5146, %v5160
    %v5193 = vcombine.low %v5167, %v5181
    %v5194 = vcombine.high %v5167, %v5181
    %v5195 = vcombine.low %v5174, %v5188
    %v5196 = vcombine.high %v5174, %v5188
    %v5198 = vunpack.c.l.s4 1966171168
    %v5199 = vunpack.c.0.s8 %v5198
    %v5200 = vlaneseq
    %v5201 = vshrl.u32 %v5200, 7
    %v5202 = vsub.s32 %v5199, %v5201
    %v5203 = vrot.slane %v5189, %v5202
    %v5205 = vunpack.c.l.s4 1966171168
    %v5206 = vunpack.c.0.s8 %v5205
    %v5207 = vlaneseq
    %v5208 = vshrl.u32 %v5207, 7
    %v5209 = vsub.s32 %v5206, %v5208
    %v5210 = vrot.slane %v5191, %v5209
    %v5212 = vunpack.c.l.s4 1966171168
    %v5213 = vunpack.c.0.s8 %v5212
    %v5214 = vlaneseq
    %v5215 = vshrl.u32 %v5214, 7
    %v5216 = vsub.s32 %v5213, %v5215
    %v5217 = vrot.slane %v5190, %v5216
    %v5219 = vunpack.c.l.s4 1966171168
    %v5220 = vunpack.c.0.s8 %v5219
    %v5221 = vlaneseq
    %v5222 = vshrl.u32 %v5221, 7
    %v5223 = vsub.s32 %v5220, %v5222
    %v5224 = vrot.slane %v5192, %v5223
    %v5226 = vunpack.c.l.s4 1966171168
    %v5227 = vunpack.c.0.s8 %v5226
    %v5228 = vlaneseq
    %v5229 = vshrl.u32 %v5228, 7
    %v5230 = vsub.s32 %v5227, %v5229
    %v5231 = vrot.slane %v5193, %v5230
    %v5233 = vunpack.c.l.s4 1966171168
    %v5234 = vunpack.c.0.s8 %v5233
    %v5235 = vlaneseq
    %v5236 = vshrl.u32 %v5235, 7
    %v5237 = vsub.s32 %v5234, %v5236
    %v5238 = vrot.slane %v5195, %v5237
    %v5240 = vunpack.c.l.s4 1966171168
    %v5241 = vunpack.c.0.s8 %v5240
    %v5242 = vlaneseq
    %v5243 = vshrl.u32 %v5242, 7
    %v5244 = vsub.s32 %v5241, %v5243
    %v5245 = vrot.slane %v5194, %v5244
    %v5247 = vunpack.c.l.s4 1966171168
    %v5248 = vunpack.c.0.s8 %v5247
    %v5249 = vlaneseq
    %v5250 = vshrl.u32 %v5249, 7
    %v5251 = vsub.s32 %v5248, %v5250
    %v5252 = vrot.slane %v5196, %v5251
    %v5253 = vcombine.low %v5203, %v5231
    %v5254 = vcombine.high %v5203, %v5231
    %v5255 = vcombine.low %v5210, %v5238
    %v5256 = vcombine.high %v5210, %v5238
    %v5257 = vcombine.low %v5217, %v5245
    %v5258 = vcombine.high %v5217, %v5245
    %v5259 = vcombine.low %v5224, %v5252
    %v5260 = vcombine.high %v5224, %v5252
    %v5261 = vcombine.low %v5005, %v5006
    %v5262 = vcombine.high %v5005, %v5006
    %v5263 = vcombine.low %v5007, %v5008
    %v5264 = vcombine.high %v5007, %v5008
    %v5265 = vcombine.low %v5009, %v5010
    %v5266 = vcombine.high %v5009, %v5010
    %v5267 = vcombine.low %v5011, %v5012
    %v5268 = vcombine.high %v5011, %v5012
    %v5270 = vunpack.c.l.s4 1966171168
    %v5271 = vunpack.c.0.s8 %v5270
    %v5272 = vlaneseq
    %v5273 = vshrl.u32 %v5272, 7
    %v5274 = vsub.s32 %v5271, %v5273
    %v5275 = vrot.slane %v5261, %v5274
    %v5277 = vunpack.c.l.s4 1966171168
    %v5278 = vunpack.c.0.s8 %v5277
    %v5279 = vlaneseq
    %v5280 = vshrl.u32 %v5279, 7
    %v5281 = vsub.s32 %v5278, %v5280
    %v5282 = vrot.slane %v5262, %v5281
    %v5284 = vunpack.c.l.s4 1966171168
    %v5285 = vunpack.c.0.s8 %v5284
    %v5286 = vlaneseq
    %v5287 = vshrl.u32 %v5286, 7
    %v5288 = vsub.s32 %v5285, %v5287
    %v5289 = vrot.slane %v5263, %v5288
    %v5291 = vunpack.c.l.s4 1966171168
    %v5292 = vunpack.c.0.s8 %v5291
    %v5293 = vlaneseq
    %v5294 = vshrl.u32 %v5293, 7
    %v5295 = vsub.s32 %v5292, %v5294
    %v5296 = vrot.slane %v5264, %v5295
    %v5298 = vunpack.c.l.s4 1966171168
    %v5299 = vunpack.c.0.s8 %v5298
    %v5300 = vlaneseq
    %v5301 = vshrl.u32 %v5300, 7
    %v5302 = vsub.s32 %v5299, %v5301
    %v5303 = vrot.slane %v5265, %v5302
    %v5305 = vunpack.c.l.s4 1966171168
    %v5306 = vunpack.c.0.s8 %v5305
    %v5307 = vlaneseq
    %v5308 = vshrl.u32 %v5307, 7
    %v5309 = vsub.s32 %v5306, %v5308
    %v5310 = vrot.slane %v5266, %v5309
    %v5312 = vunpack.c.l.s4 1966171168
    %v5313 = vunpack.c.0.s8 %v5312
    %v5314 = vlaneseq
    %v5315 = vshrl.u32 %v5314, 7
    %v5316 = vsub.s32 %v5313, %v5315
    %v5317 = vrot.slane %v5267, %v5316
    %v5319 = vunpack.c.l.s4 1966171168
    %v5320 = vunpack.c.0.s8 %v5319
    %v5321 = vlaneseq
    %v5322 = vshrl.u32 %v5321, 7
    %v5323 = vsub.s32 %v5320, %v5322
    %v5324 = vrot.slane %v5268, %v5323
    %v5325 = vcombine.low %v5275, %v5289
    %v5326 = vcombine.high %v5275, %v5289
    %v5327 = vcombine.low %v5282, %v5296
    %v5328 = vcombine.high %v5282, %v5296
    %v5329 = vcombine.low %v5303, %v5317
    %v5330 = vcombine.high %v5303, %v5317
    %v5331 = vcombine.low %v5310, %v5324
    %v5332 = vcombine.high %v5310, %v5324
    %v5334 = vunpack.c.l.s4 1966171168
    %v5335 = vunpack.c.0.s8 %v5334
    %v5336 = vlaneseq
    %v5337 = vshrl.u32 %v5336, 7
    %v5338 = vsub.s32 %v5335, %v5337
    %v5339 = vrot.slane %v5325, %v5338
    %v5341 = vunpack.c.l.s4 1966171168
    %v5342 = vunpack.c.0.s8 %v5341
    %v5343 = vlaneseq
    %v5344 = vshrl.u32 %v5343, 7
    %v5345 = vsub.s32 %v5342, %v5344
    %v5346 = vrot.slane %v5327, %v5345
    %v5348 = vunpack.c.l.s4 1966171168
    %v5349 = vunpack.c.0.s8 %v5348
    %v5350 = vlaneseq
    %v5351 = vshrl.u32 %v5350, 7
    %v5352 = vsub.s32 %v5349, %v5351
    %v5353 = vrot.slane %v5326, %v5352
    %v5355 = vunpack.c.l.s4 1966171168
    %v5356 = vunpack.c.0.s8 %v5355
    %v5357 = vlaneseq
    %v5358 = vshrl.u32 %v5357, 7
    %v5359 = vsub.s32 %v5356, %v5358
    %v5360 = vrot.slane %v5328, %v5359
    %v5362 = vunpack.c.l.s4 1966171168
    %v5363 = vunpack.c.0.s8 %v5362
    %v5364 = vlaneseq
    %v5365 = vshrl.u32 %v5364, 7
    %v5366 = vsub.s32 %v5363, %v5365
    %v5367 = vrot.slane %v5329, %v5366
    %v5369 = vunpack.c.l.s4 1966171168
    %v5370 = vunpack.c.0.s8 %v5369
    %v5371 = vlaneseq
    %v5372 = vshrl.u32 %v5371, 7
    %v5373 = vsub.s32 %v5370, %v5372
    %v5374 = vrot.slane %v5331, %v5373
    %v5376 = vunpack.c.l.s4 1966171168
    %v5377 = vunpack.c.0.s8 %v5376
    %v5378 = vlaneseq
    %v5379 = vshrl.u32 %v5378, 7
    %v5380 = vsub.s32 %v5377, %v5379
    %v5381 = vrot.slane %v5330, %v5380
    %v5383 = vunpack.c.l.s4 1966171168
    %v5384 = vunpack.c.0.s8 %v5383
    %v5385 = vlaneseq
    %v5386 = vshrl.u32 %v5385, 7
    %v5387 = vsub.s32 %v5384, %v5386
    %v5388 = vrot.slane %v5332, %v5387
    %v5389 = vcombine.low %v5339, %v5367
    %v5390 = vcombine.high %v5339, %v5367
    %v5391 = vcombine.low %v5346, %v5374
    %v5392 = vcombine.high %v5346, %v5374
    %v5393 = vcombine.low %v5353, %v5381
    %v5394 = vcombine.high %v5353, %v5381
    %v5395 = vcombine.low %v5360, %v5388
    %v5396 = vcombine.high %v5360, %v5388
    %v5397 = vcombine.low %v5013, %v5014
    %v5398 = vcombine.high %v5013, %v5014
    %v5399 = vcombine.low %v5015, %v5016
    %v5400 = vcombine.high %v5015, %v5016
    %v5401 = vcombine.low %v5017, %v5018
    %v5402 = vcombine.high %v5017, %v5018
    %v5403 = vcombine.low %v5019, %v5020
    %v5404 = vcombine.high %v5019, %v5020
    %v5406 = vunpack.c.l.s4 1966171168
    %v5407 = vunpack.c.0.s8 %v5406
    %v5408 = vlaneseq
    %v5409 = vshrl.u32 %v5408, 7
    %v5410 = vsub.s32 %v5407, %v5409
    %v5411 = vrot.slane %v5397, %v5410
    %v5413 = vunpack.c.l.s4 1966171168
    %v5414 = vunpack.c.0.s8 %v5413
    %v5415 = vlaneseq
    %v5416 = vshrl.u32 %v5415, 7
    %v5417 = vsub.s32 %v5414, %v5416
    %v5418 = vrot.slane %v5398, %v5417
    %v5420 = vunpack.c.l.s4 1966171168
    %v5421 = vunpack.c.0.s8 %v5420
    %v5422 = vlaneseq
    %v5423 = vshrl.u32 %v5422, 7
    %v5424 = vsub.s32 %v5421, %v5423
    %v5425 = vrot.slane %v5399, %v5424
    %v5427 = vunpack.c.l.s4 1966171168
    %v5428 = vunpack.c.0.s8 %v5427
    %v5429 = vlaneseq
    %v5430 = vshrl.u32 %v5429, 7
    %v5431 = vsub.s32 %v5428, %v5430
    %v5432 = vrot.slane %v5400, %v5431
    %v5434 = vunpack.c.l.s4 1966171168
    %v5435 = vunpack.c.0.s8 %v5434
    %v5436 = vlaneseq
    %v5437 = vshrl.u32 %v5436, 7
    %v5438 = vsub.s32 %v5435, %v5437
    %v5439 = vrot.slane %v5401, %v5438
    %v5441 = vunpack.c.l.s4 1966171168
    %v5442 = vunpack.c.0.s8 %v5441
    %v5443 = vlaneseq
    %v5444 = vshrl.u32 %v5443, 7
    %v5445 = vsub.s32 %v5442, %v5444
    %v5446 = vrot.slane %v5402, %v5445
    %v5448 = vunpack.c.l.s4 1966171168
    %v5449 = vunpack.c.0.s8 %v5448
    %v5450 = vlaneseq
    %v5451 = vshrl.u32 %v5450, 7
    %v5452 = vsub.s32 %v5449, %v5451
    %v5453 = vrot.slane %v5403, %v5452
    %v5455 = vunpack.c.l.s4 1966171168
    %v5456 = vunpack.c.0.s8 %v5455
    %v5457 = vlaneseq
    %v5458 = vshrl.u32 %v5457, 7
    %v5459 = vsub.s32 %v5456, %v5458
    %v5460 = vrot.slane %v5404, %v5459
    %v5461 = vcombine.low %v5411, %v5425
    %v5462 = vcombine.high %v5411, %v5425
    %v5463 = vcombine.low %v5418, %v5432
    %v5464 = vcombine.high %v5418, %v5432
    %v5465 = vcombine.low %v5439, %v5453
    %v5466 = vcombine.high %v5439, %v5453
    %v5467 = vcombine.low %v5446, %v5460
    %v5468 = vcombine.high %v5446, %v5460
    %v5470 = vunpack.c.l.s4 1966171168
    %v5471 = vunpack.c.0.s8 %v5470
    %v5472 = vlaneseq
    %v5473 = vshrl.u32 %v5472, 7
    %v5474 = vsub.s32 %v5471, %v5473
    %v5475 = vrot.slane %v5461, %v5474
    %v5477 = vunpack.c.l.s4 1966171168
    %v5478 = vunpack.c.0.s8 %v5477
    %v5479 = vlaneseq
    %v5480 = vshrl.u32 %v5479, 7
    %v5481 = vsub.s32 %v5478, %v5480
    %v5482 = vrot.slane %v5463, %v5481
    %v5484 = vunpack.c.l.s4 1966171168
    %v5485 = vunpack.c.0.s8 %v5484
    %v5486 = vlaneseq
    %v5487 = vshrl.u32 %v5486, 7
    %v5488 = vsub.s32 %v5485, %v5487
    %v5489 = vrot.slane %v5462, %v5488
    %v5491 = vunpack.c.l.s4 1966171168
    %v5492 = vunpack.c.0.s8 %v5491
    %v5493 = vlaneseq
    %v5494 = vshrl.u32 %v5493, 7
    %v5495 = vsub.s32 %v5492, %v5494
    %v5496 = vrot.slane %v5464, %v5495
    %v5498 = vunpack.c.l.s4 1966171168
    %v5499 = vunpack.c.0.s8 %v5498
    %v5500 = vlaneseq
    %v5501 = vshrl.u32 %v5500, 7
    %v5502 = vsub.s32 %v5499, %v5501
    %v5503 = vrot.slane %v5465, %v5502
    %v5505 = vunpack.c.l.s4 1966171168
    %v5506 = vunpack.c.0.s8 %v5505
    %v5507 = vlaneseq
    %v5508 = vshrl.u32 %v5507, 7
    %v5509 = vsub.s32 %v5506, %v5508
    %v5510 = vrot.slane %v5467, %v5509
    %v5512 = vunpack.c.l.s4 1966171168
    %v5513 = vunpack.c.0.s8 %v5512
    %v5514 = vlaneseq
    %v5515 = vshrl.u32 %v5514, 7
    %v5516 = vsub.s32 %v5513, %v5515
    %v5517 = vrot.slane %v5466, %v5516
    %v5519 = vunpack.c.l.s4 1966171168
    %v5520 = vunpack.c.0.s8 %v5519
    %v5521 = vlaneseq
    %v5522 = vshrl.u32 %v5521, 7
    %v5523 = vsub.s32 %v5520, %v5522
    %v5524 = vrot.slane %v5468, %v5523
    %v5525 = vcombine.low %v5475, %v5503
    %v5526 = vcombine.high %v5475, %v5503
    %v5527 = vcombine.low %v5482, %v5510
    %v5528 = vcombine.high %v5482, %v5510
    %v5529 = vcombine.low %v5489, %v5517
    %v5530 = vcombine.high %v5489, %v5517
    %v5531 = vcombine.low %v5496, %v5524
    %v5532 = vcombine.high %v5496, %v5524
    %v5533 = vcombine.low %v5021, %v5022
    %v5534 = vcombine.high %v5021, %v5022
    %v5535 = vcombine.low %v5023, %v5024
    %v5536 = vcombine.high %v5023, %v5024
    %v5537 = vcombine.low %v5025, %v5026
    %v5538 = vcombine.high %v5025, %v5026
    %v5539 = vcombine.low %v5027, %v5028
    %v5540 = vcombine.high %v5027, %v5028
    %v5542 = vunpack.c.l.s4 1966171168
    %v5543 = vunpack.c.0.s8 %v5542
    %v5544 = vlaneseq
    %v5545 = vshrl.u32 %v5544, 7
    %v5546 = vsub.s32 %v5543, %v5545
    %v5547 = vrot.slane %v5533, %v5546
    %v5549 = vunpack.c.l.s4 1966171168
    %v5550 = vunpack.c.0.s8 %v5549
    %v5551 = vlaneseq
    %v5552 = vshrl.u32 %v5551, 7
    %v5553 = vsub.s32 %v5550, %v5552
    %v5554 = vrot.slane %v5534, %v5553
    %v5556 = vunpack.c.l.s4 1966171168
    %v5557 = vunpack.c.0.s8 %v5556
    %v5558 = vlaneseq
    %v5559 = vshrl.u32 %v5558, 7
    %v5560 = vsub.s32 %v5557, %v5559
    %v5561 = vrot.slane %v5535, %v5560
    %v5563 = vunpack.c.l.s4 1966171168
    %v5564 = vunpack.c.0.s8 %v5563
    %v5565 = vlaneseq
    %v5566 = vshrl.u32 %v5565, 7
    %v5567 = vsub.s32 %v5564, %v5566
    %v5568 = vrot.slane %v5536, %v5567
    %v5570 = vunpack.c.l.s4 1966171168
    %v5571 = vunpack.c.0.s8 %v5570
    %v5572 = vlaneseq
    %v5573 = vshrl.u32 %v5572, 7
    %v5574 = vsub.s32 %v5571, %v5573
    %v5575 = vrot.slane %v5537, %v5574
    %v5577 = vunpack.c.l.s4 1966171168
    %v5578 = vunpack.c.0.s8 %v5577
    %v5579 = vlaneseq
    %v5580 = vshrl.u32 %v5579, 7
    %v5581 = vsub.s32 %v5578, %v5580
    %v5582 = vrot.slane %v5538, %v5581
    %v5584 = vunpack.c.l.s4 1966171168
    %v5585 = vunpack.c.0.s8 %v5584
    %v5586 = vlaneseq
    %v5587 = vshrl.u32 %v5586, 7
    %v5588 = vsub.s32 %v5585, %v5587
    %v5589 = vrot.slane %v5539, %v5588
    %v5591 = vunpack.c.l.s4 1966171168
    %v5592 = vunpack.c.0.s8 %v5591
    %v5593 = vlaneseq
    %v5594 = vshrl.u32 %v5593, 7
    %v5595 = vsub.s32 %v5592, %v5594
    %v5596 = vrot.slane %v5540, %v5595
    %v5597 = vcombine.low %v5547, %v5561
    %v5598 = vcombine.high %v5547, %v5561
    %v5599 = vcombine.low %v5554, %v5568
    %v5600 = vcombine.high %v5554, %v5568
    %v5601 = vcombine.low %v5575, %v5589
    %v5602 = vcombine.high %v5575, %v5589
    %v5603 = vcombine.low %v5582, %v5596
    %v5604 = vcombine.high %v5582, %v5596
    %v5606 = vunpack.c.l.s4 1966171168
    %v5607 = vunpack.c.0.s8 %v5606
    %v5608 = vlaneseq
    %v5609 = vshrl.u32 %v5608, 7
    %v5610 = vsub.s32 %v5607, %v5609
    %v5611 = vrot.slane %v5597, %v5610
    %v5613 = vunpack.c.l.s4 1966171168
    %v5614 = vunpack.c.0.s8 %v5613
    %v5615 = vlaneseq
    %v5616 = vshrl.u32 %v5615, 7
    %v5617 = vsub.s32 %v5614, %v5616
    %v5618 = vrot.slane %v5599, %v5617
    %v5620 = vunpack.c.l.s4 1966171168
    %v5621 = vunpack.c.0.s8 %v5620
    %v5622 = vlaneseq
    %v5623 = vshrl.u32 %v5622, 7
    %v5624 = vsub.s32 %v5621, %v5623
    %v5625 = vrot.slane %v5598, %v5624
    %v5627 = vunpack.c.l.s4 1966171168
    %v5628 = vunpack.c.0.s8 %v5627
    %v5629 = vlaneseq
    %v5630 = vshrl.u32 %v5629, 7
    %v5631 = vsub.s32 %v5628, %v5630
    %v5632 = vrot.slane %v5600, %v5631
    %v5634 = vunpack.c.l.s4 1966171168
    %v5635 = vunpack.c.0.s8 %v5634
    %v5636 = vlaneseq
    %v5637 = vshrl.u32 %v5636, 7
    %v5638 = vsub.s32 %v5635, %v5637
    %v5639 = vrot.slane %v5601, %v5638
    %v5641 = vunpack.c.l.s4 1966171168
    %v5642 = vunpack.c.0.s8 %v5641
    %v5643 = vlaneseq
    %v5644 = vshrl.u32 %v5643, 7
    %v5645 = vsub.s32 %v5642, %v5644
    %v5646 = vrot.slane %v5603, %v5645
    %v5648 = vunpack.c.l.s4 1966171168
    %v5649 = vunpack.c.0.s8 %v5648
    %v5650 = vlaneseq
    %v5651 = vshrl.u32 %v5650, 7
    %v5652 = vsub.s32 %v5649, %v5651
    %v5653 = vrot.slane %v5602, %v5652
    %v5655 = vunpack.c.l.s4 1966171168
    %v5656 = vunpack.c.0.s8 %v5655
    %v5657 = vlaneseq
    %v5658 = vshrl.u32 %v5657, 7
    %v5659 = vsub.s32 %v5656, %v5658
    %v5660 = vrot.slane %v5604, %v5659
    %v5661 = vcombine.low %v5611, %v5639
    %v5662 = vcombine.high %v5611, %v5639
    %v5663 = vcombine.low %v5618, %v5646
    %v5664 = vcombine.high %v5618, %v5646
    %v5665 = vcombine.low %v5625, %v5653
    %v5666 = vcombine.high %v5625, %v5653
    %v5667 = vcombine.low %v5632, %v5660
    %v5668 = vcombine.high %v5632, %v5660
    %v5669 = vcombine.low %v5029, %v5030
    %v5670 = vcombine.high %v5029, %v5030
    %v5671 = vcombine.low %v5031, %v5032
    %v5672 = vcombine.high %v5031, %v5032
    %v5673 = vcombine.low %v5033, %v5034
    %v5674 = vcombine.high %v5033, %v5034
    %v5675 = vcombine.low %v5035, %v5036
    %v5676 = vcombine.high %v5035, %v5036
    %v5678 = vunpack.c.l.s4 1966171168
    %v5679 = vunpack.c.0.s8 %v5678
    %v5680 = vlaneseq
    %v5681 = vshrl.u32 %v5680, 7
    %v5682 = vsub.s32 %v5679, %v5681
    %v5683 = vrot.slane %v5669, %v5682
    %v5685 = vunpack.c.l.s4 1966171168
    %v5686 = vunpack.c.0.s8 %v5685
    %v5687 = vlaneseq
    %v5688 = vshrl.u32 %v5687, 7
    %v5689 = vsub.s32 %v5686, %v5688
    %v5690 = vrot.slane %v5670, %v5689
    %v5692 = vunpack.c.l.s4 1966171168
    %v5693 = vunpack.c.0.s8 %v5692
    %v5694 = vlaneseq
    %v5695 = vshrl.u32 %v5694, 7
    %v5696 = vsub.s32 %v5693, %v5695
    %v5697 = vrot.slane %v5671, %v5696
    %v5699 = vunpack.c.l.s4 1966171168
    %v5700 = vunpack.c.0.s8 %v5699
    %v5701 = vlaneseq
    %v5702 = vshrl.u32 %v5701, 7
    %v5703 = vsub.s32 %v5700, %v5702
    %v5704 = vrot.slane %v5672, %v5703
    %v5706 = vunpack.c.l.s4 1966171168
    %v5707 = vunpack.c.0.s8 %v5706
    %v5708 = vlaneseq
    %v5709 = vshrl.u32 %v5708, 7
    %v5710 = vsub.s32 %v5707, %v5709
    %v5711 = vrot.slane %v5673, %v5710
    %v5713 = vunpack.c.l.s4 1966171168
    %v5714 = vunpack.c.0.s8 %v5713
    %v5715 = vlaneseq
    %v5716 = vshrl.u32 %v5715, 7
    %v5717 = vsub.s32 %v5714, %v5716
    %v5718 = vrot.slane %v5674, %v5717
    %v5720 = vunpack.c.l.s4 1966171168
    %v5721 = vunpack.c.0.s8 %v5720
    %v5722 = vlaneseq
    %v5723 = vshrl.u32 %v5722, 7
    %v5724 = vsub.s32 %v5721, %v5723
    %v5725 = vrot.slane %v5675, %v5724
    %v5727 = vunpack.c.l.s4 1966171168
    %v5728 = vunpack.c.0.s8 %v5727
    %v5729 = vlaneseq
    %v5730 = vshrl.u32 %v5729, 7
    %v5731 = vsub.s32 %v5728, %v5730
    %v5732 = vrot.slane %v5676, %v5731
    %v5733 = vcombine.low %v5683, %v5697
    %v5734 = vcombine.high %v5683, %v5697
    %v5735 = vcombine.low %v5690, %v5704
    %v5736 = vcombine.high %v5690, %v5704
    %v5737 = vcombine.low %v5711, %v5725
    %v5738 = vcombine.high %v5711, %v5725
    %v5739 = vcombine.low %v5718, %v5732
    %v5740 = vcombine.high %v5718, %v5732
    %v5742 = vunpack.c.l.s4 1966171168
    %v5743 = vunpack.c.0.s8 %v5742
    %v5744 = vlaneseq
    %v5745 = vshrl.u32 %v5744, 7
    %v5746 = vsub.s32 %v5743, %v5745
    %v5747 = vrot.slane %v5733, %v5746
    %v5749 = vunpack.c.l.s4 1966171168
    %v5750 = vunpack.c.0.s8 %v5749
    %v5751 = vlaneseq
    %v5752 = vshrl.u32 %v5751, 7
    %v5753 = vsub.s32 %v5750, %v5752
    %v5754 = vrot.slane %v5735, %v5753
    %v5756 = vunpack.c.l.s4 1966171168
    %v5757 = vunpack.c.0.s8 %v5756
    %v5758 = vlaneseq
    %v5759 = vshrl.u32 %v5758, 7
    %v5760 = vsub.s32 %v5757, %v5759
    %v5761 = vrot.slane %v5734, %v5760
    %v5763 = vunpack.c.l.s4 1966171168
    %v5764 = vunpack.c.0.s8 %v5763
    %v5765 = vlaneseq
    %v5766 = vshrl.u32 %v5765, 7
    %v5767 = vsub.s32 %v5764, %v5766
    %v5768 = vrot.slane %v5736, %v5767
    %v5770 = vunpack.c.l.s4 1966171168
    %v5771 = vunpack.c.0.s8 %v5770
    %v5772 = vlaneseq
    %v5773 = vshrl.u32 %v5772, 7
    %v5774 = vsub.s32 %v5771, %v5773
    %v5775 = vrot.slane %v5737, %v5774
    %v5777 = vunpack.c.l.s4 1966171168
    %v5778 = vunpack.c.0.s8 %v5777
    %v5779 = vlaneseq
    %v5780 = vshrl.u32 %v5779, 7
    %v5781 = vsub.s32 %v5778, %v5780
    %v5782 = vrot.slane %v5739, %v5781
    %v5784 = vunpack.c.l.s4 1966171168
    %v5785 = vunpack.c.0.s8 %v5784
    %v5786 = vlaneseq
    %v5787 = vshrl.u32 %v5786, 7
    %v5788 = vsub.s32 %v5785, %v5787
    %v5789 = vrot.slane %v5738, %v5788
    %v5791 = vunpack.c.l.s4 1966171168
    %v5792 = vunpack.c.0.s8 %v5791
    %v5793 = vlaneseq
    %v5794 = vshrl.u32 %v5793, 7
    %v5795 = vsub.s32 %v5792, %v5794
    %v5796 = vrot.slane %v5740, %v5795
    %v5797 = vcombine.low %v5747, %v5775
    %v5798 = vcombine.high %v5747, %v5775
    %v5799 = vcombine.low %v5754, %v5782
    %v5800 = vcombine.high %v5754, %v5782
    %v5801 = vcombine.low %v5761, %v5789
    %v5802 = vcombine.high %v5761, %v5789
    %v5803 = vcombine.low %v5768, %v5796
    %v5804 = vcombine.high %v5768, %v5796
    %v5805 = vcombine.low %v5037, %v5038
    %v5806 = vcombine.high %v5037, %v5038
    %v5807 = vcombine.low %v5039, %v5040
    %v5808 = vcombine.high %v5039, %v5040
    %v5809 = vcombine.low %v5041, %v5042
    %v5810 = vcombine.high %v5041, %v5042
    %v5811 = vcombine.low %v5043, %v5044
    %v5812 = vcombine.high %v5043, %v5044
    %v5814 = vunpack.c.l.s4 1966171168
    %v5815 = vunpack.c.0.s8 %v5814
    %v5816 = vlaneseq
    %v5817 = vshrl.u32 %v5816, 7
    %v5818 = vsub.s32 %v5815, %v5817
    %v5819 = vrot.slane %v5805, %v5818
    %v5821 = vunpack.c.l.s4 1966171168
    %v5822 = vunpack.c.0.s8 %v5821
    %v5823 = vlaneseq
    %v5824 = vshrl.u32 %v5823, 7
    %v5825 = vsub.s32 %v5822, %v5824
    %v5826 = vrot.slane %v5806, %v5825
    %v5828 = vunpack.c.l.s4 1966171168
    %v5829 = vunpack.c.0.s8 %v5828
    %v5830 = vlaneseq
    %v5831 = vshrl.u32 %v5830, 7
    %v5832 = vsub.s32 %v5829, %v5831
    %v5833 = vrot.slane %v5807, %v5832
    %v5835 = vunpack.c.l.s4 1966171168
    %v5836 = vunpack.c.0.s8 %v5835
    %v5837 = vlaneseq
    %v5838 = vshrl.u32 %v5837, 7
    %v5839 = vsub.s32 %v5836, %v5838
    %v5840 = vrot.slane %v5808, %v5839
    %v5842 = vunpack.c.l.s4 1966171168
    %v5843 = vunpack.c.0.s8 %v5842
    %v5844 = vlaneseq
    %v5845 = vshrl.u32 %v5844, 7
    %v5846 = vsub.s32 %v5843, %v5845
    %v5847 = vrot.slane %v5809, %v5846
    %v5849 = vunpack.c.l.s4 1966171168
    %v5850 = vunpack.c.0.s8 %v5849
    %v5851 = vlaneseq
    %v5852 = vshrl.u32 %v5851, 7
    %v5853 = vsub.s32 %v5850, %v5852
    %v5854 = vrot.slane %v5810, %v5853
    %v5856 = vunpack.c.l.s4 1966171168
    %v5857 = vunpack.c.0.s8 %v5856
    %v5858 = vlaneseq
    %v5859 = vshrl.u32 %v5858, 7
    %v5860 = vsub.s32 %v5857, %v5859
    %v5861 = vrot.slane %v5811, %v5860
    %v5863 = vunpack.c.l.s4 1966171168
    %v5864 = vunpack.c.0.s8 %v5863
    %v5865 = vlaneseq
    %v5866 = vshrl.u32 %v5865, 7
    %v5867 = vsub.s32 %v5864, %v5866
    %v5868 = vrot.slane %v5812, %v5867
    %v5869 = vcombine.low %v5819, %v5833
    %v5870 = vcombine.high %v5819, %v5833
    %v5871 = vcombine.low %v5826, %v5840
    %v5872 = vcombine.high %v5826, %v5840
    %v5873 = vcombine.low %v5847, %v5861
    %v5874 = vcombine.high %v5847, %v5861
    %v5875 = vcombine.low %v5854, %v5868
    %v5876 = vcombine.high %v5854, %v5868
    %v5878 = vunpack.c.l.s4 1966171168
    %v5879 = vunpack.c.0.s8 %v5878
    %v5880 = vlaneseq
    %v5881 = vshrl.u32 %v5880, 7
    %v5882 = vsub.s32 %v5879, %v5881
    %v5883 = vrot.slane %v5869, %v5882
    %v5885 = vunpack.c.l.s4 1966171168
    %v5886 = vunpack.c.0.s8 %v5885
    %v5887 = vlaneseq
    %v5888 = vshrl.u32 %v5887, 7
    %v5889 = vsub.s32 %v5886, %v5888
    %v5890 = vrot.slane %v5871, %v5889
    %v5892 = vunpack.c.l.s4 1966171168
    %v5893 = vunpack.c.0.s8 %v5892
    %v5894 = vlaneseq
    %v5895 = vshrl.u32 %v5894, 7
    %v5896 = vsub.s32 %v5893, %v5895
    %v5897 = vrot.slane %v5870, %v5896
    %v5899 = vunpack.c.l.s4 1966171168
    %v5900 = vunpack.c.0.s8 %v5899
    %v5901 = vlaneseq
    %v5902 = vshrl.u32 %v5901, 7
    %v5903 = vsub.s32 %v5900, %v5902
    %v5904 = vrot.slane %v5872, %v5903
    %v5906 = vunpack.c.l.s4 1966171168
    %v5907 = vunpack.c.0.s8 %v5906
    %v5908 = vlaneseq
    %v5909 = vshrl.u32 %v5908, 7
    %v5910 = vsub.s32 %v5907, %v5909
    %v5911 = vrot.slane %v5873, %v5910
    %v5913 = vunpack.c.l.s4 1966171168
    %v5914 = vunpack.c.0.s8 %v5913
    %v5915 = vlaneseq
    %v5916 = vshrl.u32 %v5915, 7
    %v5917 = vsub.s32 %v5914, %v5916
    %v5918 = vrot.slane %v5875, %v5917
    %v5920 = vunpack.c.l.s4 1966171168
    %v5921 = vunpack.c.0.s8 %v5920
    %v5922 = vlaneseq
    %v5923 = vshrl.u32 %v5922, 7
    %v5924 = vsub.s32 %v5921, %v5923
    %v5925 = vrot.slane %v5874, %v5924
    %v5927 = vunpack.c.l.s4 1966171168
    %v5928 = vunpack.c.0.s8 %v5927
    %v5929 = vlaneseq
    %v5930 = vshrl.u32 %v5929, 7
    %v5931 = vsub.s32 %v5928, %v5930
    %v5932 = vrot.slane %v5876, %v5931
    %v5933 = vcombine.low %v5883, %v5911
    %v5934 = vcombine.high %v5883, %v5911
    %v5935 = vcombine.low %v5890, %v5918
    %v5936 = vcombine.high %v5890, %v5918
    %v5937 = vcombine.low %v5897, %v5925
    %v5938 = vcombine.high %v5897, %v5925
    %v5939 = vcombine.low %v5904, %v5932
    %v5940 = vcombine.high %v5904, %v5932
    %v5941 = vcombine.low %v5045, %v5046
    %v5942 = vcombine.high %v5045, %v5046
    %v5943 = vcombine.low %v5047, %v5048
    %v5944 = vcombine.high %v5047, %v5048
    %v5945 = vcombine.low %v5049, %v5050
    %v5946 = vcombine.high %v5049, %v5050
    %v5947 = vcombine.low %v5051, %v5052
    %v5948 = vcombine.high %v5051, %v5052
    %v5950 = vunpack.c.l.s4 1966171168
    %v5951 = vunpack.c.0.s8 %v5950
    %v5952 = vlaneseq
    %v5953 = vshrl.u32 %v5952, 7
    %v5954 = vsub.s32 %v5951, %v5953
    %v5955 = vrot.slane %v5941, %v5954
    %v5957 = vunpack.c.l.s4 1966171168
    %v5958 = vunpack.c.0.s8 %v5957
    %v5959 = vlaneseq
    %v5960 = vshrl.u32 %v5959, 7
    %v5961 = vsub.s32 %v5958, %v5960
    %v5962 = vrot.slane %v5942, %v5961
    %v5964 = vunpack.c.l.s4 1966171168
    %v5965 = vunpack.c.0.s8 %v5964
    %v5966 = vlaneseq
    %v5967 = vshrl.u32 %v5966, 7
    %v5968 = vsub.s32 %v5965, %v5967
    %v5969 = vrot.slane %v5943, %v5968
    %v5971 = vunpack.c.l.s4 1966171168
    %v5972 = vunpack.c.0.s8 %v5971
    %v5973 = vlaneseq
    %v5974 = vshrl.u32 %v5973, 7
    %v5975 = vsub.s32 %v5972, %v5974
    %v5976 = vrot.slane %v5944, %v5975
    %v5978 = vunpack.c.l.s4 1966171168
    %v5979 = vunpack.c.0.s8 %v5978
    %v5980 = vlaneseq
    %v5981 = vshrl.u32 %v5980, 7
    %v5982 = vsub.s32 %v5979, %v5981
    %v5983 = vrot.slane %v5945, %v5982
    %v5985 = vunpack.c.l.s4 1966171168
    %v5986 = vunpack.c.0.s8 %v5985
    %v5987 = vlaneseq
    %v5988 = vshrl.u32 %v5987, 7
    %v5989 = vsub.s32 %v5986, %v5988
    %v5990 = vrot.slane %v5946, %v5989
    %v5992 = vunpack.c.l.s4 1966171168
    %v5993 = vunpack.c.0.s8 %v5992
    %v5994 = vlaneseq
    %v5995 = vshrl.u32 %v5994, 7
    %v5996 = vsub.s32 %v5993, %v5995
    %v5997 = vrot.slane %v5947, %v5996
    %v5999 = vunpack.c.l.s4 1966171168
    %v6000 = vunpack.c.0.s8 %v5999
    %v6001 = vlaneseq
    %v6002 = vshrl.u32 %v6001, 7
    %v6003 = vsub.s32 %v6000, %v6002
    %v6004 = vrot.slane %v5948, %v6003
    %v6005 = vcombine.low %v5955, %v5969
    %v6006 = vcombine.high %v5955, %v5969
    %v6007 = vcombine.low %v5962, %v5976
    %v6008 = vcombine.high %v5962, %v5976
    %v6009 = vcombine.low %v5983, %v5997
    %v6010 = vcombine.high %v5983, %v5997
    %v6011 = vcombine.low %v5990, %v6004
    %v6012 = vcombine.high %v5990, %v6004
    %v6014 = vunpack.c.l.s4 1966171168
    %v6015 = vunpack.c.0.s8 %v6014
    %v6016 = vlaneseq
    %v6017 = vshrl.u32 %v6016, 7
    %v6018 = vsub.s32 %v6015, %v6017
    %v6019 = vrot.slane %v6005, %v6018
    %v6021 = vunpack.c.l.s4 1966171168
    %v6022 = vunpack.c.0.s8 %v6021
    %v6023 = vlaneseq
    %v6024 = vshrl.u32 %v6023, 7
    %v6025 = vsub.s32 %v6022, %v6024
    %v6026 = vrot.slane %v6007, %v6025
    %v6028 = vunpack.c.l.s4 1966171168
    %v6029 = vunpack.c.0.s8 %v6028
    %v6030 = vlaneseq
    %v6031 = vshrl.u32 %v6030, 7
    %v6032 = vsub.s32 %v6029, %v6031
    %v6033 = vrot.slane %v6006, %v6032
    %v6035 = vunpack.c.l.s4 1966171168
    %v6036 = vunpack.c.0.s8 %v6035
    %v6037 = vlaneseq
    %v6038 = vshrl.u32 %v6037, 7
    %v6039 = vsub.s32 %v6036, %v6038
    %v6040 = vrot.slane %v6008, %v6039
    %v6042 = vunpack.c.l.s4 1966171168
    %v6043 = vunpack.c.0.s8 %v6042
    %v6044 = vlaneseq
    %v6045 = vshrl.u32 %v6044, 7
    %v6046 = vsub.s32 %v6043, %v6045
    %v6047 = vrot.slane %v6009, %v6046
    %v6049 = vunpack.c.l.s4 1966171168
    %v6050 = vunpack.c.0.s8 %v6049
    %v6051 = vlaneseq
    %v6052 = vshrl.u32 %v6051, 7
    %v6053 = vsub.s32 %v6050, %v6052
    %v6054 = vrot.slane %v6011, %v6053
    %v6056 = vunpack.c.l.s4 1966171168
    %v6057 = vunpack.c.0.s8 %v6056
    %v6058 = vlaneseq
    %v6059 = vshrl.u32 %v6058, 7
    %v6060 = vsub.s32 %v6057, %v6059
    %v6061 = vrot.slane %v6010, %v6060
    %v6063 = vunpack.c.l.s4 1966171168
    %v6064 = vunpack.c.0.s8 %v6063
    %v6065 = vlaneseq
    %v6066 = vshrl.u32 %v6065, 7
    %v6067 = vsub.s32 %v6064, %v6066
    %v6068 = vrot.slane %v6012, %v6067
    %v6069 = vcombine.low %v6019, %v6047
    %v6070 = vcombine.high %v6019, %v6047
    %v6071 = vcombine.low %v6026, %v6054
    %v6072 = vcombine.high %v6026, %v6054
    %v6073 = vcombine.low %v6033, %v6061
    %v6074 = vcombine.high %v6033, %v6061
    %v6075 = vcombine.low %v6040, %v6068
    %v6076 = vcombine.high %v6040, %v6068
    %v6077 = vcombine.low %v5053, %v5054
    %v6078 = vcombine.high %v5053, %v5054
    %v6079 = vcombine.low %v5055, %v5056
    %v6080 = vcombine.high %v5055, %v5056
    %v6081 = vcombine.low %v5057, %v5058
    %v6082 = vcombine.high %v5057, %v5058
    %v6083 = vcombine.low %v5059, %v5060
    %v6084 = vcombine.high %v5059, %v5060
    %v6086 = vunpack.c.l.s4 1966171168
    %v6087 = vunpack.c.0.s8 %v6086
    %v6088 = vlaneseq
    %v6089 = vshrl.u32 %v6088, 7
    %v6090 = vsub.s32 %v6087, %v6089
    %v6091 = vrot.slane %v6077, %v6090
    %v6093 = vunpack.c.l.s4 1966171168
    %v6094 = vunpack.c.0.s8 %v6093
    %v6095 = vlaneseq
    %v6096 = vshrl.u32 %v6095, 7
    %v6097 = vsub.s32 %v6094, %v6096
    %v6098 = vrot.slane %v6078, %v6097
    %v6100 = vunpack.c.l.s4 1966171168
    %v6101 = vunpack.c.0.s8 %v6100
    %v6102 = vlaneseq
    %v6103 = vshrl.u32 %v6102, 7
    %v6104 = vsub.s32 %v6101, %v6103
    %v6105 = vrot.slane %v6079, %v6104
    %v6107 = vunpack.c.l.s4 1966171168
    %v6108 = vunpack.c.0.s8 %v6107
    %v6109 = vlaneseq
    %v6110 = vshrl.u32 %v6109, 7
    %v6111 = vsub.s32 %v6108, %v6110
    %v6112 = vrot.slane %v6080, %v6111
    %v6114 = vunpack.c.l.s4 1966171168
    %v6115 = vunpack.c.0.s8 %v6114
    %v6116 = vlaneseq
    %v6117 = vshrl.u32 %v6116, 7
    %v6118 = vsub.s32 %v6115, %v6117
    %v6119 = vrot.slane %v6081, %v6118
    %v6121 = vunpack.c.l.s4 1966171168
    %v6122 = vunpack.c.0.s8 %v6121
    %v6123 = vlaneseq
    %v6124 = vshrl.u32 %v6123, 7
    %v6125 = vsub.s32 %v6122, %v6124
    %v6126 = vrot.slane %v6082, %v6125
    %v6128 = vunpack.c.l.s4 1966171168
    %v6129 = vunpack.c.0.s8 %v6128
    %v6130 = vlaneseq
    %v6131 = vshrl.u32 %v6130, 7
    %v6132 = vsub.s32 %v6129, %v6131
    %v6133 = vrot.slane %v6083, %v6132
    %v6135 = vunpack.c.l.s4 1966171168
    %v6136 = vunpack.c.0.s8 %v6135
    %v6137 = vlaneseq
    %v6138 = vshrl.u32 %v6137, 7
    %v6139 = vsub.s32 %v6136, %v6138
    %v6140 = vrot.slane %v6084, %v6139
    %v6141 = vcombine.low %v6091, %v6105
    %v6142 = vcombine.high %v6091, %v6105
    %v6143 = vcombine.low %v6098, %v6112
    %v6144 = vcombine.high %v6098, %v6112
    %v6145 = vcombine.low %v6119, %v6133
    %v6146 = vcombine.high %v6119, %v6133
    %v6147 = vcombine.low %v6126, %v6140
    %v6148 = vcombine.high %v6126, %v6140
    %v6150 = vunpack.c.l.s4 1966171168
    %v6151 = vunpack.c.0.s8 %v6150
    %v6152 = vlaneseq
    %v6153 = vshrl.u32 %v6152, 7
    %v6154 = vsub.s32 %v6151, %v6153
    %v6155 = vrot.slane %v6141, %v6154
    %v6157 = vunpack.c.l.s4 1966171168
    %v6158 = vunpack.c.0.s8 %v6157
    %v6159 = vlaneseq
    %v6160 = vshrl.u32 %v6159, 7
    %v6161 = vsub.s32 %v6158, %v6160
    %v6162 = vrot.slane %v6143, %v6161
    %v6164 = vunpack.c.l.s4 1966171168
    %v6165 = vunpack.c.0.s8 %v6164
    %v6166 = vlaneseq
    %v6167 = vshrl.u32 %v6166, 7
    %v6168 = vsub.s32 %v6165, %v6167
    %v6169 = vrot.slane %v6142, %v6168
    %v6171 = vunpack.c.l.s4 1966171168
    %v6172 = vunpack.c.0.s8 %v6171
    %v6173 = vlaneseq
    %v6174 = vshrl.u32 %v6173, 7
    %v6175 = vsub.s32 %v6172, %v6174
    %v6176 = vrot.slane %v6144, %v6175
    %v6178 = vunpack.c.l.s4 1966171168
    %v6179 = vunpack.c.0.s8 %v6178
    %v6180 = vlaneseq
    %v6181 = vshrl.u32 %v6180, 7
    %v6182 = vsub.s32 %v6179, %v6181
    %v6183 = vrot.slane %v6145, %v6182
    %v6185 = vunpack.c.l.s4 1966171168
    %v6186 = vunpack.c.0.s8 %v6185
    %v6187 = vlaneseq
    %v6188 = vshrl.u32 %v6187, 7
    %v6189 = vsub.s32 %v6186, %v6188
    %v6190 = vrot.slane %v6147, %v6189
    %v6192 = vunpack.c.l.s4 1966171168
    %v6193 = vunpack.c.0.s8 %v6192
    %v6194 = vlaneseq
    %v6195 = vshrl.u32 %v6194, 7
    %v6196 = vsub.s32 %v6193, %v6195
    %v6197 = vrot.slane %v6146, %v6196
    %v6199 = vunpack.c.l.s4 1966171168
    %v6200 = vunpack.c.0.s8 %v6199
    %v6201 = vlaneseq
    %v6202 = vshrl.u32 %v6201, 7
    %v6203 = vsub.s32 %v6200, %v6202
    %v6204 = vrot.slane %v6148, %v6203
    %v6205 = vcombine.low %v6155, %v6183
    %v6206 = vcombine.high %v6155, %v6183
    %v6207 = vcombine.low %v6162, %v6190
    %v6208 = vcombine.high %v6162, %v6190
    %v6209 = vcombine.low %v6169, %v6197
    %v6210 = vcombine.high %v6169, %v6197
    %v6211 = vcombine.low %v6176, %v6204
    %v6212 = vcombine.high %v6176, %v6204
    %6277 = vst [vmem:[#allocation3] sm:$0xff] %v5253
    %6278 = vst [vmem:[#allocation3 + $0x8] sm:$0xff] %v5257
    %6279 = vst [vmem:[#allocation3 + $0x10] sm:$0xff] %v5254
    %6280 = vst [vmem:[#allocation3 + $0x18] sm:$0xff] %v5258
    %6281 = vst [vmem:[#allocation3 + $0x20] sm:$0xff] %v5255
    %6282 = vst [vmem:[#allocation3 + $0x28] sm:$0xff] %v5259
    %6283 = vst [vmem:[#allocation3 + $0x30] sm:$0xff] %v5256
    %6284 = vst [vmem:[#allocation3 + $0x38] sm:$0xff] %v5260
    %6285 = vst [vmem:[#allocation3 + $0x40] sm:$0xff] %v5389
    %6286 = vst [vmem:[#allocation3 + $0x48] sm:$0xff] %v5393
    %6287 = vst [vmem:[#allocation3 + $0x50] sm:$0xff] %v5390
    %6288 = vst [vmem:[#allocation3 + $0x58] sm:$0xff] %v5394
    %6289 = vst [vmem:[#allocation3 + $0x60] sm:$0xff] %v5391
    %6290 = vst [vmem:[#allocation3 + $0x68] sm:$0xff] %v5395
    %6291 = vst [vmem:[#allocation3 + $0x70] sm:$0xff] %v5392
    %6292 = vst [vmem:[#allocation3 + $0x78] sm:$0xff] %v5396
    %6293 = vst [vmem:[#allocation3 + $0x80] sm:$0xff] %v5525
    %6294 = vst [vmem:[#allocation3 + $0x88] sm:$0xff] %v5529
    %6295 = vst [vmem:[#allocation3 + $0x90] sm:$0xff] %v5526
    %6296 = vst [vmem:[#allocation3 + $0x98] sm:$0xff] %v5530
    %6297 = vst [vmem:[#allocation3 + $0xa0] sm:$0xff] %v5527
    %6298 = vst [vmem:[#allocation3 + $0xa8] sm:$0xff] %v5531
    %6299 = vst [vmem:[#allocation3 + $0xb0] sm:$0xff] %v5528
    %6300 = vst [vmem:[#allocation3 + $0xb8] sm:$0xff] %v5532
    %6301 = vst [vmem:[#allocation3 + $0xc0] sm:$0xff] %v5661
    %6302 = vst [vmem:[#allocation3 + $0xc8] sm:$0xff] %v5665
    %6303 = vst [vmem:[#allocation3 + $0xd0] sm:$0xff] %v5662
    %6304 = vst [vmem:[#allocation3 + $0xd8] sm:$0xff] %v5666
    %6305 = vst [vmem:[#allocation3 + $0xe0] sm:$0xff] %v5663
    %6306 = vst [vmem:[#allocation3 + $0xe8] sm:$0xff] %v5667
    %6307 = vst [vmem:[#allocation3 + $0xf0] sm:$0xff] %v5664
    %6308 = vst [vmem:[#allocation3 + $0xf8] sm:$0xff] %v5668
    %6309 = vst [vmem:[#allocation3 + $0x100] sm:$0xff] %v5797
    %6310 = vst [vmem:[#allocation3 + $0x108] sm:$0xff] %v5801
    %6311 = vst [vmem:[#allocation3 + $0x110] sm:$0xff] %v5798
    %6312 = vst [vmem:[#allocation3 + $0x118] sm:$0xff] %v5802
    %6313 = vst [vmem:[#allocation3 + $0x120] sm:$0xff] %v5799
    %6314 = vst [vmem:[#allocation3 + $0x128] sm:$0xff] %v5803
    %6315 = vst [vmem:[#allocation3 + $0x130] sm:$0xff] %v5800
    %6316 = vst [vmem:[#allocation3 + $0x138] sm:$0xff] %v5804
    %6317 = vst [vmem:[#allocation3 + $0x140] sm:$0xff] %v5933
    %6318 = vst [vmem:[#allocation3 + $0x148] sm:$0xff] %v5937
    %6319 = vst [vmem:[#allocation3 + $0x150] sm:$0xff] %v5934
    %6320 = vst [vmem:[#allocation3 + $0x158] sm:$0xff] %v5938
    %6321 = vst [vmem:[#allocation3 + $0x160] sm:$0xff] %v5935
    %6322 = vst [vmem:[#allocation3 + $0x168] sm:$0xff] %v5939
    %6323 = vst [vmem:[#allocation3 + $0x170] sm:$0xff] %v5936
    %6324 = vst [vmem:[#allocation3 + $0x178] sm:$0xff] %v5940
    %6325 = vst [vmem:[#allocation3 + $0x180] sm:$0xff] %v6069
    %6326 = vst [vmem:[#allocation3 + $0x188] sm:$0xff] %v6073
    %6327 = vst [vmem:[#allocation3 + $0x190] sm:$0xff] %v6070
    %6328 = vst [vmem:[#allocation3 + $0x198] sm:$0xff] %v6074
    %6329 = vst [vmem:[#allocation3 + $0x1a0] sm:$0xff] %v6071
    %6330 = vst [vmem:[#allocation3 + $0x1a8] sm:$0xff] %v6075
    %6331 = vst [vmem:[#allocation3 + $0x1b0] sm:$0xff] %v6072
    %6332 = vst [vmem:[#allocation3 + $0x1b8] sm:$0xff] %v6076
    %6333 = vst [vmem:[#allocation3 + $0x1c0] sm:$0xff] %v6205
    %6334 = vst [vmem:[#allocation3 + $0x1c8] sm:$0xff] %v6209
    %6335 = vst [vmem:[#allocation3 + $0x1d0] sm:$0xff] %v6206
    %6336 = vst [vmem:[#allocation3 + $0x1d8] sm:$0xff] %v6210
    %6337 = vst [vmem:[#allocation3 + $0x1e0] sm:$0xff] %v6207
    %6338 = vst [vmem:[#allocation3 + $0x1e8] sm:$0xff] %v6211
    %6339 = vst [vmem:[#allocation3 + $0x1f0] sm:$0xff] %v6208
    %6340 = vst [vmem:[#allocation3 + $0x1f8] sm:$0xff] %v6212
    %6341 = vst [vmem:[#allocation4] sm:$0xff] %v3532
    %6342 = vst [vmem:[#allocation4 + $0x8] sm:$0xff] %v3533
    %6343 = vst [vmem:[#allocation4 + $0x10] sm:$0xff] %v3534
    %6344 = vst [vmem:[#allocation4 + $0x18] sm:$0xff] %v3535
    %6345 = vst [vmem:[#allocation4 + $0x20] sm:$0xff] %v3536
    %6346 = vst [vmem:[#allocation4 + $0x28] sm:$0xff] %v3537
    %6347 = vst [vmem:[#allocation4 + $0x30] sm:$0xff] %v3538
    %6348 = vst [vmem:[#allocation4 + $0x38] sm:$0xff] %v3539
    %6349 = vst [vmem:[#allocation4 + $0x40] sm:$0xff] %v3540
    %6350 = vst [vmem:[#allocation4 + $0x48] sm:$0xff] %v3541
    %6351 = vst [vmem:[#allocation4 + $0x50] sm:$0xff] %v3542
    %6352 = vst [vmem:[#allocation4 + $0x58] sm:$0xff] %v3543
    %6353 = vst [vmem:[#allocation4 + $0x60] sm:$0xff] %v3544
    %6354 = vst [vmem:[#allocation4 + $0x68] sm:$0xff] %v3545
    %6355 = vst [vmem:[#allocation4 + $0x70] sm:$0xff] %v3546
    %6356 = vst [vmem:[#allocation4 + $0x78] sm:$0xff] %v3547
    %v6357 = vmul.f32 %v4853, %v4853
    %v6358 = vmul.f32 %v4854, %v4854
    %v6359 = vmul.f32 %v4855, %v4855
    %v6360 = vmul.f32 %v4856, %v4856
    %v6361 = vmul.f32 %v4857, %v4857
    %v6362 = vmul.f32 %v4858, %v4858
    %v6363 = vmul.f32 %v4859, %v4859
    %v6364 = vmul.f32 %v4860, %v4860
    %v6365 = vmul.f32 %v4861, %v4861
    %v6366 = vmul.f32 %v4862, %v4862
    %v6367 = vmul.f32 %v4863, %v4863
    %v6368 = vmul.f32 %v4864, %v4864
    %v6369 = vmul.f32 %v4865, %v4865
    %v6370 = vmul.f32 %v4866, %v4866
    %v6371 = vmul.f32 %v4867, %v4867
    %v6372 = vmul.f32 %v4868, %v4868
    %v6373 = vmul.f32 %v4869, %v4869
    %v6374 = vmul.f32 %v4870, %v4870
    %v6375 = vmul.f32 %v4871, %v4871
    %v6376 = vmul.f32 %v4872, %v4872
    %v6377 = vmul.f32 %v4873, %v4873
    %v6378 = vmul.f32 %v4874, %v4874
    %v6379 = vmul.f32 %v4875, %v4875
    %v6380 = vmul.f32 %v4876, %v4876
    %v6381 = vmul.f32 %v4877, %v4877
    %v6382 = vmul.f32 %v4878, %v4878
    %v6383 = vmul.f32 %v4879, %v4879
    %v6384 = vmul.f32 %v4880, %v4880
    %v6385 = vmul.f32 %v4881, %v4881
    %v6386 = vmul.f32 %v4882, %v4882
    %v6387 = vmul.f32 %v4883, %v4883
    %v6388 = vmul.f32 %v4884, %v4884
    %v6389 = vmul.f32 %v4885, %v4885
    %v6390 = vmul.f32 %v4886, %v4886
    %v6391 = vmul.f32 %v4887, %v4887
    %v6392 = vmul.f32 %v4888, %v4888
    %v6393 = vmul.f32 %v4889, %v4889
    %v6394 = vmul.f32 %v4890, %v4890
    %v6395 = vmul.f32 %v4891, %v4891
    %v6396 = vmul.f32 %v4892, %v4892
    %v6397 = vmul.f32 %v4893, %v4893
    %v6398 = vmul.f32 %v4894, %v4894
    %v6399 = vmul.f32 %v4895, %v4895
    %v6400 = vmul.f32 %v4896, %v4896
    %v6401 = vmul.f32 %v4897, %v4897
    %v6402 = vmul.f32 %v4898, %v4898
    %v6403 = vmul.f32 %v4899, %v4899
    %v6404 = vmul.f32 %v4900, %v4900
    %v6405 = vmul.f32 %v4901, %v4901
    %v6406 = vmul.f32 %v4902, %v4902
    %v6407 = vmul.f32 %v4903, %v4903
    %v6408 = vmul.f32 %v4904, %v4904
    %v6409 = vmul.f32 %v4905, %v4905
    %v6410 = vmul.f32 %v4906, %v4906
    %v6411 = vmul.f32 %v4907, %v4907
    %v6412 = vmul.f32 %v4908, %v4908
    %v6413 = vmul.f32 %v4909, %v4909
    %v6414 = vmul.f32 %v4910, %v4910
    %v6415 = vmul.f32 %v4911, %v4911
    %v6416 = vmul.f32 %v4912, %v4912
    %v6417 = vmul.f32 %v4913, %v4913
    %v6418 = vmul.f32 %v4914, %v4914
    %v6419 = vmul.f32 %v4915, %v4915
    %v6420 = vmul.f32 %v4916, %v4916
    %v6421 = vmul.f32 %v4917, %v4917
    %v6422 = vmul.f32 %v4918, %v4918
    %v6423 = vmul.f32 %v4919, %v4919
    %v6424 = vmul.f32 %v4920, %v4920
    %v6425 = vmul.f32 %v4921, %v4921
    %v6426 = vmul.f32 %v4922, %v4922
    %v6427 = vmul.f32 %v4923, %v4923
    %v6428 = vmul.f32 %v4924, %v4924
    %v6429 = vmul.f32 %v4925, %v4925
    %v6430 = vmul.f32 %v4926, %v4926
    %v6431 = vmul.f32 %v4927, %v4927
    %v6432 = vmul.f32 %v4928, %v4928
    %v6433 = vmul.f32 %v4929, %v4929
    %v6434 = vmul.f32 %v4930, %v4930
    %v6435 = vmul.f32 %v4931, %v4931
    %v6436 = vmul.f32 %v4932, %v4932
    %v6437 = vmul.f32 %v4933, %v4933
    %v6438 = vmul.f32 %v4934, %v4934
    %v6439 = vmul.f32 %v4935, %v4935
    %v6440 = vmul.f32 %v4936, %v4936
    %v6441 = vmul.f32 %v4937, %v4937
    %v6442 = vmul.f32 %v4938, %v4938
    %v6443 = vmul.f32 %v4939, %v4939
    %v6444 = vmul.f32 %v4940, %v4940
    %v6445 = vmul.f32 %v4941, %v4941
    %v6446 = vmul.f32 %v4942, %v4942
    %v6447 = vmul.f32 %v4943, %v4943
    %v6448 = vmul.f32 %v4944, %v4944
    %v6449 = vmul.f32 %v4945, %v4945
    %v6450 = vmul.f32 %v4946, %v4946
    %v6451 = vmul.f32 %v4947, %v4947
    %v6452 = vmul.f32 %v4948, %v4948
    %v6453 = vmul.f32 %v4949, %v4949
    %v6454 = vmul.f32 %v4950, %v4950
    %v6455 = vmul.f32 %v4951, %v4951
    %v6456 = vmul.f32 %v4952, %v4952
    %v6457 = vmul.f32 %v4953, %v4953
    %v6458 = vmul.f32 %v4954, %v4954
    %v6459 = vmul.f32 %v4955, %v4955
    %v6460 = vmul.f32 %v4956, %v4956
    %v6461 = vmul.f32 %v4957, %v4957
    %v6462 = vmul.f32 %v4958, %v4958
    %v6463 = vmul.f32 %v4959, %v4959
    %v6464 = vmul.f32 %v4960, %v4960
    %v6465 = vmul.f32 %v4961, %v4961
    %v6466 = vmul.f32 %v4962, %v4962
    %v6467 = vmul.f32 %v4963, %v4963
    %v6468 = vmul.f32 %v4964, %v4964
    %v6469 = vmul.f32 %v4965, %v4965
    %v6470 = vmul.f32 %v4966, %v4966
    %v6471 = vmul.f32 %v4967, %v4967
    %v6472 = vmul.f32 %v4968, %v4968
    %v6473 = vmul.f32 %v4969, %v4969
    %v6474 = vmul.f32 %v4970, %v4970
    %v6475 = vmul.f32 %v4971, %v4971
    %v6476 = vmul.f32 %v4972, %v4972
    %v6477 = vmul.f32 %v4973, %v4973
    %v6478 = vmul.f32 %v4974, %v4974
    %v6479 = vmul.f32 %v4975, %v4975
    %v6480 = vmul.f32 %v4976, %v4976
    %v6481 = vmul.f32 %v4977, %v4977
    %v6482 = vmul.f32 %v4978, %v4978
    %v6483 = vmul.f32 %v4979, %v4979
    %v6484 = vmul.f32 %v4980, %v4980
    %v6485 = vadd.f32 %v6357, %v6358
    %v6486 = vadd.f32 %v6485, %v6359
    %v6487 = vadd.f32 %v6486, %v6360
    %v6488 = vadd.f32 %v6487, %v6361
    %v6489 = vadd.f32 %v6488, %v6362
    %v6490 = vadd.f32 %v6489, %v6363
    %v6491 = vadd.f32 %v6490, %v6364
    %v6492 = vadd.f32 %v6491, %v6365
    %v6493 = vadd.f32 %v6492, %v6366
    %v6494 = vadd.f32 %v6493, %v6367
    %v6495 = vadd.f32 %v6494, %v6368
    %v6496 = vadd.f32 %v6495, %v6369
    %v6497 = vadd.f32 %v6496, %v6370
    %v6498 = vadd.f32 %v6497, %v6371
    %v6499 = vadd.f32 %v6498, %v6372
    %v6500 = vadd.f32 %v6499, %v6373
    %v6501 = vadd.f32 %v6500, %v6374
    %v6502 = vadd.f32 %v6501, %v6375
    %v6503 = vadd.f32 %v6502, %v6376
    %v6504 = vadd.f32 %v6503, %v6377
    %v6505 = vadd.f32 %v6504, %v6378
    %v6506 = vadd.f32 %v6505, %v6379
    %v6507 = vadd.f32 %v6506, %v6380
    %v6508 = vadd.f32 %v6507, %v6381
    %v6509 = vadd.f32 %v6508, %v6382
    %v6510 = vadd.f32 %v6509, %v6383
    %v6511 = vadd.f32 %v6510, %v6384
    %v6512 = vadd.f32 %v6511, %v6385
    %v6513 = vadd.f32 %v6512, %v6386
    %v6514 = vadd.f32 %v6513, %v6387
    %v6515 = vadd.f32 %v6514, %v6388
    %v6516 = vadd.f32 %v6515, %v6389
    %v6517 = vadd.f32 %v6516, %v6390
    %v6518 = vadd.f32 %v6517, %v6391
    %v6519 = vadd.f32 %v6518, %v6392
    %v6520 = vadd.f32 %v6519, %v6393
    %v6521 = vadd.f32 %v6520, %v6394
    %v6522 = vadd.f32 %v6521, %v6395
    %v6523 = vadd.f32 %v6522, %v6396
    %v6524 = vadd.f32 %v6523, %v6397
    %v6525 = vadd.f32 %v6524, %v6398
    %v6526 = vadd.f32 %v6525, %v6399
    %v6527 = vadd.f32 %v6526, %v6400
    %v6528 = vadd.f32 %v6527, %v6401
    %v6529 = vadd.f32 %v6528, %v6402
    %v6530 = vadd.f32 %v6529, %v6403
    %v6531 = vadd.f32 %v6530, %v6404
    %v6532 = vadd.f32 %v6531, %v6405
    %v6533 = vadd.f32 %v6532, %v6406
    %v6534 = vadd.f32 %v6533, %v6407
    %v6535 = vadd.f32 %v6534, %v6408
    %v6536 = vadd.f32 %v6535, %v6409
    %v6537 = vadd.f32 %v6536, %v6410
    %v6538 = vadd.f32 %v6537, %v6411
    %v6539 = vadd.f32 %v6538, %v6412
    %v6540 = vadd.f32 %v6539, %v6413
    %v6541 = vadd.f32 %v6540, %v6414
    %v6542 = vadd.f32 %v6541, %v6415
    %v6543 = vadd.f32 %v6542, %v6416
    %v6544 = vadd.f32 %v6543, %v6417
    %v6545 = vadd.f32 %v6544, %v6418
    %v6546 = vadd.f32 %v6545, %v6419
    %v6547 = vadd.f32 %v6546, %v6420
    %v6548 = vadd.f32 %v6547, %v6421
    %v6549 = vadd.f32 %v6548, %v6422
    %v6550 = vadd.f32 %v6549, %v6423
    %v6551 = vadd.f32 %v6550, %v6424
    %v6552 = vadd.f32 %v6551, %v6425
    %v6553 = vadd.f32 %v6552, %v6426
    %v6554 = vadd.f32 %v6553, %v6427
    %v6555 = vadd.f32 %v6554, %v6428
    %v6556 = vadd.f32 %v6555, %v6429
    %v6557 = vadd.f32 %v6556, %v6430
    %v6558 = vadd.f32 %v6557, %v6431
    %v6559 = vadd.f32 %v6558, %v6432
    %v6560 = vadd.f32 %v6559, %v6433
    %v6561 = vadd.f32 %v6560, %v6434
    %v6562 = vadd.f32 %v6561, %v6435
    %v6563 = vadd.f32 %v6562, %v6436
    %v6564 = vadd.f32 %v6563, %v6437
    %v6565 = vadd.f32 %v6564, %v6438
    %v6566 = vadd.f32 %v6565, %v6439
    %v6567 = vadd.f32 %v6566, %v6440
    %v6568 = vadd.f32 %v6567, %v6441
    %v6569 = vadd.f32 %v6568, %v6442
    %v6570 = vadd.f32 %v6569, %v6443
    %v6571 = vadd.f32 %v6570, %v6444
    %v6572 = vadd.f32 %v6571, %v6445
    %v6573 = vadd.f32 %v6572, %v6446
    %v6574 = vadd.f32 %v6573, %v6447
    %v6575 = vadd.f32 %v6574, %v6448
    %v6576 = vadd.f32 %v6575, %v6449
    %v6577 = vadd.f32 %v6576, %v6450
    %v6578 = vadd.f32 %v6577, %v6451
    %v6579 = vadd.f32 %v6578, %v6452
    %v6580 = vadd.f32 %v6579, %v6453
    %v6581 = vadd.f32 %v6580, %v6454
    %v6582 = vadd.f32 %v6581, %v6455
    %v6583 = vadd.f32 %v6582, %v6456
    %v6584 = vadd.f32 %v6583, %v6457
    %v6585 = vadd.f32 %v6584, %v6458
    %v6586 = vadd.f32 %v6585, %v6459
    %v6587 = vadd.f32 %v6586, %v6460
    %v6588 = vadd.f32 %v6587, %v6461
    %v6589 = vadd.f32 %v6588, %v6462
    %v6590 = vadd.f32 %v6589, %v6463
    %v6591 = vadd.f32 %v6590, %v6464
    %v6592 = vadd.f32 %v6591, %v6465
    %v6593 = vadd.f32 %v6592, %v6466
    %v6594 = vadd.f32 %v6593, %v6467
    %v6595 = vadd.f32 %v6594, %v6468
    %v6596 = vadd.f32 %v6595, %v6469
    %v6597 = vadd.f32 %v6596, %v6470
    %v6598 = vadd.f32 %v6597, %v6471
    %v6599 = vadd.f32 %v6598, %v6472
    %v6600 = vadd.f32 %v6599, %v6473
    %v6601 = vadd.f32 %v6600, %v6474
    %v6602 = vadd.f32 %v6601, %v6475
    %v6603 = vadd.f32 %v6602, %v6476
    %v6604 = vadd.f32 %v6603, %v6477
    %v6605 = vadd.f32 %v6604, %v6478
    %v6606 = vadd.f32 %v6605, %v6479
    %v6607 = vadd.f32 %v6606, %v6480
    %v6608 = vadd.f32 %v6607, %v6481
    %v6609 = vadd.f32 %v6608, %v6482
    %v6610 = vadd.f32 %v6609, %v6483
    %v6611 = vadd.f32 %v6610, %v6484
    %6612 = vadd.xlane.f32.xlu0 %v6611
    %v6613 = vpop.xlane.xlu0 %6612
    %v6614 = vrot.slane %v6613, 4
    %v6615 = vadd.f32 %v6613, %v6614
    %v6616 = vrot.slane %v6615, 2
    %v6617 = vadd.f32 %v6615, %v6616
    %v6618 = vrot.slane %v6617, 1
    %v6619 = vadd.f32 %v6617, %v6618
    %s6620 = vtos %v6619
    %s6621 = scalar_lea.smem [#allocation5], 0
    %6622 = sst [smem:[%s6621]] %s6620
    %v6623 = vmul.f32 %v4709, %v4709
    %v6624 = vmul.f32 %v4710, %v4710
    %v6625 = vmul.f32 %v4711, %v4711
    %v6626 = vmul.f32 %v4712, %v4712
    %v6627 = vmul.f32 %v4713, %v4713
    %v6628 = vmul.f32 %v4714, %v4714
    %v6629 = vmul.f32 %v4715, %v4715
    %v6630 = vmul.f32 %v4716, %v4716
    %v6631 = vmul.f32 %v4717, %v4717
    %v6632 = vmul.f32 %v4718, %v4718
    %v6633 = vmul.f32 %v4719, %v4719
    %v6634 = vmul.f32 %v4720, %v4720
    %v6635 = vmul.f32 %v4721, %v4721
    %v6636 = vmul.f32 %v4722, %v4722
    %v6637 = vmul.f32 %v4723, %v4723
    %v6638 = vmul.f32 %v4724, %v4724
    %v6639 = vadd.f32 %v6623, %v6624
    %v6640 = vadd.f32 %v6639, %v6625
    %v6641 = vadd.f32 %v6640, %v6626
    %v6642 = vadd.f32 %v6641, %v6627
    %v6643 = vadd.f32 %v6642, %v6628
    %v6644 = vadd.f32 %v6643, %v6629
    %v6645 = vadd.f32 %v6644, %v6630
    %v6646 = vadd.f32 %v6645, %v6631
    %v6647 = vadd.f32 %v6646, %v6632
    %v6648 = vadd.f32 %v6647, %v6633
    %v6649 = vadd.f32 %v6648, %v6634
    %v6650 = vadd.f32 %v6649, %v6635
    %v6651 = vadd.f32 %v6650, %v6636
    %v6652 = vadd.f32 %v6651, %v6637
    %v6653 = vadd.f32 %v6652, %v6638
    %6654 = vadd.xlane.f32.xlu0 %v6653
    %v6655 = vpop.xlane.xlu0 %6654
    %v6656 = vrot.slane %v6655, 4
    %v6657 = vadd.f32 %v6655, %v6656
    %v6658 = vrot.slane %v6657, 2
    %v6659 = vadd.f32 %v6657, %v6658
    %v6660 = vrot.slane %v6659, 1
    %v6661 = vadd.f32 %v6659, %v6660
    %s6662 = vtos %v6661
    %s6663 = scalar_lea.smem [#allocation5], 1
    %6664 = sst [smem:[%s6663]] %s6662
    // Predicated region
    $region42: #{monosynaptic_pathway_forward.1} parent=1 // pred_check
      _
    $region43: #{monosynaptic_pathway_forward.1} parent=1 // pred_check_branch
      %6666 = sbr.rel (0) target = $region45
    $region44: #{monosynaptic_pathway_forward.1} parent=1 // pred_region
      // Predicated region
      $region46: #{monosynaptic_pathway_forward.1} parent=44 // pred_check
        _
      $region47: #{monosynaptic_pathway_forward.1} parent=44 // pred_check_branch
        %6668 = sbr.rel (0) target = $region49
      $region48: #{monosynaptic_pathway_forward.1} parent=44 // pred_region
        // Predicated region
        $region50: #{monosynaptic_pathway_forward.1} parent=48 // pred_check
          _
        $region51: #{monosynaptic_pathway_forward.1} parent=48 // pred_check_branch
          %6670 = sbr.rel target = $region53
        $region52: #{monosynaptic_pathway_forward.1} parent=48 // pred_region
          // Predicated region
          $region65: #{monosynaptic_pathway_forward.1} parent=52 // pred_check
            _
          $region66: #{monosynaptic_pathway_forward.1} parent=52 // pred_check_branch
            %6686 = sbr.rel (0) target = $region68
          $region67: #{monosynaptic_pathway_forward.1} parent=52 // pred_region
            %s6688 = ssub.s32 4, 1
            loop: start=0, step=1, limit=1
            $region69: #{monosynaptic_pathway_forward.1} parent=67 // loop_pre_header
              _
            $region70: #{monosynaptic_pathway_forward.1} parent=67 // loop_header
              %s6690 = sphi 0, %s6694
              %p6691 = scmp.ge.s32.totalorder %s6690, 1
              %s6695 = sphi [#allocation2], [#allocation2]
              %s6696 = sphi %s10, %s10
            $region71: #{monosynaptic_pathway_forward.1} parent=67 // loop_header_branch
              %6693 = sbr.rel (%p6691) target = $region75
            $region72: #{monosynaptic_pathway_forward.1} parent=67 // loop_body
              %v6697 = vld [vmem:[%s6695] sm:%s6688]
              %6698 = vst [vmem:[%s6696] sm:%s6688] %v6697
            $region73: #{monosynaptic_pathway_forward.1} parent=67 // loop_footer
              %s6694 = sadd.s32 1, %s6690
            $region74: #{monosynaptic_pathway_forward.1} parent=67 // loop_footer_branch
              %6689 = sbr.rel target = $region70
            $region75: #{monosynaptic_pathway_forward.1} parent=67 // loop_exit
              _
          $region68: #{monosynaptic_pathway_forward.1} parent=52 // pred_fallthru
            _
        $region53: #{monosynaptic_pathway_forward.1} parent=48 // pred_fallthru
          _
        // Predicated region
        $region54: #{monosynaptic_pathway_forward.1} parent=48 // pred_check
          _
        $region55: #{monosynaptic_pathway_forward.1} parent=48 // pred_check_branch
          %6672 = sbr.rel (0) target = $region57
        $region56: #{monosynaptic_pathway_forward.1} parent=48 // pred_region
          %s6674 = ssub.s32 4, 1
          loop: start=0, step=1, limit=1
          $region58: #{monosynaptic_pathway_forward.1} parent=56 // loop_pre_header
            _
          $region59: #{monosynaptic_pathway_forward.1} parent=56 // loop_header
            %s6676 = sphi 0, %s6680
            %p6677 = scmp.ge.s32.totalorder %s6676, 1
            %s6681 = sphi [#allocation2], [#allocation2]
            %s6682 = sphi %s10, %s10
          $region60: #{monosynaptic_pathway_forward.1} parent=56 // loop_header_branch
            %6679 = sbr.rel (%p6677) target = $region64
          $region61: #{monosynaptic_pathway_forward.1} parent=56 // loop_body
            %v6683 = vld [vmem:[%s6681] sm:%s6674]
            %6684 = vst [vmem:[%s6682] sm:%s6674] %v6683
          $region62: #{monosynaptic_pathway_forward.1} parent=56 // loop_footer
            %s6680 = sadd.s32 1, %s6676
          $region63: #{monosynaptic_pathway_forward.1} parent=56 // loop_footer_branch
            %6675 = sbr.rel target = $region59
          $region64: #{monosynaptic_pathway_forward.1} parent=56 // loop_exit
            _
        $region57: #{monosynaptic_pathway_forward.1} parent=48 // pred_fallthru
          _
      $region49: #{monosynaptic_pathway_forward.1} parent=44 // pred_fallthru
        _
      %6699 = vnop
    $region45: #{monosynaptic_pathway_forward.1} parent=1 // pred_fallthru
      _
    // Predicated region
    $region76: #{monosynaptic_pathway_forward.1} parent=1 // pred_check
      _
    $region77: #{monosynaptic_pathway_forward.1} parent=1 // pred_check_branch
      %6701 = sbr.rel (0) target = $region79
    $region78: #{monosynaptic_pathway_forward.1} parent=1 // pred_region
      // Predicated region
      $region80: #{monosynaptic_pathway_forward.1} parent=78 // pred_check
        _
      $region81: #{monosynaptic_pathway_forward.1} parent=78 // pred_check_branch
        %6703 = sbr.rel (0) target = $region83
      $region82: #{monosynaptic_pathway_forward.1} parent=78 // pred_region
        // Predicated region
        $region84: #{monosynaptic_pathway_forward.1} parent=82 // pred_check
          _
        $region85: #{monosynaptic_pathway_forward.1} parent=82 // pred_check_branch
          %6705 = sbr.rel (0) target = $region87
        $region86: #{monosynaptic_pathway_forward.1} parent=82 // pred_region
          // Predicated region
          $region99: #{monosynaptic_pathway_forward.1} parent=86 // pred_check
            _
          $region100: #{monosynaptic_pathway_forward.1} parent=86 // pred_check_branch
            %6721 = sbr.rel (0) target = $region102
          $region101: #{monosynaptic_pathway_forward.1} parent=86 // pred_region
            loop: start=0, step=1, limit=1
            $region103: #{monosynaptic_pathway_forward.1} parent=101 // loop_pre_header
              _
            $region104: #{monosynaptic_pathway_forward.1} parent=101 // loop_header
              %s6723 = sphi 0, %s6727
              %p6724 = scmp.ge.s32.totalorder %s6723, 1
              %s6728 = sphi [#allocation3], [#allocation3]
              %s6729 = sphi %s11, %s11
            $region105: #{monosynaptic_pathway_forward.1} parent=101 // loop_header_branch
              %6726 = sbr.rel (%p6724) target = $region109
            $region106: #{monosynaptic_pathway_forward.1} parent=101 // loop_body
              %v6730 = vld [vmem:[%s6728] sm:$0xff]
              %6731 = vst [vmem:[%s6729] sm:$0xff] %v6730
            $region107: #{monosynaptic_pathway_forward.1} parent=101 // loop_footer
              %s6727 = sadd.s32 1, %s6723
            $region108: #{monosynaptic_pathway_forward.1} parent=101 // loop_footer_branch
              %6722 = sbr.rel target = $region104
            $region109: #{monosynaptic_pathway_forward.1} parent=101 // loop_exit
              _
          $region102: #{monosynaptic_pathway_forward.1} parent=86 // pred_fallthru
            _
          // Predicated region
          $region110: #{monosynaptic_pathway_forward.1} parent=86 // pred_check
            _
          $region111: #{monosynaptic_pathway_forward.1} parent=86 // pred_check_branch
            %6733 = sbr.rel target = $region113
          $region112: #{monosynaptic_pathway_forward.1} parent=86 // pred_region
            _
          $region113: #{monosynaptic_pathway_forward.1} parent=86 // pred_fallthru
            _
        $region87: #{monosynaptic_pathway_forward.1} parent=82 // pred_fallthru
          _
        // Predicated region
        $region88: #{monosynaptic_pathway_forward.1} parent=82 // pred_check
          _
        $region89: #{monosynaptic_pathway_forward.1} parent=82 // pred_check_branch
          %6707 = sbr.rel target = $region91
        $region90: #{monosynaptic_pathway_forward.1} parent=82 // pred_region
          %s6709 = ssub.s32 256, 1
          loop: start=0, step=1, limit=1
          $region92: #{monosynaptic_pathway_forward.1} parent=90 // loop_pre_header
            _
          $region93: #{monosynaptic_pathway_forward.1} parent=90 // loop_header
            %s6711 = sphi 0, %s6715
            %p6712 = scmp.ge.s32.totalorder %s6711, 1
            %s6716 = sphi [#allocation3], [#allocation3]
            %s6717 = sphi %s11, %s11
          $region94: #{monosynaptic_pathway_forward.1} parent=90 // loop_header_branch
            %6714 = sbr.rel (%p6712) target = $region98
          $region95: #{monosynaptic_pathway_forward.1} parent=90 // loop_body
            %v6718 = vld [vmem:[%s6716] sm:%s6709]
            %6719 = vst [vmem:[%s6717] sm:%s6709] %v6718
          $region96: #{monosynaptic_pathway_forward.1} parent=90 // loop_footer
            %s6715 = sadd.s32 1, %s6711
          $region97: #{monosynaptic_pathway_forward.1} parent=90 // loop_footer_branch
            %6710 = sbr.rel target = $region93
          $region98: #{monosynaptic_pathway_forward.1} parent=90 // loop_exit
            _
        $region91: #{monosynaptic_pathway_forward.1} parent=82 // pred_fallthru
          _
      $region83: #{monosynaptic_pathway_forward.1} parent=78 // pred_fallthru
        _
      %6734 = vnop
    $region79: #{monosynaptic_pathway_forward.1} parent=1 // pred_fallthru
      _
    // Predicated region
    $region114: #{monosynaptic_pathway_forward.1} parent=1 // pred_check
      _
    $region115: #{monosynaptic_pathway_forward.1} parent=1 // pred_check_branch
      %6736 = sbr.rel (0) target = $region117
    $region116: #{monosynaptic_pathway_forward.1} parent=1 // pred_region
      // Predicated region
      $region118: #{monosynaptic_pathway_forward.1} parent=116 // pred_check
        _
      $region119: #{monosynaptic_pathway_forward.1} parent=116 // pred_check_branch
        %6738 = sbr.rel (0) target = $region121
      $region120: #{monosynaptic_pathway_forward.1} parent=116 // pred_region
        // Predicated region
        $region122: #{monosynaptic_pathway_forward.1} parent=120 // pred_check
          _
        $region123: #{monosynaptic_pathway_forward.1} parent=120 // pred_check_branch
          %6740 = sbr.rel target = $region125
        $region124: #{monosynaptic_pathway_forward.1} parent=120 // pred_region
          // Predicated region
          $region137: #{monosynaptic_pathway_forward.1} parent=124 // pred_check
            _
          $region138: #{monosynaptic_pathway_forward.1} parent=124 // pred_check_branch
            %6756 = sbr.rel (0) target = $region140
          $region139: #{monosynaptic_pathway_forward.1} parent=124 // pred_region
            %s6758 = ssub.s32 4, 1
            loop: start=0, step=1, limit=1
            $region141: #{monosynaptic_pathway_forward.1} parent=139 // loop_pre_header
              _
            $region142: #{monosynaptic_pathway_forward.1} parent=139 // loop_header
              %s6760 = sphi 0, %s6764
              %p6761 = scmp.ge.s32.totalorder %s6760, 1
              %s6765 = sphi [#allocation4], [#allocation4]
              %s6766 = sphi %s12, %s12
            $region143: #{monosynaptic_pathway_forward.1} parent=139 // loop_header_branch
              %6763 = sbr.rel (%p6761) target = $region147
            $region144: #{monosynaptic_pathway_forward.1} parent=139 // loop_body
              %v6767 = vld [vmem:[%s6765] sm:%s6758]
              %6768 = vst [vmem:[%s6766] sm:%s6758] %v6767
            $region145: #{monosynaptic_pathway_forward.1} parent=139 // loop_footer
              %s6764 = sadd.s32 1, %s6760
            $region146: #{monosynaptic_pathway_forward.1} parent=139 // loop_footer_branch
              %6759 = sbr.rel target = $region142
            $region147: #{monosynaptic_pathway_forward.1} parent=139 // loop_exit
              _
          $region140: #{monosynaptic_pathway_forward.1} parent=124 // pred_fallthru
            _
        $region125: #{monosynaptic_pathway_forward.1} parent=120 // pred_fallthru
          _
        // Predicated region
        $region126: #{monosynaptic_pathway_forward.1} parent=120 // pred_check
          _
        $region127: #{monosynaptic_pathway_forward.1} parent=120 // pred_check_branch
          %6742 = sbr.rel (0) target = $region129
        $region128: #{monosynaptic_pathway_forward.1} parent=120 // pred_region
          %s6744 = ssub.s32 4, 1
          loop: start=0, step=1, limit=1
          $region130: #{monosynaptic_pathway_forward.1} parent=128 // loop_pre_header
            _
          $region131: #{monosynaptic_pathway_forward.1} parent=128 // loop_header
            %s6746 = sphi 0, %s6750
            %p6747 = scmp.ge.s32.totalorder %s6746, 1
            %s6751 = sphi [#allocation4], [#allocation4]
            %s6752 = sphi %s12, %s12
          $region132: #{monosynaptic_pathway_forward.1} parent=128 // loop_header_branch
            %6749 = sbr.rel (%p6747) target = $region136
          $region133: #{monosynaptic_pathway_forward.1} parent=128 // loop_body
            %v6753 = vld [vmem:[%s6751] sm:%s6744]
            %6754 = vst [vmem:[%s6752] sm:%s6744] %v6753
          $region134: #{monosynaptic_pathway_forward.1} parent=128 // loop_footer
            %s6750 = sadd.s32 1, %s6746
          $region135: #{monosynaptic_pathway_forward.1} parent=128 // loop_footer_branch
            %6745 = sbr.rel target = $region131
          $region136: #{monosynaptic_pathway_forward.1} parent=128 // loop_exit
            _
        $region129: #{monosynaptic_pathway_forward.1} parent=120 // pred_fallthru
          _
      $region121: #{monosynaptic_pathway_forward.1} parent=116 // pred_fallthru
        _
      %6769 = vnop
    $region117: #{monosynaptic_pathway_forward.1} parent=1 // pred_fallthru
      _
    // Predicated region
    $region148: #{monosynaptic_pathway_forward.1} parent=1 // pred_check
      _
    $region149: #{monosynaptic_pathway_forward.1} parent=1 // pred_check_branch
      %6771 = sbr.rel (0) target = $region151
    $region150: #{monosynaptic_pathway_forward.1} parent=1 // pred_region
      %s6773 = ssub.s32 16, 16
      %6774 = vsyncadd [#allocation6], %s6773
      %s6776 = sshll.u32 %s13, 4
      %s6777 = int_to_ptr.vmem [resolvable:$true] %s6776
      %6779 = dma.smem_to_vmem [#allocation5], 16, %s6777, [#allocation6]
    $region151: #{monosynaptic_pathway_forward.1} parent=1 // pred_fallthru
      _
    // Predicated region
    $region152: #{monosynaptic_pathway_forward.1} parent=1 // pred_check
      _
    $region153: #{monosynaptic_pathway_forward.1} parent=1 // pred_check_branch
      %6781 = sbr.rel (0) target = $region155
    $region154: #{monosynaptic_pathway_forward.1} parent=1 // pred_region
      _
    $region155: #{monosynaptic_pathway_forward.1} parent=1 // pred_fallthru
      _
    // Predicated region
    $region156: #{monosynaptic_pathway_forward.1} parent=1 // pred_check
      _
    $region157: #{monosynaptic_pathway_forward.1} parent=1 // pred_check_branch
      %6783 = sbr.rel (0) target = $region159
    $region158: #{monosynaptic_pathway_forward.1} parent=1 // pred_region
      _
    $region159: #{monosynaptic_pathway_forward.1} parent=1 // pred_fallthru
      _
    // Predicated region
    $region160: #{monosynaptic_pathway_forward.1} parent=1 // pred_check
      _
    $region161: #{monosynaptic_pathway_forward.1} parent=1 // pred_check_branch
      %6785 = sbr.rel (0) target = $region163
    $region162: #{monosynaptic_pathway_forward.1} parent=1 // pred_region
      _
    $region163: #{monosynaptic_pathway_forward.1} parent=1 // pred_fallthru
      _
    // Predicated region
    $region164: #{monosynaptic_pathway_forward.1} parent=1 // pred_check
      _
    $region165: #{monosynaptic_pathway_forward.1} parent=1 // pred_check_branch
      %6787 = sbr.rel (0) target = $region167
    $region166: #{monosynaptic_pathway_forward.1} parent=1 // pred_region
      %6788 = dma.done [#allocation6], 16
    $region167: #{monosynaptic_pathway_forward.1} parent=1 // pred_fallthru
      _
    %6789 = sfence
    %6790 = vsyncpa [#allocation6], 1

</llo_original>
